<compile_context>
chip_gen: v6e
topology: v6e:2x2x1
jax: 0.10.0
libtpu: 0.0.40
codegen_flags: <defaults>
</compile_context>

<pallas_src>
import functools

import jax
import jax.numpy as jnp
import numpy as np
from jax.experimental import pallas as pl
from jax.experimental.pallas import tpu as pltpu

# ----------------------------------------------------------------------------
# Config (small, shape-consistent)
# ----------------------------------------------------------------------------
CFG = dict(
    n_layers=2,
    d_model=32,
    n_heads=4,
    ffn_dim=64,
    vocab_size=128,
    batch=2,
    seq_len=32,  # must equal d_model (see TODO above)
)
assert CFG["seq_len"] == CFG["d_model"]
assert CFG["d_model"] % CFG["n_heads"] == 0
# GroupNorm groups are (L // H) consecutive rows; 8 here, so the in-kernel
# reshape stays sublane-tile aligned.


def _grid_steps_for_batch(batch):
    """grid=(2,) only on 2-TensorCore chips (v7x-like); otherwise grid=(1,)."""
    try:
        kind = jax.devices()[0].device_kind.lower()
    except Exception:  # pragma: no cover - defensive
        kind = ""
    two_tc = ("v7" in kind) or ("7x" in kind)
    if two_tc and batch % 2 == 0:
        return 2
    return 1


# ----------------------------------------------------------------------------
# Fused whole-model Pallas kernel (one grid step == Bb batch elements)
# ----------------------------------------------------------------------------
def _fused_retnet_kernel(n_layers, n_heads, bb, seq_len, *refs):
    """Full RetNet forward for `bb` batch elements (rows stacked as bb*L).

    refs layout:
      refs[0]                      : x       (bb*L, D)  f32
      refs[1]                      : rowmask (H*L, D)   f32  (head block mask)
      refs[2 + 10*l : 12 + 10*l]   : layer l: ln_w (1,D), ln_b (1,D),
                                     wqkv (D,3D) bf16, decay (L,H*L) f32,
                                     gn_w (L,1), gn_b (L,1),
                                     w1 (D,F) bf16, b1 (1,F),
                                     w2 (F,D) bf16, b2 (1,D)
      refs[-3], refs[-2]           : wo (D,V) bf16, bo (1,V)
      refs[-1]                     : out     (bb*L, V)  f32
    """
    x_ref, mask_ref = refs[0], refs[1]
    wo_ref, bo_ref, o_ref = refs[-3], refs[-2], refs[-1]
    layer_refs = refs[2:-3]

    H = n_heads
    L = seq_len
    D = x_ref.shape[-1]
    V = o_ref.shape[-1]

    rowmask = mask_ref[...]            # (H*L, D) f32
    x = x_ref[...]                     # (bb*L, D) f32 (already f32, no astype)

    for li in range(n_layers):
        (ln_w_ref, ln_b_ref, wqkv_ref, decay_ref, gn_w_ref, gn_b_ref,
         w1_ref, b1_ref, w2_ref, b2_ref) = layer_refs[10 * li: 10 * (li + 1)]

        ln_w = ln_w_ref[...]           # (1, D)
        ln_b = ln_b_ref[...]           # (1, D)

        def layer_norm(z):             # shared LN params (used twice, as in spec)
            mu = jnp.mean(z, axis=-1, keepdims=True)
            var = jnp.mean((z - mu) ** 2, axis=-1, keepdims=True)
            return (z - mu) * jax.lax.rsqrt(var + 1e-5) * ln_w + ln_b

        # ---------------- Retention sub-block ----------------
        xn = layer_norm(x)                                     # (bb*L, D) f32
        qkv = jnp.dot(xn.astype(jnp.bfloat16), wqkv_ref[...],
                      preferred_element_type=jnp.float32)      # (bb*L, 3D) f32
        decay = decay_ref[...]                                 # (L, H*L) f32, scale folded

        ret_rows = []
        for b in range(bb):            # static unroll over Bb (1 or 2)
            r0 = b * L
            q = qkv[r0:r0 + L, :D]                             # (L, D)
            k = qkv[r0:r0 + L, D:2 * D]                        # (L, D)
            v = qkv[r0:r0 + L, 2 * D:3 * D]                    # (L, D)

            # Block-diagonal operands: row block h holds only head-h columns.
            kb = (jnp.concatenate([k] * H, axis=0) * rowmask).astype(jnp.bfloat16)
            vb = (jnp.concatenate([v] * H, axis=0) * rowmask).astype(jnp.bfloat16)

            # S[i, h*L + j] = q_h[i] . k_h[j]  -> one lane-dense (L, H*L) matmul
            s = jax.lax.dot_general(
                q.astype(jnp.bfloat16), kb, (((1,), (1,)), ((), ())),
                preferred_element_type=jnp.float32)            # (L, H*L)
            a = (s * decay).astype(jnp.bfloat16)               # causal decay (+ scale)

            # PV: (L, H*L) @ (H*L, D) -> (L, D), already the head concat.
            r = jnp.dot(a, vb, preferred_element_type=jnp.float32)

            # GroupNorm: PyTorch treats dim 1 (== L here) as channels, so each
            # group is L//H consecutive rows normalized over all D columns.
            rg = r.reshape(H, L // H, D)
            mu = jnp.mean(jnp.mean(rg, axis=2, keepdims=True), axis=1, keepdims=True)
            var = jnp.mean(jnp.mean((rg - mu) ** 2, axis=2, keepdims=True),
                           axis=1, keepdims=True)
            rn = ((rg - mu) * jax.lax.rsqrt(var + 1e-5)).reshape(L, D)
            ret_rows.append(rn * gn_w_ref[...] + gn_b_ref[...])

        ret = ret_rows[0] if bb == 1 else jnp.concatenate(ret_rows, axis=0)
        x = x + ret                                            # residual

        # ---------------- FFN sub-block ----------------
        xn2 = layer_norm(x)
        h1 = jnp.dot(xn2.astype(jnp.bfloat16), w1_ref[...],
                     preferred_element_type=jnp.float32) + b1_ref[...]
        h1 = jax.nn.gelu(h1, approximate=True)                 # tanh GELU -> EUP
        x = x + jnp.dot(h1.astype(jnp.bfloat16), w2_ref[...],
                        preferred_element_type=jnp.float32) + b2_ref[...]

    # Final vocab projection -- the only store, fully lane-dense (V=128).
    logits = jnp.dot(x.astype(jnp.bfloat16), wo_ref[...],
                     preferred_element_type=jnp.float32) + bo_ref[...]
    o_ref[...] = logits


# ----------------------------------------------------------------------------
# One-time parameter preprocessing (NOT part of the per-call jitted graph)
# ----------------------------------------------------------------------------
def prepare_params(params):
    D, H, F, V = CFG["d_model"], CFG["n_heads"], CFG["ffn_dim"], CFG["vocab_size"]
    L = CFG["seq_len"]
    hd = D // H
    scale = hd ** -0.5

    idx = jnp.arange(L)
    diff = idx[:, None] - idx[None, :]                    # i - j
    absdiff = jnp.abs(diff).astype(jnp.float32)

    # rowmask[h*L + j, d] = 1 iff column d belongs to head h.
    head_of_row = jnp.repeat(jnp.arange(H), L)            # (H*L,)
    head_of_col = jnp.arange(D) // hd                     # (D,)
    rowmask = (head_of_row[:, None] == head_of_col[None, :]).astype(jnp.float32)

    consts = [rowmask]
    for lp in params["layers"]:
        gamma = jax.nn.sigmoid(lp["gamma_logit"])         # (H,)
        # Masked power-of-|i-j| form (no 0*log0 NaN, no pre-mask overflow),
        # with the 1/sqrt(hd) retention scale folded in.
        decay = jnp.where(diff[None, :, :] >= 0,
                          gamma[:, None, None] ** absdiff[None, :, :],
                          0.0) * scale                    # (H, L, L)
        decay_slab = jnp.transpose(decay, (1, 0, 2)).reshape(L, H * L)
        decay_slab = decay_slab.astype(jnp.float32)       # (L, H*L)
        # TODO(synk): for large L/H, pass |i-j| once and compute
        # gamma^|i-j| = exp(|i-j| * log gamma) in-kernel (EUP) instead of the
        # (H,L,L) tensor; irrelevant at L=32.
        wqkv = jnp.concatenate([lp["wq"], lp["wk"], lp["wv"]], axis=1)
        consts += [
            lp["ln_w"].reshape(1, D).astype(jnp.float32),
            lp["ln_b"].reshape(1, D).astype(jnp.float32),
            wqkv.astype(jnp.bfloat16),
            decay_slab,
            lp["gn_w"].reshape(L, 1).astype(jnp.float32),
            lp["gn_b"].reshape(L, 1).astype(jnp.float32),
            lp["w1"].astype(jnp.bfloat16),
            lp["b1"].reshape(1, F).astype(jnp.float32),
            lp["w2"].astype(jnp.bfloat16),
            lp["b2"].reshape(1, D).astype(jnp.float32),
        ]
    consts += [params["wo"].astype(jnp.bfloat16),
               params["bo"].reshape(1, V).astype(jnp.float32)]
    return {"embedding": params["embedding"], "consts": tuple(consts)}


# ----------------------------------------------------------------------------
# Jitted forward: embedding gather + single pallas_call
# ----------------------------------------------------------------------------
def retnet_forward(tokens, prep):
    D, H, F, V = CFG["d_model"], CFG["n_heads"], CFG["ffn_dim"], CFG["vocab_size"]
    L = CFG["seq_len"]
    nL = CFG["n_layers"]
    B = tokens.shape[0]

    steps = _grid_steps_for_batch(B)
    assert B % steps == 0
    Bb = B // steps
    R = Bb * L

    # Embedding gather stays in plain JAX (tiny; no Pallas win for a gather).
    x = prep["embedding"][tokens.reshape(-1)]              # (B*L, D) f32
    consts = prep["consts"]

    def const_spec(a):
        nd = a.ndim
        return pl.BlockSpec(a.shape, lambda g: (0,) * nd)  # resident in VMEM

    in_specs = [pl.BlockSpec((R, D), lambda g: (g, 0))]
    in_specs += [const_spec(a) for a in consts]

    # Advisory cost estimate so XLA schedules the gather around the call.
    mm_flops = 2 * B * L * (nL * (3 * D * D + 2 * H * L * D + 2 * D * F) + D * V)
    transcendentals = B * L * nL * (F + 8)
    weight_bytes = (nL * (3 * D * D * 2 + D * F * 2 + F * D * 2 + L * H * L * 4
                          + (2 * D + 2 * L + F + D) * 4)
                    + D * V * 2 + V * 4 + H * L * D * 4)
    bytes_accessed = B * L * D * 4 + B * L * V * 4 + weight_bytes

    out = pl.pallas_call(
        functools.partial(_fused_retnet_kernel, nL, H, Bb, L),
        out_shape=jax.ShapeDtypeStruct((B * L, V), jnp.float32),
        grid=(steps,),
        in_specs=in_specs,
        out_specs=pl.BlockSpec((R, V), lambda g: (g, 0)),
        compiler_params=pltpu.CompilerParams(dimension_semantics=("parallel",)),
        cost_estimate=pl.CostEstimate(flops=mm_flops,
                                      transcendentals=transcendentals,
                                      bytes_accessed=bytes_accessed),
    )(x, *consts)
    return out.reshape(B, L, V)


# ----------------------------------------------------------------------------
# Pure-JAX reference (mirrors the PyTorch math, f32) for validation
# ----------------------------------------------------------------------------
def _ln_ref(x, w, b):
    mu = x.mean(-1, keepdims=True)
    var = ((x - mu) ** 2).mean(-1, keepdims=True)
    return (x - mu) * jax.lax.rsqrt(var + 1e-5) * w + b


def _gn_ref(x, w, b, G):
    B, C, W = x.shape
    g = x.reshape(B, G, (C // G) * W)
    mu = g.mean(-1, keepdims=True)
    var = ((g - mu) ** 2).mean(-1, keepdims=True)
    y = ((g - mu) * jax.lax.rsqrt(var + 1e-5)).reshape(B, C, W)
    return y * w[None, :, None] + b[None, :, None]


def reference_forward(tokens, params):
    D, H = CFG["d_model"], CFG["n_heads"]
    hd = D // H
    B, L = tokens.shape
    hi = jax.lax.Precision.HIGHEST

    x = params["embedding"][tokens]
    idx = jnp.arange(L)
    diff = idx[:, None] - idx[None, :]
    absdiff = jnp.abs(diff).astype(jnp.float32)

    for lp in params["layers"]:
        xn = _ln_ref(x, lp["ln_w"], lp["ln_b"])
        q = jnp.einsum("bld,de->ble", xn, lp["wq"], precision=hi)
        k = jnp.einsum("bld,de->ble", xn, lp["wk"], precision=hi)
        v = jnp.einsum("bld,de->ble", xn, lp["wv"], precision=hi)
        q4 = q.reshape(B, L, H, hd).transpose(0, 2, 1, 3)
        k4 = k.reshape(B, L, H, hd).transpose(0, 2, 1, 3)
        v4 = v.reshape(B, L, H, hd).transpose(0, 2, 1, 3)
        gamma = jax.nn.sigmoid(lp["gamma_logit"])
        Dm = jnp.where(diff[None] >= 0,
                       gamma[:, None, None] ** absdiff[None], 0.0)
        attn = jnp.einsum("bhld,bhmd->bhlm", q4, k4, precision=hi) * (hd ** -0.5)
        attn = attn * Dm[None]
        out = jnp.einsum("bhlm,bhmd->bhld", attn, v4, precision=hi)
        out = out.transpose(0, 2, 1, 3).reshape(B, L, D)
        out = _gn_ref(out, lp["gn_w"], lp["gn_b"], H)
        x = x + out

        xn2 = _ln_ref(x, lp["ln_w"], lp["ln_b"])
        h1 = jax.nn.gelu(
            jnp.einsum("bld,df->blf", xn2, lp["w1"], precision=hi) + lp["b1"],
            approximate=False,
        )
        x = x + jnp.einsum("blf,fd->bld", h1, lp["w2"], precision=hi) + lp["b2"]

    return jnp.einsum("bld,dv->blv", x, params["wo"], precision=hi) + params["bo"]


# ----------------------------------------------------------------------------
# Deterministic parameter init
# ----------------------------------------------------------------------------
def init_params(key):
    D, H, F, V = CFG["d_model"], CFG["n_heads"], CFG["ffn_dim"], CFG["vocab_size"]

    def nrm(k, shape, scale):
        return scale * jax.random.normal(k, shape, jnp.float32)

    keys = jax.random.split(key, 2 + 8 * CFG["n_layers"])
    params = {
        "embedding": nrm(keys[0], (V, D), 0.1),
        "wo": nrm(keys[1], (D, V), 0.05),
        "bo": jnp.zeros((V,), jnp.float32),
        "layers": [],
    }
    for i in range(CFG["n_layers"]):
        k = keys[2 + 8 * i: 2 + 8 * (i + 1)]
        params["layers"].append(dict(
            wq=nrm(k[0], (D, D), 0.05),
            wk=nrm(k[1], (D, D), 0.05),
            wv=nrm(k[2], (D, D), 0.05),           # double_v_dim=False (see TODO)
            gamma_logit=nrm(k[3], (H,), 1.0),
            gn_w=jnp.ones((D,), jnp.float32),
            gn_b=jnp.zeros((D,), jnp.float32),
            ln_w=jnp.ones((D,), jnp.float32),
            ln_b=jnp.zeros((D,), jnp.float32),
            w1=nrm(k[4], (D, F), 0.05),
            b1=nrm(k[5], (F,), 0.02),
            w2=nrm(k[6], (F, D), 0.05),
            b2=nrm(k[7], (D,), 0.02),
        ))
    return params


# ----------------------------------------------------------------------------
if __name__ == "__main__":
    key = jax.random.PRNGKey(0)
    pkey, tkey = jax.random.split(key)
    params = init_params(pkey)
    prep = prepare_params(params)          # one-time preprocessing (not per call)
    tokens = jax.random.randint(
        tkey, (CFG["batch"], CFG["seq_len"]), 0, CFG["vocab_size"], dtype=jnp.int32
    )

    fwd = jax.jit(retnet_forward)
    logits = fwd(tokens, prep)
    logits = jax.block_until_ready(logits)

    ref = reference_forward(tokens, params)
    # Slightly looser tolerance: kernel uses bf16 MXU operands + tanh GELU.
    np.testing.assert_allclose(
        np.asarray(logits), np.asarray(ref), rtol=2e-2, atol=2e-2
    )
    assert logits.shape == (CFG["batch"], CFG["seq_len"], CFG["vocab_size"])
    print("KERNEL_OK")
</pallas_src>

<mosaic_0001>
module attributes {stable_mosaic.version = 11 : i64} {
  func.func @_fused_retnet_kernel(%arg0: i32, %arg1: memref<64x32xf32, #tpu.memory_space<vmem>>, %arg2: memref<128x32xf32, #tpu.memory_space<vmem>>, %arg3: memref<1x32xf32, #tpu.memory_space<vmem>>, %arg4: memref<1x32xf32, #tpu.memory_space<vmem>>, %arg5: memref<32x96xbf16, #tpu.memory_space<vmem>>, %arg6: memref<32x128xf32, #tpu.memory_space<vmem>>, %arg7: memref<32x1xf32, #tpu.memory_space<vmem>>, %arg8: memref<32x1xf32, #tpu.memory_space<vmem>>, %arg9: memref<32x64xbf16, #tpu.memory_space<vmem>>, %arg10: memref<1x64xf32, #tpu.memory_space<vmem>>, %arg11: memref<64x32xbf16, #tpu.memory_space<vmem>>, %arg12: memref<1x32xf32, #tpu.memory_space<vmem>>, %arg13: memref<1x32xf32, #tpu.memory_space<vmem>>, %arg14: memref<1x32xf32, #tpu.memory_space<vmem>>, %arg15: memref<32x96xbf16, #tpu.memory_space<vmem>>, %arg16: memref<32x128xf32, #tpu.memory_space<vmem>>, %arg17: memref<32x1xf32, #tpu.memory_space<vmem>>, %arg18: memref<32x1xf32, #tpu.memory_space<vmem>>, %arg19: memref<32x64xbf16, #tpu.memory_space<vmem>>, %arg20: memref<1x64xf32, #tpu.memory_space<vmem>>, %arg21: memref<64x32xbf16, #tpu.memory_space<vmem>>, %arg22: memref<1x32xf32, #tpu.memory_space<vmem>>, %arg23: memref<32x128xbf16, #tpu.memory_space<vmem>>, %arg24: memref<1x128xf32, #tpu.memory_space<vmem>>, %arg25: memref<64x128xf32, #tpu.memory_space<vmem>>) attributes {dimension_semantics = [#tpu.dimension_semantics<parallel>], iteration_bounds = array<i64: 1>, scalar_prefetch = 0 : i64, scratch_operands = 0 : i64, tpu.core_type = #tpu.core_type<tc>, window_params = [{transform_indices = @transform_0, window_bounds = array<i64: 64, 32>}, {pipeline_mode = #tpu.pipeline_mode<synchronous>, transform_indices = @transform_1, window_bounds = array<i64: 128, 32>}, {pipeline_mode = #tpu.pipeline_mode<synchronous>, transform_indices = @transform_2, window_bounds = array<i64: 1, 32>}, {pipeline_mode = #tpu.pipeline_mode<synchronous>, transform_indices = @transform_3, window_bounds = array<i64: 1, 32>}, {pipeline_mode = #tpu.pipeline_mode<synchronous>, transform_indices = @transform_4, window_bounds = array<i64: 32, 96>}, {pipeline_mode = #tpu.pipeline_mode<synchronous>, transform_indices = @transform_5, window_bounds = array<i64: 32, 128>}, {pipeline_mode = #tpu.pipeline_mode<synchronous>, transform_indices = @transform_6, window_bounds = array<i64: 32, 1>}, {pipeline_mode = #tpu.pipeline_mode<synchronous>, transform_indices = @transform_7, window_bounds = array<i64: 32, 1>}, {pipeline_mode = #tpu.pipeline_mode<synchronous>, transform_indices = @transform_8, window_bounds = array<i64: 32, 64>}, {pipeline_mode = #tpu.pipeline_mode<synchronous>, transform_indices = @transform_9, window_bounds = array<i64: 1, 64>}, {pipeline_mode = #tpu.pipeline_mode<synchronous>, transform_indices = @transform_10, window_bounds = array<i64: 64, 32>}, {pipeline_mode = #tpu.pipeline_mode<synchronous>, transform_indices = @transform_11, window_bounds = array<i64: 1, 32>}, {pipeline_mode = #tpu.pipeline_mode<synchronous>, transform_indices = @transform_12, window_bounds = array<i64: 1, 32>}, {pipeline_mode = #tpu.pipeline_mode<synchronous>, transform_indices = @transform_13, window_bounds = array<i64: 1, 32>}, {pipeline_mode = #tpu.pipeline_mode<synchronous>, transform_indices = @transform_14, window_bounds = array<i64: 32, 96>}, {pipeline_mode = #tpu.pipeline_mode<synchronous>, transform_indices = @transform_15, window_bounds = array<i64: 32, 128>}, {pipeline_mode = #tpu.pipeline_mode<synchronous>, transform_indices = @transform_16, window_bounds = array<i64: 32, 1>}, {pipeline_mode = #tpu.pipeline_mode<synchronous>, transform_indices = @transform_17, window_bounds = array<i64: 32, 1>}, {pipeline_mode = #tpu.pipeline_mode<synchronous>, transform_indices = @transform_18, window_bounds = array<i64: 32, 64>}, {pipeline_mode = #tpu.pipeline_mode<synchronous>, transform_indices = @transform_19, window_bounds = array<i64: 1, 64>}, {pipeline_mode = #tpu.pipeline_mode<synchronous>, transform_indices = @transform_20, window_bounds = array<i64: 64, 32>}, {pipeline_mode = #tpu.pipeline_mode<synchronous>, transform_indices = @transform_21, window_bounds = array<i64: 1, 32>}, {pipeline_mode = #tpu.pipeline_mode<synchronous>, transform_indices = @transform_22, window_bounds = array<i64: 32, 128>}, {pipeline_mode = #tpu.pipeline_mode<synchronous>, transform_indices = @transform_23, window_bounds = array<i64: 1, 128>}, {transform_indices = @transform_24, window_bounds = array<i64: 64, 128>}]} {
    %c0 = arith.constant 0 : index
    %c0_0 = arith.constant 0 : index
    %0 = vector.load %arg2[%c0, %c0_0] : memref<128x32xf32, #tpu.memory_space<vmem>>, vector<128x32xf32>
    %c0_1 = arith.constant 0 : index
    %c0_2 = arith.constant 0 : index
    %1 = vector.load %arg1[%c0_1, %c0_2] : memref<64x32xf32, #tpu.memory_space<vmem>>, vector<64x32xf32>
    %c0_3 = arith.constant 0 : index
    %c0_4 = arith.constant 0 : index
    %2 = vector.load %arg3[%c0_3, %c0_4] : memref<1x32xf32, #tpu.memory_space<vmem>>, vector<1x32xf32>
    %c0_5 = arith.constant 0 : index
    %c0_6 = arith.constant 0 : index
    %3 = vector.load %arg4[%c0_5, %c0_6] : memref<1x32xf32, #tpu.memory_space<vmem>>, vector<1x32xf32>
    %cst = arith.constant dense<0.000000e+00> : vector<64xf32>
    %4 = vector.multi_reduction <add>, %1, %cst [1] : vector<64x32xf32> to vector<64xf32>
    %5 = vector.shape_cast %4 : vector<64xf32> to vector<64x1xf32>
    %cst_7 = arith.constant 3.200000e+01 : f32
    %6 = vector.broadcast %cst_7 : f32 to vector<64x1xf32>
    %7 = arith.divf %5, %6 : vector<64x1xf32>
    %8 = vector.broadcast %7 : vector<64x1xf32> to vector<64x32xf32>
    %9 = arith.subf %1, %8 : vector<64x32xf32>
    %10 = arith.mulf %9, %9 : vector<64x32xf32>
    %cst_8 = arith.constant dense<0.000000e+00> : vector<64xf32>
    %11 = vector.multi_reduction <add>, %10, %cst_8 [1] : vector<64x32xf32> to vector<64xf32>
    %12 = vector.shape_cast %11 : vector<64xf32> to vector<64x1xf32>
    %cst_9 = arith.constant 3.200000e+01 : f32
    %13 = vector.broadcast %cst_9 : f32 to vector<64x1xf32>
    %14 = arith.divf %12, %13 : vector<64x1xf32>
    %15 = vector.broadcast %7 : vector<64x1xf32> to vector<64x32xf32>
    %16 = arith.subf %1, %15 : vector<64x32xf32>
    %cst_10 = arith.constant 9.99999974E-6 : f32
    %17 = vector.broadcast %cst_10 : f32 to vector<64x1xf32>
    %18 = arith.addf %14, %17 : vector<64x1xf32>
    %19 = math.rsqrt %18 : vector<64x1xf32>
    %20 = vector.broadcast %19 : vector<64x1xf32> to vector<64x32xf32>
    %21 = arith.mulf %16, %20 : vector<64x32xf32>
    %22 = vector.broadcast %2 : vector<1x32xf32> to vector<64x32xf32>
    %23 = arith.mulf %21, %22 : vector<64x32xf32>
    %24 = vector.broadcast %3 : vector<1x32xf32> to vector<64x32xf32>
    %25 = arith.addf %23, %24 : vector<64x32xf32>
    %26 = arith.truncf %25 : vector<64x32xf32> to vector<64x32xbf16>
    %c0_11 = arith.constant 0 : index
    %c0_12 = arith.constant 0 : index
    %27 = vector.load %arg5[%c0_11, %c0_12] : memref<32x96xbf16, #tpu.memory_space<vmem>>, vector<32x96xbf16>
    %cst_13 = arith.constant dense<0.000000e+00> : vector<64x96xf32>
    %28 = tpu.matmul %26, %27, %cst_13 {dimension_numbers = #tpu.dot_dimension_numbers<[1], [0], [0], [1], [0, 0, 1, 1], [], []>} : vector<64x32xbf16>, vector<32x96xbf16>, vector<64x96xf32> -> vector<64x96xf32>
    %c0_14 = arith.constant 0 : index
    %c0_15 = arith.constant 0 : index
    %29 = vector.load %arg6[%c0_14, %c0_15] : memref<32x128xf32, #tpu.memory_space<vmem>>, vector<32x128xf32>
    %30 = vector.extract_strided_slice %28 {offsets = [0, 0], sizes = [32, 32], strides = [1, 1]} : vector<64x96xf32> to vector<32x32xf32>
    %31 = vector.extract_strided_slice %28 {offsets = [0, 32], sizes = [32, 32], strides = [1, 1]} : vector<64x96xf32> to vector<32x32xf32>
    %32 = vector.extract_strided_slice %28 {offsets = [0, 64], sizes = [32, 32], strides = [1, 1]} : vector<64x96xf32> to vector<32x32xf32>
    %33 = tpu.concatenate %31, %31, %31, %31 in 0 : vector<32x32xf32>, vector<32x32xf32>, vector<32x32xf32>, vector<32x32xf32> -> vector<128x32xf32>
    %34 = arith.mulf %33, %0 : vector<128x32xf32>
    %35 = arith.truncf %34 : vector<128x32xf32> to vector<128x32xbf16>
    %36 = tpu.concatenate %32, %32, %32, %32 in 0 : vector<32x32xf32>, vector<32x32xf32>, vector<32x32xf32>, vector<32x32xf32> -> vector<128x32xf32>
    %37 = arith.mulf %36, %0 : vector<128x32xf32>
    %38 = arith.truncf %37 : vector<128x32xf32> to vector<128x32xbf16>
    %39 = arith.truncf %30 : vector<32x32xf32> to vector<32x32xbf16>
    %cst_16 = arith.constant dense<0.000000e+00> : vector<32x128xf32>
    %40 = tpu.matmul %39, %35, %cst_16 {dimension_numbers = #tpu.dot_dimension_numbers<[1], [1], [0], [0], [0, 0, 1, 0], [], []>} : vector<32x32xbf16>, vector<128x32xbf16>, vector<32x128xf32> -> vector<32x128xf32>
    %41 = arith.mulf %40, %29 : vector<32x128xf32>
    %42 = arith.truncf %41 : vector<32x128xf32> to vector<32x128xbf16>
    %cst_17 = arith.constant dense<0.000000e+00> : vector<32x32xf32>
    %43 = tpu.matmul %42, %38, %cst_17 {dimension_numbers = #tpu.dot_dimension_numbers<[1], [0], [0], [1], [0, 0, 1, 1], [], []>} : vector<32x128xbf16>, vector<128x32xbf16>, vector<32x32xf32> -> vector<32x32xf32>
    %44 = vector.shape_cast %43 : vector<32x32xf32> to vector<4x8x32xf32>
    %cst_18 = arith.constant dense<0.000000e+00> : vector<4x8xf32>
    %45 = vector.multi_reduction <add>, %44, %cst_18 [2] : vector<4x8x32xf32> to vector<4x8xf32>
    %46 = vector.shape_cast %45 : vector<4x8xf32> to vector<4x8x1xf32>
    %cst_19 = arith.constant 3.200000e+01 : f32
    %47 = vector.broadcast %cst_19 : f32 to vector<4x8x1xf32>
    %48 = arith.divf %46, %47 : vector<4x8x1xf32>
    %cst_20 = arith.constant dense<0.000000e+00> : vector<4x1xf32>
    %49 = vector.multi_reduction <add>, %48, %cst_20 [1] : vector<4x8x1xf32> to vector<4x1xf32>
    %50 = vector.shape_cast %49 : vector<4x1xf32> to vector<4x1x1xf32>
    %cst_21 = arith.constant 8.000000e+00 : f32
    %51 = vector.broadcast %cst_21 : f32 to vector<4x1x1xf32>
    %52 = arith.divf %50, %51 : vector<4x1x1xf32>
    %53 = vector.broadcast %52 : vector<4x1x1xf32> to vector<4x8x32xf32>
    %54 = arith.subf %44, %53 : vector<4x8x32xf32>
    %55 = arith.mulf %54, %54 : vector<4x8x32xf32>
    %cst_22 = arith.constant dense<0.000000e+00> : vector<4x8xf32>
    %56 = vector.multi_reduction <add>, %55, %cst_22 [2] : vector<4x8x32xf32> to vector<4x8xf32>
    %57 = vector.shape_cast %56 : vector<4x8xf32> to vector<4x8x1xf32>
    %cst_23 = arith.constant 3.200000e+01 : f32
    %58 = vector.broadcast %cst_23 : f32 to vector<4x8x1xf32>
    %59 = arith.divf %57, %58 : vector<4x8x1xf32>
    %cst_24 = arith.constant dense<0.000000e+00> : vector<4x1xf32>
    %60 = vector.multi_reduction <add>, %59, %cst_24 [1] : vector<4x8x1xf32> to vector<4x1xf32>
    %61 = vector.shape_cast %60 : vector<4x1xf32> to vector<4x1x1xf32>
    %cst_25 = arith.constant 8.000000e+00 : f32
    %62 = vector.broadcast %cst_25 : f32 to vector<4x1x1xf32>
    %63 = arith.divf %61, %62 : vector<4x1x1xf32>
    %64 = vector.broadcast %52 : vector<4x1x1xf32> to vector<4x8x32xf32>
    %65 = arith.subf %44, %64 : vector<4x8x32xf32>
    %cst_26 = arith.constant 9.99999974E-6 : f32
    %66 = vector.broadcast %cst_26 : f32 to vector<4x1x1xf32>
    %67 = arith.addf %63, %66 : vector<4x1x1xf32>
    %68 = math.rsqrt %67 : vector<4x1x1xf32>
    %69 = vector.broadcast %68 : vector<4x1x1xf32> to vector<4x8x32xf32>
    %70 = arith.mulf %65, %69 : vector<4x8x32xf32>
    %71 = vector.shape_cast %70 : vector<4x8x32xf32> to vector<32x32xf32>
    %c0_27 = arith.constant 0 : index
    %c0_28 = arith.constant 0 : index
    %72 = vector.load %arg7[%c0_27, %c0_28] : memref<32x1xf32, #tpu.memory_space<vmem>>, vector<32x1xf32>
    %73 = vector.broadcast %72 : vector<32x1xf32> to vector<32x32xf32>
    %74 = arith.mulf %71, %73 : vector<32x32xf32>
    %c0_29 = arith.constant 0 : index
    %c0_30 = arith.constant 0 : index
    %75 = vector.load %arg8[%c0_29, %c0_30] : memref<32x1xf32, #tpu.memory_space<vmem>>, vector<32x1xf32>
    %76 = vector.broadcast %75 : vector<32x1xf32> to vector<32x32xf32>
    %77 = arith.addf %74, %76 : vector<32x32xf32>
    %78 = vector.extract_strided_slice %28 {offsets = [32, 0], sizes = [32, 32], strides = [1, 1]} : vector<64x96xf32> to vector<32x32xf32>
    %79 = vector.extract_strided_slice %28 {offsets = [32, 32], sizes = [32, 32], strides = [1, 1]} : vector<64x96xf32> to vector<32x32xf32>
    %80 = vector.extract_strided_slice %28 {offsets = [32, 64], sizes = [32, 32], strides = [1, 1]} : vector<64x96xf32> to vector<32x32xf32>
    %81 = tpu.concatenate %79, %79, %79, %79 in 0 : vector<32x32xf32>, vector<32x32xf32>, vector<32x32xf32>, vector<32x32xf32> -> vector<128x32xf32>
    %82 = arith.mulf %81, %0 : vector<128x32xf32>
    %83 = arith.truncf %82 : vector<128x32xf32> to vector<128x32xbf16>
    %84 = tpu.concatenate %80, %80, %80, %80 in 0 : vector<32x32xf32>, vector<32x32xf32>, vector<32x32xf32>, vector<32x32xf32> -> vector<128x32xf32>
    %85 = arith.mulf %84, %0 : vector<128x32xf32>
    %86 = arith.truncf %85 : vector<128x32xf32> to vector<128x32xbf16>
    %87 = arith.truncf %78 : vector<32x32xf32> to vector<32x32xbf16>
    %cst_31 = arith.constant dense<0.000000e+00> : vector<32x128xf32>
    %88 = tpu.matmul %87, %83, %cst_31 {dimension_numbers = #tpu.dot_dimension_numbers<[1], [1], [0], [0], [0, 0, 1, 0], [], []>} : vector<32x32xbf16>, vector<128x32xbf16>, vector<32x128xf32> -> vector<32x128xf32>
    %89 = arith.mulf %88, %29 : vector<32x128xf32>
    %90 = arith.truncf %89 : vector<32x128xf32> to vector<32x128xbf16>
    %cst_32 = arith.constant dense<0.000000e+00> : vector<32x32xf32>
    %91 = tpu.matmul %90, %86, %cst_32 {dimension_numbers = #tpu.dot_dimension_numbers<[1], [0], [0], [1], [0, 0, 1, 1], [], []>} : vector<32x128xbf16>, vector<128x32xbf16>, vector<32x32xf32> -> vector<32x32xf32>
    %92 = vector.shape_cast %91 : vector<32x32xf32> to vector<4x8x32xf32>
    %cst_33 = arith.constant dense<0.000000e+00> : vector<4x8xf32>
    %93 = vector.multi_reduction <add>, %92, %cst_33 [2] : vector<4x8x32xf32> to vector<4x8xf32>
    %94 = vector.shape_cast %93 : vector<4x8xf32> to vector<4x8x1xf32>
    %cst_34 = arith.constant 3.200000e+01 : f32
    %95 = vector.broadcast %cst_34 : f32 to vector<4x8x1xf32>
    %96 = arith.divf %94, %95 : vector<4x8x1xf32>
    %cst_35 = arith.constant dense<0.000000e+00> : vector<4x1xf32>
    %97 = vector.multi_reduction <add>, %96, %cst_35 [1] : vector<4x8x1xf32> to vector<4x1xf32>
    %98 = vector.shape_cast %97 : vector<4x1xf32> to vector<4x1x1xf32>
    %cst_36 = arith.constant 8.000000e+00 : f32
    %99 = vector.broadcast %cst_36 : f32 to vector<4x1x1xf32>
    %100 = arith.divf %98, %99 : vector<4x1x1xf32>
    %101 = vector.broadcast %100 : vector<4x1x1xf32> to vector<4x8x32xf32>
    %102 = arith.subf %92, %101 : vector<4x8x32xf32>
    %103 = arith.mulf %102, %102 : vector<4x8x32xf32>
    %cst_37 = arith.constant dense<0.000000e+00> : vector<4x8xf32>
    %104 = vector.multi_reduction <add>, %103, %cst_37 [2] : vector<4x8x32xf32> to vector<4x8xf32>
    %105 = vector.shape_cast %104 : vector<4x8xf32> to vector<4x8x1xf32>
    %cst_38 = arith.constant 3.200000e+01 : f32
    %106 = vector.broadcast %cst_38 : f32 to vector<4x8x1xf32>
    %107 = arith.divf %105, %106 : vector<4x8x1xf32>
    %cst_39 = arith.constant dense<0.000000e+00> : vector<4x1xf32>
    %108 = vector.multi_reduction <add>, %107, %cst_39 [1] : vector<4x8x1xf32> to vector<4x1xf32>
    %109 = vector.shape_cast %108 : vector<4x1xf32> to vector<4x1x1xf32>
    %cst_40 = arith.constant 8.000000e+00 : f32
    %110 = vector.broadcast %cst_40 : f32 to vector<4x1x1xf32>
    %111 = arith.divf %109, %110 : vector<4x1x1xf32>
    %112 = vector.broadcast %100 : vector<4x1x1xf32> to vector<4x8x32xf32>
    %113 = arith.subf %92, %112 : vector<4x8x32xf32>
    %cst_41 = arith.constant 9.99999974E-6 : f32
    %114 = vector.broadcast %cst_41 : f32 to vector<4x1x1xf32>
    %115 = arith.addf %111, %114 : vector<4x1x1xf32>
    %116 = math.rsqrt %115 : vector<4x1x1xf32>
    %117 = vector.broadcast %116 : vector<4x1x1xf32> to vector<4x8x32xf32>
    %118 = arith.mulf %113, %117 : vector<4x8x32xf32>
    %119 = vector.shape_cast %118 : vector<4x8x32xf32> to vector<32x32xf32>
    %c0_42 = arith.constant 0 : index
    %c0_43 = arith.constant 0 : index
    %120 = vector.load %arg7[%c0_42, %c0_43] : memref<32x1xf32, #tpu.memory_space<vmem>>, vector<32x1xf32>
    %121 = vector.broadcast %120 : vector<32x1xf32> to vector<32x32xf32>
    %122 = arith.mulf %119, %121 : vector<32x32xf32>
    %c0_44 = arith.constant 0 : index
    %c0_45 = arith.constant 0 : index
    %123 = vector.load %arg8[%c0_44, %c0_45] : memref<32x1xf32, #tpu.memory_space<vmem>>, vector<32x1xf32>
    %124 = vector.broadcast %123 : vector<32x1xf32> to vector<32x32xf32>
    %125 = arith.addf %122, %124 : vector<32x32xf32>
    %126 = tpu.concatenate %77, %125 in 0 : vector<32x32xf32>, vector<32x32xf32> -> vector<64x32xf32>
    %127 = arith.addf %1, %126 : vector<64x32xf32>
    %cst_46 = arith.constant dense<0.000000e+00> : vector<64xf32>
    %128 = vector.multi_reduction <add>, %127, %cst_46 [1] : vector<64x32xf32> to vector<64xf32>
    %129 = vector.shape_cast %128 : vector<64xf32> to vector<64x1xf32>
    %cst_47 = arith.constant 3.200000e+01 : f32
    %130 = vector.broadcast %cst_47 : f32 to vector<64x1xf32>
    %131 = arith.divf %129, %130 : vector<64x1xf32>
    %132 = vector.broadcast %131 : vector<64x1xf32> to vector<64x32xf32>
    %133 = arith.subf %127, %132 : vector<64x32xf32>
    %134 = arith.mulf %133, %133 : vector<64x32xf32>
    %cst_48 = arith.constant dense<0.000000e+00> : vector<64xf32>
    %135 = vector.multi_reduction <add>, %134, %cst_48 [1] : vector<64x32xf32> to vector<64xf32>
    %136 = vector.shape_cast %135 : vector<64xf32> to vector<64x1xf32>
    %cst_49 = arith.constant 3.200000e+01 : f32
    %137 = vector.broadcast %cst_49 : f32 to vector<64x1xf32>
    %138 = arith.divf %136, %137 : vector<64x1xf32>
    %139 = vector.broadcast %131 : vector<64x1xf32> to vector<64x32xf32>
    %140 = arith.subf %127, %139 : vector<64x32xf32>
    %cst_50 = arith.constant 9.99999974E-6 : f32
    %141 = vector.broadcast %cst_50 : f32 to vector<64x1xf32>
    %142 = arith.addf %138, %141 : vector<64x1xf32>
    %143 = math.rsqrt %142 : vector<64x1xf32>
    %144 = vector.broadcast %143 : vector<64x1xf32> to vector<64x32xf32>
    %145 = arith.mulf %140, %144 : vector<64x32xf32>
    %146 = vector.broadcast %2 : vector<1x32xf32> to vector<64x32xf32>
    %147 = arith.mulf %145, %146 : vector<64x32xf32>
    %148 = vector.broadcast %3 : vector<1x32xf32> to vector<64x32xf32>
    %149 = arith.addf %147, %148 : vector<64x32xf32>
    %150 = arith.truncf %149 : vector<64x32xf32> to vector<64x32xbf16>
    %c0_51 = arith.constant 0 : index
    %c0_52 = arith.constant 0 : index
    %151 = vector.load %arg9[%c0_51, %c0_52] : memref<32x64xbf16, #tpu.memory_space<vmem>>, vector<32x64xbf16>
    %cst_53 = arith.constant dense<0.000000e+00> : vector<64x64xf32>
    %152 = tpu.matmul %150, %151, %cst_53 {dimension_numbers = #tpu.dot_dimension_numbers<[1], [0], [0], [1], [0, 0, 1, 1], [], []>} : vector<64x32xbf16>, vector<32x64xbf16>, vector<64x64xf32> -> vector<64x64xf32>
    %c0_54 = arith.constant 0 : index
    %c0_55 = arith.constant 0 : index
    %153 = vector.load %arg10[%c0_54, %c0_55] : memref<1x64xf32, #tpu.memory_space<vmem>>, vector<1x64xf32>
    %154 = vector.broadcast %153 : vector<1x64xf32> to vector<64x64xf32>
    %155 = arith.addf %152, %154 : vector<64x64xf32>
    %156 = arith.mulf %155, %155 : vector<64x64xf32>
    %157 = arith.mulf %155, %156 : vector<64x64xf32>
    %cst_56 = arith.constant 4.471500e-02 : f32
    %158 = vector.broadcast %cst_56 : f32 to vector<64x64xf32>
    %159 = arith.mulf %158, %157 : vector<64x64xf32>
    %160 = arith.addf %155, %159 : vector<64x64xf32>
    %cst_57 = arith.constant 0.797884583 : f32
    %161 = vector.broadcast %cst_57 : f32 to vector<64x64xf32>
    %162 = arith.mulf %161, %160 : vector<64x64xf32>
    %163 = math.tanh %162 : vector<64x64xf32>
    %cst_58 = arith.constant 1.000000e+00 : f32
    %164 = vector.broadcast %cst_58 : f32 to vector<64x64xf32>
    %165 = arith.addf %164, %163 : vector<64x64xf32>
    %cst_59 = arith.constant 5.000000e-01 : f32
    %166 = vector.broadcast %cst_59 : f32 to vector<64x64xf32>
    %167 = arith.mulf %166, %165 : vector<64x64xf32>
    %168 = arith.mulf %155, %167 : vector<64x64xf32>
    %169 = arith.truncf %168 : vector<64x64xf32> to vector<64x64xbf16>
    %c0_60 = arith.constant 0 : index
    %c0_61 = arith.constant 0 : index
    %170 = vector.load %arg11[%c0_60, %c0_61] : memref<64x32xbf16, #tpu.memory_space<vmem>>, vector<64x32xbf16>
    %cst_62 = arith.constant dense<0.000000e+00> : vector<64x32xf32>
    %171 = tpu.matmul %169, %170, %cst_62 {dimension_numbers = #tpu.dot_dimension_numbers<[1], [0], [0], [1], [0, 0, 1, 1], [], []>} : vector<64x64xbf16>, vector<64x32xbf16>, vector<64x32xf32> -> vector<64x32xf32>
    %172 = arith.addf %127, %171 : vector<64x32xf32>
    %c0_63 = arith.constant 0 : index
    %c0_64 = arith.constant 0 : index
    %173 = vector.load %arg12[%c0_63, %c0_64] : memref<1x32xf32, #tpu.memory_space<vmem>>, vector<1x32xf32>
    %174 = vector.broadcast %173 : vector<1x32xf32> to vector<64x32xf32>
    %175 = arith.addf %172, %174 : vector<64x32xf32>
    %c0_65 = arith.constant 0 : index
    %c0_66 = arith.constant 0 : index
    %176 = vector.load %arg13[%c0_65, %c0_66] : memref<1x32xf32, #tpu.memory_space<vmem>>, vector<1x32xf32>
    %c0_67 = arith.constant 0 : index
    %c0_68 = arith.constant 0 : index
    %177 = vector.load %arg14[%c0_67, %c0_68] : memref<1x32xf32, #tpu.memory_space<vmem>>, vector<1x32xf32>
    %cst_69 = arith.constant dense<0.000000e+00> : vector<64xf32>
    %178 = vector.multi_reduction <add>, %175, %cst_69 [1] : vector<64x32xf32> to vector<64xf32>
    %179 = vector.shape_cast %178 : vector<64xf32> to vector<64x1xf32>
    %cst_70 = arith.constant 3.200000e+01 : f32
    %180 = vector.broadcast %cst_70 : f32 to vector<64x1xf32>
    %181 = arith.divf %179, %180 : vector<64x1xf32>
    %182 = vector.broadcast %181 : vector<64x1xf32> to vector<64x32xf32>
    %183 = arith.subf %175, %182 : vector<64x32xf32>
    %184 = arith.mulf %183, %183 : vector<64x32xf32>
    %cst_71 = arith.constant dense<0.000000e+00> : vector<64xf32>
    %185 = vector.multi_reduction <add>, %184, %cst_71 [1] : vector<64x32xf32> to vector<64xf32>
    %186 = vector.shape_cast %185 : vector<64xf32> to vector<64x1xf32>
    %cst_72 = arith.constant 3.200000e+01 : f32
    %187 = vector.broadcast %cst_72 : f32 to vector<64x1xf32>
    %188 = arith.divf %186, %187 : vector<64x1xf32>
    %189 = vector.broadcast %181 : vector<64x1xf32> to vector<64x32xf32>
    %190 = arith.subf %175, %189 : vector<64x32xf32>
    %cst_73 = arith.constant 9.99999974E-6 : f32
    %191 = vector.broadcast %cst_73 : f32 to vector<64x1xf32>
    %192 = arith.addf %188, %191 : vector<64x1xf32>
    %193 = math.rsqrt %192 : vector<64x1xf32>
    %194 = vector.broadcast %193 : vector<64x1xf32> to vector<64x32xf32>
    %195 = arith.mulf %190, %194 : vector<64x32xf32>
    %196 = vector.broadcast %176 : vector<1x32xf32> to vector<64x32xf32>
    %197 = arith.mulf %195, %196 : vector<64x32xf32>
    %198 = vector.broadcast %177 : vector<1x32xf32> to vector<64x32xf32>
    %199 = arith.addf %197, %198 : vector<64x32xf32>
    %200 = arith.truncf %199 : vector<64x32xf32> to vector<64x32xbf16>
    %c0_74 = arith.constant 0 : index
    %c0_75 = arith.constant 0 : index
    %201 = vector.load %arg15[%c0_74, %c0_75] : memref<32x96xbf16, #tpu.memory_space<vmem>>, vector<32x96xbf16>
    %cst_76 = arith.constant dense<0.000000e+00> : vector<64x96xf32>
    %202 = tpu.matmul %200, %201, %cst_76 {dimension_numbers = #tpu.dot_dimension_numbers<[1], [0], [0], [1], [0, 0, 1, 1], [], []>} : vector<64x32xbf16>, vector<32x96xbf16>, vector<64x96xf32> -> vector<64x96xf32>
    %c0_77 = arith.constant 0 : index
    %c0_78 = arith.constant 0 : index
    %203 = vector.load %arg16[%c0_77, %c0_78] : memref<32x128xf32, #tpu.memory_space<vmem>>, vector<32x128xf32>
    %204 = vector.extract_strided_slice %202 {offsets = [0, 0], sizes = [32, 32], strides = [1, 1]} : vector<64x96xf32> to vector<32x32xf32>
    %205 = vector.extract_strided_slice %202 {offsets = [0, 32], sizes = [32, 32], strides = [1, 1]} : vector<64x96xf32> to vector<32x32xf32>
    %206 = vector.extract_strided_slice %202 {offsets = [0, 64], sizes = [32, 32], strides = [1, 1]} : vector<64x96xf32> to vector<32x32xf32>
    %207 = tpu.concatenate %205, %205, %205, %205 in 0 : vector<32x32xf32>, vector<32x32xf32>, vector<32x32xf32>, vector<32x32xf32> -> vector<128x32xf32>
    %208 = arith.mulf %207, %0 : vector<128x32xf32>
    %209 = arith.truncf %208 : vector<128x32xf32> to vector<128x32xbf16>
    %210 = tpu.concatenate %206, %206, %206, %206 in 0 : vector<32x32xf32>, vector<32x32xf32>, vector<32x32xf32>, vector<32x32xf32> -> vector<128x32xf32>
    %211 = arith.mulf %210, %0 : vector<128x32xf32>
    %212 = arith.truncf %211 : vector<128x32xf32> to vector<128x32xbf16>
    %213 = arith.truncf %204 : vector<32x32xf32> to vector<32x32xbf16>
    %cst_79 = arith.constant dense<0.000000e+00> : vector<32x128xf32>
    %214 = tpu.matmul %213, %209, %cst_79 {dimension_numbers = #tpu.dot_dimension_numbers<[1], [1], [0], [0], [0, 0, 1, 0], [], []>} : vector<32x32xbf16>, vector<128x32xbf16>, vector<32x128xf32> -> vector<32x128xf32>
    %215 = arith.mulf %214, %203 : vector<32x128xf32>
    %216 = arith.truncf %215 : vector<32x128xf32> to vector<32x128xbf16>
    %cst_80 = arith.constant dense<0.000000e+00> : vector<32x32xf32>
    %217 = tpu.matmul %216, %212, %cst_80 {dimension_numbers = #tpu.dot_dimension_numbers<[1], [0], [0], [1], [0, 0, 1, 1], [], []>} : vector<32x128xbf16>, vector<128x32xbf16>, vector<32x32xf32> -> vector<32x32xf32>
    %218 = vector.shape_cast %217 : vector<32x32xf32> to vector<4x8x32xf32>
    %cst_81 = arith.constant dense<0.000000e+00> : vector<4x8xf32>
    %219 = vector.multi_reduction <add>, %218, %cst_81 [2] : vector<4x8x32xf32> to vector<4x8xf32>
    %220 = vector.shape_cast %219 : vector<4x8xf32> to vector<4x8x1xf32>
    %cst_82 = arith.constant 3.200000e+01 : f32
    %221 = vector.broadcast %cst_82 : f32 to vector<4x8x1xf32>
    %222 = arith.divf %220, %221 : vector<4x8x1xf32>
    %cst_83 = arith.constant dense<0.000000e+00> : vector<4x1xf32>
    %223 = vector.multi_reduction <add>, %222, %cst_83 [1] : vector<4x8x1xf32> to vector<4x1xf32>
    %224 = vector.shape_cast %223 : vector<4x1xf32> to vector<4x1x1xf32>
    %cst_84 = arith.constant 8.000000e+00 : f32
    %225 = vector.broadcast %cst_84 : f32 to vector<4x1x1xf32>
    %226 = arith.divf %224, %225 : vector<4x1x1xf32>
    %227 = vector.broadcast %226 : vector<4x1x1xf32> to vector<4x8x32xf32>
    %228 = arith.subf %218, %227 : vector<4x8x32xf32>
    %229 = arith.mulf %228, %228 : vector<4x8x32xf32>
    %cst_85 = arith.constant dense<0.000000e+00> : vector<4x8xf32>
    %230 = vector.multi_reduction <add>, %229, %cst_85 [2] : vector<4x8x32xf32> to vector<4x8xf32>
    %231 = vector.shape_cast %230 : vector<4x8xf32> to vector<4x8x1xf32>
    %cst_86 = arith.constant 3.200000e+01 : f32
    %232 = vector.broadcast %cst_86 : f32 to vector<4x8x1xf32>
    %233 = arith.divf %231, %232 : vector<4x8x1xf32>
    %cst_87 = arith.constant dense<0.000000e+00> : vector<4x1xf32>
    %234 = vector.multi_reduction <add>, %233, %cst_87 [1] : vector<4x8x1xf32> to vector<4x1xf32>
    %235 = vector.shape_cast %234 : vector<4x1xf32> to vector<4x1x1xf32>
    %cst_88 = arith.constant 8.000000e+00 : f32
    %236 = vector.broadcast %cst_88 : f32 to vector<4x1x1xf32>
    %237 = arith.divf %235, %236 : vector<4x1x1xf32>
    %238 = vector.broadcast %226 : vector<4x1x1xf32> to vector<4x8x32xf32>
    %239 = arith.subf %218, %238 : vector<4x8x32xf32>
    %cst_89 = arith.constant 9.99999974E-6 : f32
    %240 = vector.broadcast %cst_89 : f32 to vector<4x1x1xf32>
    %241 = arith.addf %237, %240 : vector<4x1x1xf32>
    %242 = math.rsqrt %241 : vector<4x1x1xf32>
    %243 = vector.broadcast %242 : vector<4x1x1xf32> to vector<4x8x32xf32>
    %244 = arith.mulf %239, %243 : vector<4x8x32xf32>
    %245 = vector.shape_cast %244 : vector<4x8x32xf32> to vector<32x32xf32>
    %c0_90 = arith.constant 0 : index
    %c0_91 = arith.constant 0 : index
    %246 = vector.load %arg17[%c0_90, %c0_91] : memref<32x1xf32, #tpu.memory_space<vmem>>, vector<32x1xf32>
    %247 = vector.broadcast %246 : vector<32x1xf32> to vector<32x32xf32>
    %248 = arith.mulf %245, %247 : vector<32x32xf32>
    %c0_92 = arith.constant 0 : index
    %c0_93 = arith.constant 0 : index
    %249 = vector.load %arg18[%c0_92, %c0_93] : memref<32x1xf32, #tpu.memory_space<vmem>>, vector<32x1xf32>
    %250 = vector.broadcast %249 : vector<32x1xf32> to vector<32x32xf32>
    %251 = arith.addf %248, %250 : vector<32x32xf32>
    %252 = vector.extract_strided_slice %202 {offsets = [32, 0], sizes = [32, 32], strides = [1, 1]} : vector<64x96xf32> to vector<32x32xf32>
    %253 = vector.extract_strided_slice %202 {offsets = [32, 32], sizes = [32, 32], strides = [1, 1]} : vector<64x96xf32> to vector<32x32xf32>
    %254 = vector.extract_strided_slice %202 {offsets = [32, 64], sizes = [32, 32], strides = [1, 1]} : vector<64x96xf32> to vector<32x32xf32>
    %255 = tpu.concatenate %253, %253, %253, %253 in 0 : vector<32x32xf32>, vector<32x32xf32>, vector<32x32xf32>, vector<32x32xf32> -> vector<128x32xf32>
    %256 = arith.mulf %255, %0 : vector<128x32xf32>
    %257 = arith.truncf %256 : vector<128x32xf32> to vector<128x32xbf16>
    %258 = tpu.concatenate %254, %254, %254, %254 in 0 : vector<32x32xf32>, vector<32x32xf32>, vector<32x32xf32>, vector<32x32xf32> -> vector<128x32xf32>
    %259 = arith.mulf %258, %0 : vector<128x32xf32>
    %260 = arith.truncf %259 : vector<128x32xf32> to vector<128x32xbf16>
    %261 = arith.truncf %252 : vector<32x32xf32> to vector<32x32xbf16>
    %cst_94 = arith.constant dense<0.000000e+00> : vector<32x128xf32>
    %262 = tpu.matmul %261, %257, %cst_94 {dimension_numbers = #tpu.dot_dimension_numbers<[1], [1], [0], [0], [0, 0, 1, 0], [], []>} : vector<32x32xbf16>, vector<128x32xbf16>, vector<32x128xf32> -> vector<32x128xf32>
    %263 = arith.mulf %262, %203 : vector<32x128xf32>
    %264 = arith.truncf %263 : vector<32x128xf32> to vector<32x128xbf16>
    %cst_95 = arith.constant dense<0.000000e+00> : vector<32x32xf32>
    %265 = tpu.matmul %264, %260, %cst_95 {dimension_numbers = #tpu.dot_dimension_numbers<[1], [0], [0], [1], [0, 0, 1, 1], [], []>} : vector<32x128xbf16>, vector<128x32xbf16>, vector<32x32xf32> -> vector<32x32xf32>
    %266 = vector.shape_cast %265 : vector<32x32xf32> to vector<4x8x32xf32>
    %cst_96 = arith.constant dense<0.000000e+00> : vector<4x8xf32>
    %267 = vector.multi_reduction <add>, %266, %cst_96 [2] : vector<4x8x32xf32> to vector<4x8xf32>
    %268 = vector.shape_cast %267 : vector<4x8xf32> to vector<4x8x1xf32>
    %cst_97 = arith.constant 3.200000e+01 : f32
    %269 = vector.broadcast %cst_97 : f32 to vector<4x8x1xf32>
    %270 = arith.divf %268, %269 : vector<4x8x1xf32>
    %cst_98 = arith.constant dense<0.000000e+00> : vector<4x1xf32>
    %271 = vector.multi_reduction <add>, %270, %cst_98 [1] : vector<4x8x1xf32> to vector<4x1xf32>
    %272 = vector.shape_cast %271 : vector<4x1xf32> to vector<4x1x1xf32>
    %cst_99 = arith.constant 8.000000e+00 : f32
    %273 = vector.broadcast %cst_99 : f32 to vector<4x1x1xf32>
    %274 = arith.divf %272, %273 : vector<4x1x1xf32>
    %275 = vector.broadcast %274 : vector<4x1x1xf32> to vector<4x8x32xf32>
    %276 = arith.subf %266, %275 : vector<4x8x32xf32>
    %277 = arith.mulf %276, %276 : vector<4x8x32xf32>
    %cst_100 = arith.constant dense<0.000000e+00> : vector<4x8xf32>
    %278 = vector.multi_reduction <add>, %277, %cst_100 [2] : vector<4x8x32xf32> to vector<4x8xf32>
    %279 = vector.shape_cast %278 : vector<4x8xf32> to vector<4x8x1xf32>
    %cst_101 = arith.constant 3.200000e+01 : f32
    %280 = vector.broadcast %cst_101 : f32 to vector<4x8x1xf32>
    %281 = arith.divf %279, %280 : vector<4x8x1xf32>
    %cst_102 = arith.constant dense<0.000000e+00> : vector<4x1xf32>
    %282 = vector.multi_reduction <add>, %281, %cst_102 [1] : vector<4x8x1xf32> to vector<4x1xf32>
    %283 = vector.shape_cast %282 : vector<4x1xf32> to vector<4x1x1xf32>
    %cst_103 = arith.constant 8.000000e+00 : f32
    %284 = vector.broadcast %cst_103 : f32 to vector<4x1x1xf32>
    %285 = arith.divf %283, %284 : vector<4x1x1xf32>
    %286 = vector.broadcast %274 : vector<4x1x1xf32> to vector<4x8x32xf32>
    %287 = arith.subf %266, %286 : vector<4x8x32xf32>
    %cst_104 = arith.constant 9.99999974E-6 : f32
    %288 = vector.broadcast %cst_104 : f32 to vector<4x1x1xf32>
    %289 = arith.addf %285, %288 : vector<4x1x1xf32>
    %290 = math.rsqrt %289 : vector<4x1x1xf32>
    %291 = vector.broadcast %290 : vector<4x1x1xf32> to vector<4x8x32xf32>
    %292 = arith.mulf %287, %291 : vector<4x8x32xf32>
    %293 = vector.shape_cast %292 : vector<4x8x32xf32> to vector<32x32xf32>
    %c0_105 = arith.constant 0 : index
    %c0_106 = arith.constant 0 : index
    %294 = vector.load %arg17[%c0_105, %c0_106] : memref<32x1xf32, #tpu.memory_space<vmem>>, vector<32x1xf32>
    %295 = vector.broadcast %294 : vector<32x1xf32> to vector<32x32xf32>
    %296 = arith.mulf %293, %295 : vector<32x32xf32>
    %c0_107 = arith.constant 0 : index
    %c0_108 = arith.constant 0 : index
    %297 = vector.load %arg18[%c0_107, %c0_108] : memref<32x1xf32, #tpu.memory_space<vmem>>, vector<32x1xf32>
    %298 = vector.broadcast %297 : vector<32x1xf32> to vector<32x32xf32>
    %299 = arith.addf %296, %298 : vector<32x32xf32>
    %300 = tpu.concatenate %251, %299 in 0 : vector<32x32xf32>, vector<32x32xf32> -> vector<64x32xf32>
    %301 = arith.addf %175, %300 : vector<64x32xf32>
    %cst_109 = arith.constant dense<0.000000e+00> : vector<64xf32>
    %302 = vector.multi_reduction <add>, %301, %cst_109 [1] : vector<64x32xf32> to vector<64xf32>
    %303 = vector.shape_cast %302 : vector<64xf32> to vector<64x1xf32>
    %cst_110 = arith.constant 3.200000e+01 : f32
    %304 = vector.broadcast %cst_110 : f32 to vector<64x1xf32>
    %305 = arith.divf %303, %304 : vector<64x1xf32>
    %306 = vector.broadcast %305 : vector<64x1xf32> to vector<64x32xf32>
    %307 = arith.subf %301, %306 : vector<64x32xf32>
    %308 = arith.mulf %307, %307 : vector<64x32xf32>
    %cst_111 = arith.constant dense<0.000000e+00> : vector<64xf32>
    %309 = vector.multi_reduction <add>, %308, %cst_111 [1] : vector<64x32xf32> to vector<64xf32>
    %310 = vector.shape_cast %309 : vector<64xf32> to vector<64x1xf32>
    %cst_112 = arith.constant 3.200000e+01 : f32
    %311 = vector.broadcast %cst_112 : f32 to vector<64x1xf32>
    %312 = arith.divf %310, %311 : vector<64x1xf32>
    %313 = vector.broadcast %305 : vector<64x1xf32> to vector<64x32xf32>
    %314 = arith.subf %301, %313 : vector<64x32xf32>
    %cst_113 = arith.constant 9.99999974E-6 : f32
    %315 = vector.broadcast %cst_113 : f32 to vector<64x1xf32>
    %316 = arith.addf %312, %315 : vector<64x1xf32>
    %317 = math.rsqrt %316 : vector<64x1xf32>
    %318 = vector.broadcast %317 : vector<64x1xf32> to vector<64x32xf32>
    %319 = arith.mulf %314, %318 : vector<64x32xf32>
    %320 = vector.broadcast %176 : vector<1x32xf32> to vector<64x32xf32>
    %321 = arith.mulf %319, %320 : vector<64x32xf32>
    %322 = vector.broadcast %177 : vector<1x32xf32> to vector<64x32xf32>
    %323 = arith.addf %321, %322 : vector<64x32xf32>
    %324 = arith.truncf %323 : vector<64x32xf32> to vector<64x32xbf16>
    %c0_114 = arith.constant 0 : index
    %c0_115 = arith.constant 0 : index
    %325 = vector.load %arg19[%c0_114, %c0_115] : memref<32x64xbf16, #tpu.memory_space<vmem>>, vector<32x64xbf16>
    %cst_116 = arith.constant dense<0.000000e+00> : vector<64x64xf32>
    %326 = tpu.matmul %324, %325, %cst_116 {dimension_numbers = #tpu.dot_dimension_numbers<[1], [0], [0], [1], [0, 0, 1, 1], [], []>} : vector<64x32xbf16>, vector<32x64xbf16>, vector<64x64xf32> -> vector<64x64xf32>
    %c0_117 = arith.constant 0 : index
    %c0_118 = arith.constant 0 : index
    %327 = vector.load %arg20[%c0_117, %c0_118] : memref<1x64xf32, #tpu.memory_space<vmem>>, vector<1x64xf32>
    %328 = vector.broadcast %327 : vector<1x64xf32> to vector<64x64xf32>
    %329 = arith.addf %326, %328 : vector<64x64xf32>
    %330 = arith.mulf %329, %329 : vector<64x64xf32>
    %331 = arith.mulf %329, %330 : vector<64x64xf32>
    %cst_119 = arith.constant 4.471500e-02 : f32
    %332 = vector.broadcast %cst_119 : f32 to vector<64x64xf32>
    %333 = arith.mulf %332, %331 : vector<64x64xf32>
    %334 = arith.addf %329, %333 : vector<64x64xf32>
    %cst_120 = arith.constant 0.797884583 : f32
    %335 = vector.broadcast %cst_120 : f32 to vector<64x64xf32>
    %336 = arith.mulf %335, %334 : vector<64x64xf32>
    %337 = math.tanh %336 : vector<64x64xf32>
    %cst_121 = arith.constant 1.000000e+00 : f32
    %338 = vector.broadcast %cst_121 : f32 to vector<64x64xf32>
    %339 = arith.addf %338, %337 : vector<64x64xf32>
    %cst_122 = arith.constant 5.000000e-01 : f32
    %340 = vector.broadcast %cst_122 : f32 to vector<64x64xf32>
    %341 = arith.mulf %340, %339 : vector<64x64xf32>
    %342 = arith.mulf %329, %341 : vector<64x64xf32>
    %343 = arith.truncf %342 : vector<64x64xf32> to vector<64x64xbf16>
    %c0_123 = arith.constant 0 : index
    %c0_124 = arith.constant 0 : index
    %344 = vector.load %arg21[%c0_123, %c0_124] : memref<64x32xbf16, #tpu.memory_space<vmem>>, vector<64x32xbf16>
    %cst_125 = arith.constant dense<0.000000e+00> : vector<64x32xf32>
    %345 = tpu.matmul %343, %344, %cst_125 {dimension_numbers = #tpu.dot_dimension_numbers<[1], [0], [0], [1], [0, 0, 1, 1], [], []>} : vector<64x64xbf16>, vector<64x32xbf16>, vector<64x32xf32> -> vector<64x32xf32>
    %346 = arith.addf %301, %345 : vector<64x32xf32>
    %c0_126 = arith.constant 0 : index
    %c0_127 = arith.constant 0 : index
    %347 = vector.load %arg22[%c0_126, %c0_127] : memref<1x32xf32, #tpu.memory_space<vmem>>, vector<1x32xf32>
    %348 = vector.broadcast %347 : vector<1x32xf32> to vector<64x32xf32>
    %349 = arith.addf %346, %348 : vector<64x32xf32>
    %350 = arith.truncf %349 : vector<64x32xf32> to vector<64x32xbf16>
    %c0_128 = arith.constant 0 : index
    %c0_129 = arith.constant 0 : index
    %351 = vector.load %arg23[%c0_128, %c0_129] : memref<32x128xbf16, #tpu.memory_space<vmem>>, vector<32x128xbf16>
    %cst_130 = arith.constant dense<0.000000e+00> : vector<64x128xf32>
    %352 = tpu.matmul %350, %351, %cst_130 {dimension_numbers = #tpu.dot_dimension_numbers<[1], [0], [0], [1], [0, 0, 1, 1], [], []>} : vector<64x32xbf16>, vector<32x128xbf16>, vector<64x128xf32> -> vector<64x128xf32>
    %c0_131 = arith.constant 0 : index
    %c0_132 = arith.constant 0 : index
    %353 = vector.load %arg24[%c0_131, %c0_132] : memref<1x128xf32, #tpu.memory_space<vmem>>, vector<1x128xf32>
    %354 = vector.broadcast %353 : vector<1x128xf32> to vector<64x128xf32>
    %355 = arith.addf %352, %354 : vector<64x128xf32>
    %c0_133 = arith.constant 0 : index
    %c0_134 = arith.constant 0 : index
    %356 = vector.load %arg25[%c0_133, %c0_134] : memref<64x128xf32, #tpu.memory_space<vmem>>, vector<64x128xf32>
    tpu.vector_store %arg25[%c0_133, %c0_134], %355 {strides = array<i32>} : memref<64x128xf32, #tpu.memory_space<vmem>>, vector<64x128xf32>,
    return
  }
  func.func @transform_0(%arg0: i32) -> (i32, i32) {
    %c0_i32 = arith.constant 0 : i32
    %c0_i32_0 = arith.constant 0 : i32
    return %arg0, %c0_i32 : i32, i32
  }
  func.func @transform_1(%arg0: i32) -> (i32, i32) {
    %c0_i32 = arith.constant 0 : i32
    %c0_i32_0 = arith.constant 0 : i32
    %c0_i32_1 = arith.constant 0 : i32
    return %c0_i32, %c0_i32_0 : i32, i32
  }
  func.func @transform_2(%arg0: i32) -> (i32, i32) {
    %c0_i32 = arith.constant 0 : i32
    %c0_i32_0 = arith.constant 0 : i32
    %c0_i32_1 = arith.constant 0 : i32
    return %c0_i32, %c0_i32_0 : i32, i32
  }
  func.func @transform_3(%arg0: i32) -> (i32, i32) {
    %c0_i32 = arith.constant 0 : i32
    %c0_i32_0 = arith.constant 0 : i32
    %c0_i32_1 = arith.constant 0 : i32
    return %c0_i32, %c0_i32_0 : i32, i32
  }
  func.func @transform_4(%arg0: i32) -> (i32, i32) {
    %c0_i32 = arith.constant 0 : i32
    %c0_i32_0 = arith.constant 0 : i32
    %c0_i32_1 = arith.constant 0 : i32
    return %c0_i32, %c0_i32_0 : i32, i32
  }
  func.func @transform_5(%arg0: i32) -> (i32, i32) {
    %c0_i32 = arith.constant 0 : i32
    %c0_i32_0 = arith.constant 0 : i32
    %c0_i32_1 = arith.constant 0 : i32
    return %c0_i32, %c0_i32_0 : i32, i32
  }
  func.func @transform_6(%arg0: i32) -> (i32, i32) {
    %c0_i32 = arith.constant 0 : i32
    %c0_i32_0 = arith.constant 0 : i32
    %c0_i32_1 = arith.constant 0 : i32
    return %c0_i32, %c0_i32_0 : i32, i32
  }
  func.func @transform_7(%arg0: i32) -> (i32, i32) {
    %c0_i32 = arith.constant 0 : i32
    %c0_i32_0 = arith.constant 0 : i32
    %c0_i32_1 = arith.constant 0 : i32
    return %c0_i32, %c0_i32_0 : i32, i32
  }
  func.func @transform_8(%arg0: i32) -> (i32, i32) {
    %c0_i32 = arith.constant 0 : i32
    %c0_i32_0 = arith.constant 0 : i32
    %c0_i32_1 = arith.constant 0 : i32
    return %c0_i32, %c0_i32_0 : i32, i32
  }
  func.func @transform_9(%arg0: i32) -> (i32, i32) {
    %c0_i32 = arith.constant 0 : i32
    %c0_i32_0 = arith.constant 0 : i32
    %c0_i32_1 = arith.constant 0 : i32
    return %c0_i32, %c0_i32_0 : i32, i32
  }
  func.func @transform_10(%arg0: i32) -> (i32, i32) {
    %c0_i32 = arith.constant 0 : i32
    %c0_i32_0 = arith.constant 0 : i32
    %c0_i32_1 = arith.constant 0 : i32
    return %c0_i32, %c0_i32_0 : i32, i32
  }
  func.func @transform_11(%arg0: i32) -> (i32, i32) {
    %c0_i32 = arith.constant 0 : i32
    %c0_i32_0 = arith.constant 0 : i32
    %c0_i32_1 = arith.constant 0 : i32
    return %c0_i32, %c0_i32_0 : i32, i32
  }
  func.func @transform_12(%arg0: i32) -> (i32, i32) {
    %c0_i32 = arith.constant 0 : i32
    %c0_i32_0 = arith.constant 0 : i32
    %c0_i32_1 = arith.constant 0 : i32
    return %c0_i32, %c0_i32_0 : i32, i32
  }
  func.func @transform_13(%arg0: i32) -> (i32, i32) {
    %c0_i32 = arith.constant 0 : i32
    %c0_i32_0 = arith.constant 0 : i32
    %c0_i32_1 = arith.constant 0 : i32
    return %c0_i32, %c0_i32_0 : i32, i32
  }
  func.func @transform_14(%arg0: i32) -> (i32, i32) {
    %c0_i32 = arith.constant 0 : i32
    %c0_i32_0 = arith.constant 0 : i32
    %c0_i32_1 = arith.constant 0 : i32
    return %c0_i32, %c0_i32_0 : i32, i32
  }
  func.func @transform_15(%arg0: i32) -> (i32, i32) {
    %c0_i32 = arith.constant 0 : i32
    %c0_i32_0 = arith.constant 0 : i32
    %c0_i32_1 = arith.constant 0 : i32
    return %c0_i32, %c0_i32_0 : i32, i32
  }
  func.func @transform_16(%arg0: i32) -> (i32, i32) {
    %c0_i32 = arith.constant 0 : i32
    %c0_i32_0 = arith.constant 0 : i32
    %c0_i32_1 = arith.constant 0 : i32
    return %c0_i32, %c0_i32_0 : i32, i32
  }
  func.func @transform_17(%arg0: i32) -> (i32, i32) {
    %c0_i32 = arith.constant 0 : i32
    %c0_i32_0 = arith.constant 0 : i32
    %c0_i32_1 = arith.constant 0 : i32
    return %c0_i32, %c0_i32_0 : i32, i32
  }
  func.func @transform_18(%arg0: i32) -> (i32, i32) {
    %c0_i32 = arith.constant 0 : i32
    %c0_i32_0 = arith.constant 0 : i32
    %c0_i32_1 = arith.constant 0 : i32
    return %c0_i32, %c0_i32_0 : i32, i32
  }
  func.func @transform_19(%arg0: i32) -> (i32, i32) {
    %c0_i32 = arith.constant 0 : i32
    %c0_i32_0 = arith.constant 0 : i32
    %c0_i32_1 = arith.constant 0 : i32
    return %c0_i32, %c0_i32_0 : i32, i32
  }
  func.func @transform_20(%arg0: i32) -> (i32, i32) {
    %c0_i32 = arith.constant 0 : i32
    %c0_i32_0 = arith.constant 0 : i32
    %c0_i32_1 = arith.constant 0 : i32
    return %c0_i32, %c0_i32_0 : i32, i32
  }
  func.func @transform_21(%arg0: i32) -> (i32, i32) {
    %c0_i32 = arith.constant 0 : i32
    %c0_i32_0 = arith.constant 0 : i32
    %c0_i32_1 = arith.constant 0 : i32
    return %c0_i32, %c0_i32_0 : i32, i32
  }
  func.func @transform_22(%arg0: i32) -> (i32, i32) {
    %c0_i32 = arith.constant 0 : i32
    %c0_i32_0 = arith.constant 0 : i32
    %c0_i32_1 = arith.constant 0 : i32
    return %c0_i32, %c0_i32_0 : i32, i32
  }
  func.func @transform_23(%arg0: i32) -> (i32, i32) {
    %c0_i32 = arith.constant 0 : i32
    %c0_i32_0 = arith.constant 0 : i32
    %c0_i32_1 = arith.constant 0 : i32
    return %c0_i32, %c0_i32_0 : i32, i32
  }
  func.func @transform_24(%arg0: i32) -> (i32, i32) {
    %c0_i32 = arith.constant 0 : i32
    %c0_i32_0 = arith.constant 0 : i32
    return %arg0, %c0_i32 : i32, i32
  }
}

</mosaic_0001>

<llo_original>
// kernel: retnet_forward.1
$region0: #{retnet_forward.1}
  #allocation0 [shape = 'u32[]', space=smem, size = 0x4, offset = 0x4, fixed_abs, tag = 'smem constant byte address 0x4 - core index']
  #allocation1 [shape = 'u32[144,128]{1,0:T(1,128)}', space=vmem, size = 0x12000, scoped, tag = 'internal scratch']
  %s0 = inlined_call_operand.vmem [shape: f32[64,32], index: 0, kind: input, shape index: {}]
  %s1 = inlined_call_operand.vmem [shape: f32[128,32], index: 1, kind: input, shape index: {}]
  %s2 = inlined_call_operand.vmem [shape: f32[1,32], index: 2, kind: input, shape index: {}]
  %s3 = inlined_call_operand.vmem [shape: f32[1,32], index: 3, kind: input, shape index: {}]
  %s4 = inlined_call_operand.vmem [shape: bf16[32,96], index: 4, kind: input, shape index: {}]
  %s5 = inlined_call_operand.vmem [shape: f32[32,128], index: 5, kind: input, shape index: {}]
  %s6 = inlined_call_operand.vmem [shape: f32[32,1], index: 6, kind: input, shape index: {}]
  %s7 = inlined_call_operand.vmem [shape: f32[32,1], index: 7, kind: input, shape index: {}]
  %s8 = inlined_call_operand.vmem [shape: bf16[32,64], index: 8, kind: input, shape index: {}]
  %s9 = inlined_call_operand.vmem [shape: f32[1,64], index: 9, kind: input, shape index: {}]
  %s10 = inlined_call_operand.vmem [shape: bf16[64,32], index: 10, kind: input, shape index: {}]
  %s11 = inlined_call_operand.vmem [shape: f32[1,32], index: 11, kind: input, shape index: {}]
  %s12 = inlined_call_operand.vmem [shape: f32[1,32], index: 12, kind: input, shape index: {}]
  %s13 = inlined_call_operand.vmem [shape: f32[1,32], index: 13, kind: input, shape index: {}]
  %s14 = inlined_call_operand.vmem [shape: bf16[32,96], index: 14, kind: input, shape index: {}]
  %s15 = inlined_call_operand.vmem [shape: f32[32,128], index: 15, kind: input, shape index: {}]
  %s16 = inlined_call_operand.vmem [shape: f32[32,1], index: 16, kind: input, shape index: {}]
  %s17 = inlined_call_operand.vmem [shape: f32[32,1], index: 17, kind: input, shape index: {}]
  %s18 = inlined_call_operand.vmem [shape: bf16[32,64], index: 18, kind: input, shape index: {}]
  %s19 = inlined_call_operand.vmem [shape: f32[1,64], index: 19, kind: input, shape index: {}]
  %s20 = inlined_call_operand.vmem [shape: bf16[64,32], index: 20, kind: input, shape index: {}]
  %s21 = inlined_call_operand.vmem [shape: f32[1,32], index: 21, kind: input, shape index: {}]
  %s22 = inlined_call_operand.vmem [shape: bf16[32,128], index: 22, kind: input, shape index: {}]
  %s23 = inlined_call_operand.vmem [shape: f32[1,128], index: 23, kind: input, shape index: {}]
  %s24 = inlined_call_operand.hbm [shape: f32[64,128], index: 24, kind: output, shape index: {}]
  %s25 = sld [smem:[#allocation0]]
  $region106: #{retnet_forward.1} parent=0
    _
  %s27 = ssub.s32 1, %s25
  %s28 = scalar_select 0, %s27, %s25
  $region1: #{retnet_forward.1} parent=0
    #allocation2 [shape = 'u8[32768]{0}', space=vmem, size = 0x8000, scoped, tag = 'output window, operand 0, single buffered']
    #allocation3 [shape = 's32[1]{0}', space=sflag, size = 0x4, scoped, tag = 'scoped memory for retnet_forward.1']
    %29 = vsyncpa [#allocation3], 0
    // Predicated region
    $region2: #{retnet_forward.1} parent=1 // pred_check
      _
    $region3: #{retnet_forward.1} parent=1 // pred_check_branch
      %31 = sbr.rel (0) target = $region5
    $region4: #{retnet_forward.1} parent=1 // pred_region
      _
    $region5: #{retnet_forward.1} parent=1 // pred_fallthru
      _
    // Predicated region
    $region6: #{retnet_forward.1} parent=1 // pred_check
      _
    $region7: #{retnet_forward.1} parent=1 // pred_check_branch
      %33 = sbr.rel (0) target = $region9
    $region8: #{retnet_forward.1} parent=1 // pred_region
      _
    $region9: #{retnet_forward.1} parent=1 // pred_fallthru
      _
    // Predicated region
    $region10: #{retnet_forward.1} parent=1 // pred_check
      _
    $region11: #{retnet_forward.1} parent=1 // pred_check_branch
      %35 = sbr.rel (0) target = $region13
    $region12: #{retnet_forward.1} parent=1 // pred_region
      _
    $region13: #{retnet_forward.1} parent=1 // pred_fallthru
      _
    // Predicated region
    $region14: #{retnet_forward.1} parent=1 // pred_check
      _
    $region15: #{retnet_forward.1} parent=1 // pred_check_branch
      %37 = sbr.rel (0) target = $region17
    $region16: #{retnet_forward.1} parent=1 // pred_region
      _
    $region17: #{retnet_forward.1} parent=1 // pred_fallthru
      _
    // Predicated region
    $region18: #{retnet_forward.1} parent=1 // pred_check
      _
    $region19: #{retnet_forward.1} parent=1 // pred_check_branch
      %39 = sbr.rel (0) target = $region21
    $region20: #{retnet_forward.1} parent=1 // pred_region
      _
    $region21: #{retnet_forward.1} parent=1 // pred_fallthru
      _
    // Predicated region
    $region22: #{retnet_forward.1} parent=1 // pred_check
      _
    $region23: #{retnet_forward.1} parent=1 // pred_check_branch
      %41 = sbr.rel (0) target = $region25
    $region24: #{retnet_forward.1} parent=1 // pred_region
      _
    $region25: #{retnet_forward.1} parent=1 // pred_fallthru
      _
    // Predicated region
    $region26: #{retnet_forward.1} parent=1 // pred_check
      _
    $region27: #{retnet_forward.1} parent=1 // pred_check_branch
      %43 = sbr.rel (0) target = $region29
    $region28: #{retnet_forward.1} parent=1 // pred_region
      _
    $region29: #{retnet_forward.1} parent=1 // pred_fallthru
      _
    // Predicated region
    $region30: #{retnet_forward.1} parent=1 // pred_check
      _
    $region31: #{retnet_forward.1} parent=1 // pred_check_branch
      %45 = sbr.rel (0) target = $region33
    $region32: #{retnet_forward.1} parent=1 // pred_region
      _
    $region33: #{retnet_forward.1} parent=1 // pred_fallthru
      _
    // Predicated region
    $region34: #{retnet_forward.1} parent=1 // pred_check
      _
    $region35: #{retnet_forward.1} parent=1 // pred_check_branch
      %47 = sbr.rel (0) target = $region37
    $region36: #{retnet_forward.1} parent=1 // pred_region
      _
    $region37: #{retnet_forward.1} parent=1 // pred_fallthru
      _
    // Predicated region
    $region38: #{retnet_forward.1} parent=1 // pred_check
      _
    $region39: #{retnet_forward.1} parent=1 // pred_check_branch
      %49 = sbr.rel (0) target = $region41
    $region40: #{retnet_forward.1} parent=1 // pred_region
      _
    $region41: #{retnet_forward.1} parent=1 // pred_fallthru
      _
    // Predicated region
    $region42: #{retnet_forward.1} parent=1 // pred_check
      _
    $region43: #{retnet_forward.1} parent=1 // pred_check_branch
      %51 = sbr.rel (0) target = $region45
    $region44: #{retnet_forward.1} parent=1 // pred_region
      _
    $region45: #{retnet_forward.1} parent=1 // pred_fallthru
      _
    // Predicated region
    $region46: #{retnet_forward.1} parent=1 // pred_check
      _
    $region47: #{retnet_forward.1} parent=1 // pred_check_branch
      %53 = sbr.rel (0) target = $region49
    $region48: #{retnet_forward.1} parent=1 // pred_region
      _
    $region49: #{retnet_forward.1} parent=1 // pred_fallthru
      _
    // Predicated region
    $region50: #{retnet_forward.1} parent=1 // pred_check
      _
    $region51: #{retnet_forward.1} parent=1 // pred_check_branch
      %55 = sbr.rel (0) target = $region53
    $region52: #{retnet_forward.1} parent=1 // pred_region
      _
    $region53: #{retnet_forward.1} parent=1 // pred_fallthru
      _
    // Predicated region
    $region54: #{retnet_forward.1} parent=1 // pred_check
      _
    $region55: #{retnet_forward.1} parent=1 // pred_check_branch
      %57 = sbr.rel (0) target = $region57
    $region56: #{retnet_forward.1} parent=1 // pred_region
      _
    $region57: #{retnet_forward.1} parent=1 // pred_fallthru
      _
    // Predicated region
    $region58: #{retnet_forward.1} parent=1 // pred_check
      _
    $region59: #{retnet_forward.1} parent=1 // pred_check_branch
      %59 = sbr.rel (0) target = $region61
    $region60: #{retnet_forward.1} parent=1 // pred_region
      _
    $region61: #{retnet_forward.1} parent=1 // pred_fallthru
      _
    // Predicated region
    $region62: #{retnet_forward.1} parent=1 // pred_check
      _
    $region63: #{retnet_forward.1} parent=1 // pred_check_branch
      %61 = sbr.rel (0) target = $region65
    $region64: #{retnet_forward.1} parent=1 // pred_region
      _
    $region65: #{retnet_forward.1} parent=1 // pred_fallthru
      _
    // Predicated region
    $region66: #{retnet_forward.1} parent=1 // pred_check
      _
    $region67: #{retnet_forward.1} parent=1 // pred_check_branch
      %63 = sbr.rel (0) target = $region69
    $region68: #{retnet_forward.1} parent=1 // pred_region
      _
    $region69: #{retnet_forward.1} parent=1 // pred_fallthru
      _
    // Predicated region
    $region70: #{retnet_forward.1} parent=1 // pred_check
      _
    $region71: #{retnet_forward.1} parent=1 // pred_check_branch
      %65 = sbr.rel (0) target = $region73
    $region72: #{retnet_forward.1} parent=1 // pred_region
      _
    $region73: #{retnet_forward.1} parent=1 // pred_fallthru
      _
    // Predicated region
    $region74: #{retnet_forward.1} parent=1 // pred_check
      _
    $region75: #{retnet_forward.1} parent=1 // pred_check_branch
      %67 = sbr.rel (0) target = $region77
    $region76: #{retnet_forward.1} parent=1 // pred_region
      _
    $region77: #{retnet_forward.1} parent=1 // pred_fallthru
      _
    // Predicated region
    $region78: #{retnet_forward.1} parent=1 // pred_check
      _
    $region79: #{retnet_forward.1} parent=1 // pred_check_branch
      %69 = sbr.rel (0) target = $region81
    $region80: #{retnet_forward.1} parent=1 // pred_region
      _
    $region81: #{retnet_forward.1} parent=1 // pred_fallthru
      _
    // Predicated region
    $region82: #{retnet_forward.1} parent=1 // pred_check
      _
    $region83: #{retnet_forward.1} parent=1 // pred_check_branch
      %71 = sbr.rel (0) target = $region85
    $region84: #{retnet_forward.1} parent=1 // pred_region
      _
    $region85: #{retnet_forward.1} parent=1 // pred_fallthru
      _
    // Predicated region
    $region86: #{retnet_forward.1} parent=1 // pred_check
      _
    $region87: #{retnet_forward.1} parent=1 // pred_check_branch
      %73 = sbr.rel (0) target = $region89
    $region88: #{retnet_forward.1} parent=1 // pred_region
      _
    $region89: #{retnet_forward.1} parent=1 // pred_fallthru
      _
    // Predicated region
    $region90: #{retnet_forward.1} parent=1 // pred_check
      _
    $region91: #{retnet_forward.1} parent=1 // pred_check_branch
      %75 = sbr.rel (0) target = $region93
    $region92: #{retnet_forward.1} parent=1 // pred_region
      _
    $region93: #{retnet_forward.1} parent=1 // pred_fallthru
      _
    // Predicated region
    $region94: #{retnet_forward.1} parent=1 // pred_check
      _
    $region95: #{retnet_forward.1} parent=1 // pred_check_branch
      %77 = sbr.rel (0) target = $region97
    $region96: #{retnet_forward.1} parent=1 // pred_region
      _
    $region97: #{retnet_forward.1} parent=1 // pred_fallthru
      _
    %v79 = vld [vmem:[%s1] sm:$0xff]
    %v80 = vld [vmem:[%s1 + $0x8] sm:$0xff]
    %v81 = vld [vmem:[%s1 + $0x10] sm:$0xff]
    %v82 = vld [vmem:[%s1 + $0x18] sm:$0xff]
    %v83 = vld [vmem:[%s1 + $0x20] sm:$0xff]
    %v84 = vld [vmem:[%s1 + $0x28] sm:$0xff]
    %v85 = vld [vmem:[%s1 + $0x30] sm:$0xff]
    %v86 = vld [vmem:[%s1 + $0x38] sm:$0xff]
    %v87 = vld [vmem:[%s1 + $0x40] sm:$0xff]
    %v88 = vld [vmem:[%s1 + $0x48] sm:$0xff]
    %v89 = vld [vmem:[%s1 + $0x50] sm:$0xff]
    %v90 = vld [vmem:[%s1 + $0x58] sm:$0xff]
    %v91 = vld [vmem:[%s1 + $0x60] sm:$0xff]
    %v92 = vld [vmem:[%s1 + $0x68] sm:$0xff]
    %v93 = vld [vmem:[%s1 + $0x70] sm:$0xff]
    %v94 = vld [vmem:[%s1 + $0x78] sm:$0xff]
    %v95 = vld [vmem:[%s0] sm:$0xff]
    %v96 = vld [vmem:[%s0 + $0x8] sm:$0xff]
    %v97 = vld [vmem:[%s0 + $0x10] sm:$0xff]
    %v98 = vld [vmem:[%s0 + $0x18] sm:$0xff]
    %v99 = vld [vmem:[%s0 + $0x20] sm:$0xff]
    %v100 = vld [vmem:[%s0 + $0x28] sm:$0xff]
    %v101 = vld [vmem:[%s0 + $0x30] sm:$0xff]
    %v102 = vld [vmem:[%s0 + $0x38] sm:$0xff]
    %v103 = vld [vmem:[%s2] sm:$0x1]
    %v104 = vld [vmem:[%s3] sm:$0x1]
    %vm105 = vcmask 261120
    %v106 = vsel %vm105, %v95, 0.0
    %107 = vadd.xlane.f32.xlu0 %v106
    %v108 = vpop.xlane.xlu0 %107
    %v109 = vsel %vm105, %v96, 0.0
    %110 = vadd.xlane.f32.xlu0 %v109
    %v111 = vpop.xlane.xlu0 %110
    %v112 = vsel %vm105, %v97, 0.0
    %113 = vadd.xlane.f32.xlu0 %v112
    %v114 = vpop.xlane.xlu0 %113
    %v115 = vsel %vm105, %v98, 0.0
    %116 = vadd.xlane.f32.xlu0 %v115
    %v117 = vpop.xlane.xlu0 %116
    %v118 = vsel %vm105, %v99, 0.0
    %119 = vadd.xlane.f32.xlu0 %v118
    %v120 = vpop.xlane.xlu0 %119
    %v121 = vsel %vm105, %v100, 0.0
    %122 = vadd.xlane.f32.xlu0 %v121
    %v123 = vpop.xlane.xlu0 %122
    %v124 = vsel %vm105, %v101, 0.0
    %125 = vadd.xlane.f32.xlu0 %v124
    %v126 = vpop.xlane.xlu0 %125
    %v127 = vsel %vm105, %v102, 0.0
    %128 = vadd.xlane.f32.xlu0 %v127
    %v129 = vpop.xlane.xlu0 %128
    %v130 = vrcp.pop 32.0
    %v131 = vmul.f32 %v108, %v130
    %v132 = vmul.f32 %v111, %v130
    %v133 = vmul.f32 %v114, %v130
    %v134 = vmul.f32 %v117, %v130
    %v135 = vmul.f32 %v120, %v130
    %v136 = vmul.f32 %v123, %v130
    %v137 = vmul.f32 %v126, %v130
    %v138 = vmul.f32 %v129, %v130
    %v139 = vsub.f32 %v95, %v131
    %v140 = vsub.f32 %v96, %v132
    %v141 = vsub.f32 %v97, %v133
    %v142 = vsub.f32 %v98, %v134
    %v143 = vsub.f32 %v99, %v135
    %v144 = vsub.f32 %v100, %v136
    %v145 = vsub.f32 %v101, %v137
    %v146 = vsub.f32 %v102, %v138
    %v147 = vmul.f32 %v139, %v139
    %v148 = vmul.f32 %v140, %v140
    %v149 = vmul.f32 %v141, %v141
    %v150 = vmul.f32 %v142, %v142
    %v151 = vmul.f32 %v143, %v143
    %v152 = vmul.f32 %v144, %v144
    %v153 = vmul.f32 %v145, %v145
    %v154 = vmul.f32 %v146, %v146
    %v155 = vsel %vm105, %v147, 0.0
    %156 = vadd.xlane.f32.xlu0 %v155
    %v157 = vpop.xlane.xlu0 %156
    %v158 = vsel %vm105, %v148, 0.0
    %159 = vadd.xlane.f32.xlu0 %v158
    %v160 = vpop.xlane.xlu0 %159
    %v161 = vsel %vm105, %v149, 0.0
    %162 = vadd.xlane.f32.xlu0 %v161
    %v163 = vpop.xlane.xlu0 %162
    %v164 = vsel %vm105, %v150, 0.0
    %165 = vadd.xlane.f32.xlu0 %v164
    %v166 = vpop.xlane.xlu0 %165
    %v167 = vsel %vm105, %v151, 0.0
    %168 = vadd.xlane.f32.xlu0 %v167
    %v169 = vpop.xlane.xlu0 %168
    %v170 = vsel %vm105, %v152, 0.0
    %171 = vadd.xlane.f32.xlu0 %v170
    %v172 = vpop.xlane.xlu0 %171
    %v173 = vsel %vm105, %v153, 0.0
    %174 = vadd.xlane.f32.xlu0 %v173
    %v175 = vpop.xlane.xlu0 %174
    %v176 = vsel %vm105, %v154, 0.0
    %177 = vadd.xlane.f32.xlu0 %v176
    %v178 = vpop.xlane.xlu0 %177
    %v179 = vmul.f32 %v157, %v130
    %v180 = vmul.f32 %v160, %v130
    %v181 = vmul.f32 %v163, %v130
    %v182 = vmul.f32 %v166, %v130
    %v183 = vmul.f32 %v169, %v130
    %v184 = vmul.f32 %v172, %v130
    %v185 = vmul.f32 %v175, %v130
    %v186 = vmul.f32 %v178, %v130
    %v187 = vadd.f32 %v179, 1e-05
    %v188 = vadd.f32 %v180, 1e-05
    %v189 = vadd.f32 %v181, 1e-05
    %v190 = vadd.f32 %v182, 1e-05
    %v191 = vadd.f32 %v183, 1e-05
    %v192 = vadd.f32 %v184, 1e-05
    %v193 = vadd.f32 %v185, 1e-05
    %v194 = vadd.f32 %v186, 1e-05
    %v195 = vrsqrt.pop %v187
    %v196 = vrsqrt.pop %v188
    %v197 = vrsqrt.pop %v189
    %v198 = vrsqrt.pop %v190
    %v199 = vrsqrt.pop %v191
    %v200 = vrsqrt.pop %v192
    %v201 = vrsqrt.pop %v193
    %v202 = vrsqrt.pop %v194
    %v203 = vmul.f32 %v139, %v195
    %v204 = vmul.f32 %v140, %v196
    %v205 = vmul.f32 %v141, %v197
    %v206 = vmul.f32 %v142, %v198
    %v207 = vmul.f32 %v143, %v199
    %v208 = vmul.f32 %v144, %v200
    %v209 = vmul.f32 %v145, %v201
    %v210 = vmul.f32 %v146, %v202
    %v212 = vlaneseq
    %v213 = vshrl.u32 %v212, 7
    %v214 = vsub.s32 0, %v213
    %v215 = vrot.slane %v103, %v214
    %v217 = vmul.f32 %v203, %v215
    %v218 = vmul.f32 %v204, %v215
    %v219 = vmul.f32 %v205, %v215
    %v220 = vmul.f32 %v206, %v215
    %v221 = vmul.f32 %v207, %v215
    %v222 = vmul.f32 %v208, %v215
    %v223 = vmul.f32 %v209, %v215
    %v224 = vmul.f32 %v210, %v215
    %v226 = vlaneseq
    %v227 = vshrl.u32 %v226, 7
    %v228 = vsub.s32 0, %v227
    %v229 = vrot.slane %v104, %v228
    %v231 = vadd.f32 %v217, %v229
    %v232 = vadd.f32 %v218, %v229
    %v233 = vadd.f32 %v219, %v229
    %v234 = vadd.f32 %v220, %v229
    %v235 = vadd.f32 %v221, %v229
    %v236 = vadd.f32 %v222, %v229
    %v237 = vadd.f32 %v223, %v229
    %v238 = vadd.f32 %v224, %v229
    %v239 = vpack.c.bf16 %v232, %v231
    %v240 = vpack.c.bf16 %v234, %v233
    %v241 = vpack.c.bf16 %v236, %v235
    %v242 = vpack.c.bf16 %v238, %v237
    %v243 = vld [vmem:[%s4] sm:$0xf]
    %v244 = vld [vmem:[%s4 + $0x4] sm:$0xf]
    %v245 = vld [vmem:[%s4 + $0x8] sm:$0xf]
    %v246 = vld [vmem:[%s4 + $0xc] sm:$0xf]
    %v251 = vunpack.c.l.b16 %v243
    %v252 = vunpack.c.l.b16 %v244
    %v253 = vunpack.c.l.b16 %v245
    %v254 = vunpack.c.l.b16 %v246
    %v255 = vpack.c.b16 %v252, %v251
    %v256 = vpack.c.b16 %v254, %v253
    %v260 = vsel %vm105, %v239, 0
    %v263 = vsel %vm105, %v240, 0
    %v266 = vsel %vm105, %v241, 0
    %v269 = vsel %vm105, %v242, 0
    %271 = vmatprep.subr.bf16.mxu0 0
    %272 = vmatpush1.bf16.msra.mxu0 0
    %273 = vmatprep.subr.bf16.mxu0 0
    %274 = vmatpush1.bf16.msra.mxu0 0
    %275 = vmatprep.subr.bf16.mxu0 0
    %276 = vmatpush1.bf16.msra.mxu0 0
    %277 = vmatprep.subr.bf16.mxu0 0
    %278 = vmatpush1.bf16.msra.mxu0 0
    %279 = vmatprep.subr.bf16.mxu0 0
    %280 = vmatpush1.bf16.msra.mxu0 0
    %281 = vmatprep.subr.bf16.mxu0 0
    %282 = vmatpush1.bf16.msra.mxu0 0
    %283 = vmatprep.subr.bf16.mxu0 0
    %284 = vmatpush1.bf16.msra.mxu0 %v256
    %285 = vmatprep.subr.bf16.mxu0 0
    %286 = vmatpush1.bf16.msra.mxu0 %v255
    %287 = vmatprep.subr.bf16.mxu0 0
    %288 = vmatpush2.bf16.msra.mxu0 0
    %289 = vmatprep.subr.bf16.mxu0 0
    %290 = vmatpush2.bf16.msra.mxu0 0
    %291 = vmatprep.subr.bf16.mxu0 0
    %292 = vmatpush2.bf16.msra.mxu0 0
    %293 = vmatprep.subr.bf16.mxu0 0
    %294 = vmatpush2.bf16.msra.mxu0 0
    %295 = vmatprep.subr.bf16.mxu0 0
    %296 = vmatpush2.bf16.msra.mxu0 0
    %297 = vmatprep.subr.bf16.mxu0 0
    %298 = vmatpush2.bf16.msra.mxu0 0
    %299 = vmatprep.subr.bf16.mxu0 0
    %300 = vmatpush2.bf16.msra.mxu0 0
    %301 = vmatprep.subr.bf16.mxu0 0
    %302 = vmatpush2.bf16.msra.mxu0 0
    %303 = vmatprep.mubr.bf16.mxu0 0
    %304 = vmatmul.mubr.bf16.gmra.mxu0 %v260
    %v305 = vpop.f32.mrf.mxu0
    %v306 = vadd.f32 0.0, %v305
    %v307 = vpop.f32.mrf.mxu0
    %v308 = vpop.f32.mrf.mxu0
    %v309 = vadd.f32 0.0, %v308
    %v310 = vpop.f32.mrf.mxu0
    %311 = vmatprep.mubr.bf16.mxu0 0
    %312 = vmatmul.mubr.bf16.gmra.mxu0 %v263
    %v313 = vpop.f32.mrf.mxu0
    %v314 = vadd.f32 0.0, %v313
    %v315 = vpop.f32.mrf.mxu0
    %v316 = vpop.f32.mrf.mxu0
    %v317 = vadd.f32 0.0, %v316
    %v318 = vpop.f32.mrf.mxu0
    %319 = vmatprep.mubr.bf16.mxu0 0
    %320 = vmatmul.mubr.bf16.gmra.mxu0 %v266
    %v321 = vpop.f32.mrf.mxu0
    %v322 = vadd.f32 0.0, %v321
    %v323 = vpop.f32.mrf.mxu0
    %v324 = vpop.f32.mrf.mxu0
    %v325 = vadd.f32 0.0, %v324
    %v326 = vpop.f32.mrf.mxu0
    %327 = vmatprep.mubr.bf16.mxu0 0
    %328 = vmatmul.mubr.bf16.gmra.mxu0 %v269
    %v329 = vpop.f32.mrf.mxu0
    %v330 = vadd.f32 0.0, %v329
    %v331 = vpop.f32.mrf.mxu0
    %v332 = vpop.f32.mrf.mxu0
    %v333 = vadd.f32 0.0, %v332
    %v334 = vpop.f32.mrf.mxu0
    %335 = vdwg.mxu0
    %v336 = vld [vmem:[%s5] sm:$0xff]
    %v337 = vld [vmem:[%s5 + $0x8] sm:$0xff]
    %v338 = vld [vmem:[%s5 + $0x10] sm:$0xff]
    %v339 = vld [vmem:[%s5 + $0x18] sm:$0xff]
    %356 = vrot.lane.b32.xlu0 %v79, 32
    %v357 = vpop.permute.xlu0 %356
    %358 = vrot.lane.b32.xlu0 %v80, 32
    %v359 = vpop.permute.xlu0 %358
    %360 = vrot.lane.b32.xlu0 %v81, 32
    %v361 = vpop.permute.xlu0 %360
    %362 = vrot.lane.b32.xlu0 %v82, 32
    %v363 = vpop.permute.xlu0 %362
    %364 = vrot.lane.b32.xlu0 %v83, 32
    %v365 = vpop.permute.xlu0 %364
    %366 = vrot.lane.b32.xlu0 %v84, 32
    %v367 = vpop.permute.xlu0 %366
    %368 = vrot.lane.b32.xlu0 %v85, 32
    %v369 = vpop.permute.xlu0 %368
    %370 = vrot.lane.b32.xlu0 %v86, 32
    %v371 = vpop.permute.xlu0 %370
    %372 = vrot.lane.b32.xlu0 %v87, 32
    %v373 = vpop.permute.xlu0 %372
    %374 = vrot.lane.b32.xlu0 %v88, 32
    %v375 = vpop.permute.xlu0 %374
    %376 = vrot.lane.b32.xlu0 %v89, 32
    %v377 = vpop.permute.xlu0 %376
    %378 = vrot.lane.b32.xlu0 %v90, 32
    %v379 = vpop.permute.xlu0 %378
    %380 = vrot.lane.b32.xlu0 %v91, 32
    %v381 = vpop.permute.xlu0 %380
    %382 = vrot.lane.b32.xlu0 %v92, 32
    %v383 = vpop.permute.xlu0 %382
    %384 = vrot.lane.b32.xlu0 %v93, 32
    %v385 = vpop.permute.xlu0 %384
    %386 = vrot.lane.b32.xlu0 %v94, 32
    %v387 = vpop.permute.xlu0 %386
    %v404 = vmul.f32 %v306, %v357
    %v405 = vmul.f32 %v309, %v359
    %v406 = vmul.f32 %v314, %v361
    %v407 = vmul.f32 %v317, %v363
    %v408 = vmul.f32 %v306, %v365
    %v409 = vmul.f32 %v309, %v367
    %v410 = vmul.f32 %v314, %v369
    %v411 = vmul.f32 %v317, %v371
    %v412 = vmul.f32 %v306, %v373
    %v413 = vmul.f32 %v309, %v375
    %v414 = vmul.f32 %v314, %v377
    %v415 = vmul.f32 %v317, %v379
    %v416 = vmul.f32 %v306, %v381
    %v417 = vmul.f32 %v309, %v383
    %v418 = vmul.f32 %v314, %v385
    %v419 = vmul.f32 %v317, %v387
    %v420 = vpack.c.bf16 %v405, %v404
    %v421 = vpack.c.bf16 %v407, %v406
    %v422 = vpack.c.bf16 %v409, %v408
    %v423 = vpack.c.bf16 %v411, %v410
    %v424 = vpack.c.bf16 %v413, %v412
    %v425 = vpack.c.bf16 %v415, %v414
    %v426 = vpack.c.bf16 %v417, %v416
    %v427 = vpack.c.bf16 %v419, %v418
    %428 = vrot.lane.b32.xlu0 %v79, 64
    %v429 = vpop.permute.xlu0 %428
    %430 = vrot.lane.b32.xlu0 %v80, 64
    %v431 = vpop.permute.xlu0 %430
    %432 = vrot.lane.b32.xlu0 %v81, 64
    %v433 = vpop.permute.xlu0 %432
    %434 = vrot.lane.b32.xlu0 %v82, 64
    %v435 = vpop.permute.xlu0 %434
    %436 = vrot.lane.b32.xlu0 %v83, 64
    %v437 = vpop.permute.xlu0 %436
    %438 = vrot.lane.b32.xlu0 %v84, 64
    %v439 = vpop.permute.xlu0 %438
    %440 = vrot.lane.b32.xlu0 %v85, 64
    %v441 = vpop.permute.xlu0 %440
    %442 = vrot.lane.b32.xlu0 %v86, 64
    %v443 = vpop.permute.xlu0 %442
    %444 = vrot.lane.b32.xlu0 %v87, 64
    %v445 = vpop.permute.xlu0 %444
    %446 = vrot.lane.b32.xlu0 %v88, 64
    %v447 = vpop.permute.xlu0 %446
    %448 = vrot.lane.b32.xlu0 %v89, 64
    %v449 = vpop.permute.xlu0 %448
    %450 = vrot.lane.b32.xlu0 %v90, 64
    %v451 = vpop.permute.xlu0 %450
    %452 = vrot.lane.b32.xlu0 %v91, 64
    %v453 = vpop.permute.xlu0 %452
    %454 = vrot.lane.b32.xlu0 %v92, 64
    %v455 = vpop.permute.xlu0 %454
    %456 = vrot.lane.b32.xlu0 %v93, 64
    %v457 = vpop.permute.xlu0 %456
    %458 = vrot.lane.b32.xlu0 %v94, 64
    %v459 = vpop.permute.xlu0 %458
    %v476 = vmul.f32 %v306, %v429
    %v477 = vmul.f32 %v309, %v431
    %v478 = vmul.f32 %v314, %v433
    %v479 = vmul.f32 %v317, %v435
    %v480 = vmul.f32 %v306, %v437
    %v481 = vmul.f32 %v309, %v439
    %v482 = vmul.f32 %v314, %v441
    %v483 = vmul.f32 %v317, %v443
    %v484 = vmul.f32 %v306, %v445
    %v485 = vmul.f32 %v309, %v447
    %v486 = vmul.f32 %v314, %v449
    %v487 = vmul.f32 %v317, %v451
    %v488 = vmul.f32 %v306, %v453
    %v489 = vmul.f32 %v309, %v455
    %v490 = vmul.f32 %v314, %v457
    %v491 = vmul.f32 %v317, %v459
    %v492 = vpack.c.bf16 %v477, %v476
    %v493 = vpack.c.bf16 %v479, %v478
    %v494 = vpack.c.bf16 %v481, %v480
    %v495 = vpack.c.bf16 %v483, %v482
    %v496 = vpack.c.bf16 %v485, %v484
    %v497 = vpack.c.bf16 %v487, %v486
    %v498 = vpack.c.bf16 %v489, %v488
    %v499 = vpack.c.bf16 %v491, %v490
    %v500 = vpack.c.bf16 %v309, %v306
    %v501 = vpack.c.bf16 %v317, %v314
    %510 = vrot.lane.b32.xlu0 %v420, 96
    %v511 = vpop.permute.xlu0 %510
    %512 = vrot.lane.b32.xlu0 %v421, 96
    %v513 = vpop.permute.xlu0 %512
    %514 = vrot.lane.b32.xlu0 %v422, 96
    %v515 = vpop.permute.xlu0 %514
    %516 = vrot.lane.b32.xlu0 %v423, 96
    %v517 = vpop.permute.xlu0 %516
    %518 = vrot.lane.b32.xlu0 %v424, 96
    %v519 = vpop.permute.xlu0 %518
    %520 = vrot.lane.b32.xlu0 %v425, 96
    %v521 = vpop.permute.xlu0 %520
    %522 = vrot.lane.b32.xlu0 %v426, 96
    %v523 = vpop.permute.xlu0 %522
    %524 = vrot.lane.b32.xlu0 %v427, 96
    %v525 = vpop.permute.xlu0 %524
    %v527 = vsel %vm105, %v500, 0
    %v530 = vsel %vm105, %v501, 0
    %v533 = vsel %vm105, %v511, 0
    %v536 = vsel %vm105, %v513, 0
    %v539 = vsel %vm105, %v515, 0
    %v542 = vsel %vm105, %v517, 0
    %v545 = vsel %vm105, %v519, 0
    %v548 = vsel %vm105, %v521, 0
    %v551 = vsel %vm105, %v523, 0
    %v554 = vsel %vm105, %v525, 0
    %556 = vmatprep.subr.bf16.mxu0 0
    %557 = vmatpush1.bf16.xpose.msra.mxu0 %v554
    %558 = vmatprep.subr.bf16.mxu0 0
    %559 = vmatpush1.bf16.xpose.msra.mxu0 %v551
    %560 = vmatprep.subr.bf16.mxu0 0
    %561 = vmatpush1.bf16.xpose.msra.mxu0 %v548
    %562 = vmatprep.subr.bf16.mxu0 0
    %563 = vmatpush1.bf16.xpose.msra.mxu0 %v545
    %564 = vmatprep.subr.bf16.mxu0 0
    %565 = vmatpush1.bf16.xpose.msra.mxu0 %v542
    %566 = vmatprep.subr.bf16.mxu0 0
    %567 = vmatpush1.bf16.xpose.msra.mxu0 %v539
    %568 = vmatprep.subr.bf16.mxu0 0
    %569 = vmatpush1.bf16.xpose.msra.mxu0 %v536
    %570 = vmatprep.subr.bf16.mxu0 0
    %571 = vmatpush1.bf16.xpose.msra.mxu0 %v533
    %572 = vmatprep.subr.bf16.mxu0 0
    %573 = vmatpush2.bf16.xpose.msra.mxu0 0
    %574 = vmatprep.subr.bf16.mxu0 0
    %575 = vmatpush2.bf16.xpose.msra.mxu0 0
    %576 = vmatprep.subr.bf16.mxu0 0
    %577 = vmatpush2.bf16.xpose.msra.mxu0 0
    %578 = vmatprep.subr.bf16.mxu0 0
    %579 = vmatpush2.bf16.xpose.msra.mxu0 0
    %580 = vmatprep.subr.bf16.mxu0 0
    %581 = vmatpush2.bf16.xpose.msra.mxu0 0
    %582 = vmatprep.subr.bf16.mxu0 0
    %583 = vmatpush2.bf16.xpose.msra.mxu0 0
    %584 = vmatprep.subr.bf16.mxu0 0
    %585 = vmatpush2.bf16.xpose.msra.mxu0 0
    %586 = vmatprep.subr.bf16.mxu0 0
    %587 = vmatpush2.bf16.xpose.msra.mxu0 0
    %588 = vmatprep.mubr.bf16.mxu0 0
    %589 = vmatmul.mubr.bf16.gmra.mxu0 %v527
    %v590 = vpop.f32.mrf.mxu0
    %v591 = vadd.f32 0.0, %v590
    %v592 = vpop.f32.mrf.mxu0
    %v593 = vpop.f32.mrf.mxu0
    %v594 = vadd.f32 0.0, %v593
    %v595 = vpop.f32.mrf.mxu0
    %596 = vmatprep.mubr.bf16.mxu0 0
    %597 = vmatmul.mubr.bf16.gmra.mxu0 %v530
    %v598 = vpop.f32.mrf.mxu0
    %v599 = vadd.f32 0.0, %v598
    %v600 = vpop.f32.mrf.mxu0
    %v601 = vpop.f32.mrf.mxu0
    %v602 = vadd.f32 0.0, %v601
    %v603 = vpop.f32.mrf.mxu0
    %604 = vdwg.mxu0
    %v605 = vmul.f32 %v591, %v336
    %v606 = vmul.f32 %v594, %v337
    %v607 = vmul.f32 %v599, %v338
    %v608 = vmul.f32 %v602, %v339
    %v609 = vpack.c.bf16 %v606, %v605
    %v610 = vpack.c.bf16 %v608, %v607
    %619 = vrot.lane.b32.xlu0 %v492, 64
    %v620 = vpop.permute.xlu0 %619
    %621 = vrot.lane.b32.xlu0 %v493, 64
    %v622 = vpop.permute.xlu0 %621
    %623 = vrot.lane.b32.xlu0 %v494, 64
    %v624 = vpop.permute.xlu0 %623
    %625 = vrot.lane.b32.xlu0 %v495, 64
    %v626 = vpop.permute.xlu0 %625
    %627 = vrot.lane.b32.xlu0 %v496, 64
    %v628 = vpop.permute.xlu0 %627
    %629 = vrot.lane.b32.xlu0 %v497, 64
    %v630 = vpop.permute.xlu0 %629
    %631 = vrot.lane.b32.xlu0 %v498, 64
    %v632 = vpop.permute.xlu0 %631
    %633 = vrot.lane.b32.xlu0 %v499, 64
    %v634 = vpop.permute.xlu0 %633
    %643 = vmatprep.subr.bf16.mxu0 0
    %644 = vmatpush1.bf16.msra.mxu0 %v634
    %645 = vmatprep.subr.bf16.mxu0 0
    %646 = vmatpush1.bf16.msra.mxu0 %v632
    %647 = vmatprep.subr.bf16.mxu0 0
    %648 = vmatpush1.bf16.msra.mxu0 %v630
    %649 = vmatprep.subr.bf16.mxu0 0
    %650 = vmatpush1.bf16.msra.mxu0 %v628
    %651 = vmatprep.subr.bf16.mxu0 0
    %652 = vmatpush1.bf16.msra.mxu0 %v626
    %653 = vmatprep.subr.bf16.mxu0 0
    %654 = vmatpush1.bf16.msra.mxu0 %v624
    %655 = vmatprep.subr.bf16.mxu0 0
    %656 = vmatpush1.bf16.msra.mxu0 %v622
    %657 = vmatprep.subr.bf16.mxu0 0
    %658 = vmatpush1.bf16.msra.mxu0 %v620
    %659 = vmatprep.subr.bf16.mxu0 0
    %660 = vmatpush2.bf16.msra.mxu0 0
    %661 = vmatprep.subr.bf16.mxu0 0
    %662 = vmatpush2.bf16.msra.mxu0 0
    %663 = vmatprep.subr.bf16.mxu0 0
    %664 = vmatpush2.bf16.msra.mxu0 0
    %665 = vmatprep.subr.bf16.mxu0 0
    %666 = vmatpush2.bf16.msra.mxu0 0
    %667 = vmatprep.subr.bf16.mxu0 0
    %668 = vmatpush2.bf16.msra.mxu0 0
    %669 = vmatprep.subr.bf16.mxu0 0
    %670 = vmatpush2.bf16.msra.mxu0 0
    %671 = vmatprep.subr.bf16.mxu0 0
    %672 = vmatpush2.bf16.msra.mxu0 0
    %673 = vmatprep.subr.bf16.mxu0 0
    %674 = vmatpush2.bf16.msra.mxu0 0
    %675 = vmatprep.mubr.bf16.mxu0 0
    %676 = vmatmul.mubr.bf16.gmra.mxu0 %v609
    %v677 = vpop.f32.mrf.mxu0
    %v678 = vadd.f32 0.0, %v677
    %v679 = vpop.f32.mrf.mxu0
    %v680 = vpop.f32.mrf.mxu0
    %v681 = vadd.f32 0.0, %v680
    %v682 = vpop.f32.mrf.mxu0
    %683 = vmatprep.mubr.bf16.mxu0 0
    %684 = vmatmul.mubr.bf16.gmra.mxu0 %v610
    %v685 = vpop.f32.mrf.mxu0
    %v686 = vadd.f32 0.0, %v685
    %v687 = vpop.f32.mrf.mxu0
    %v688 = vpop.f32.mrf.mxu0
    %v689 = vadd.f32 0.0, %v688
    %v690 = vpop.f32.mrf.mxu0
    %691 = vdwg.mxu0
    %v692 = vsel %vm105, %v678, 0.0
    %693 = vadd.xlane.f32.xlu0 %v692
    %v694 = vpop.xlane.xlu0 %693
    %v695 = vsel %vm105, %v681, 0.0
    %696 = vadd.xlane.f32.xlu0 %v695
    %v697 = vpop.xlane.xlu0 %696
    %v698 = vsel %vm105, %v686, 0.0
    %699 = vadd.xlane.f32.xlu0 %v698
    %v700 = vpop.xlane.xlu0 %699
    %v701 = vsel %vm105, %v689, 0.0
    %702 = vadd.xlane.f32.xlu0 %v701
    %v703 = vpop.xlane.xlu0 %702
    %v704 = vmul.f32 %v694, %v130
    %v705 = vmul.f32 %v697, %v130
    %v706 = vmul.f32 %v700, %v130
    %v707 = vmul.f32 %v703, %v130
    %v708 = vrot.slane %v704, 4
    %v709 = vadd.f32 %v704, %v708
    %v710 = vrot.slane %v709, 2
    %v711 = vadd.f32 %v709, %v710
    %v712 = vrot.slane %v711, 1
    %v713 = vadd.f32 %v711, %v712
    %v714 = vrot.slane %v705, 4
    %v715 = vadd.f32 %v705, %v714
    %v716 = vrot.slane %v715, 2
    %v717 = vadd.f32 %v715, %v716
    %v718 = vrot.slane %v717, 1
    %v719 = vadd.f32 %v717, %v718
    %v720 = vrot.slane %v706, 4
    %v721 = vadd.f32 %v706, %v720
    %v722 = vrot.slane %v721, 2
    %v723 = vadd.f32 %v721, %v722
    %v724 = vrot.slane %v723, 1
    %v725 = vadd.f32 %v723, %v724
    %v726 = vrot.slane %v707, 4
    %v727 = vadd.f32 %v707, %v726
    %v728 = vrot.slane %v727, 2
    %v729 = vadd.f32 %v727, %v728
    %v730 = vrot.slane %v729, 1
    %v731 = vadd.f32 %v729, %v730
    %v732 = vrcp.pop 8.0
    %v733 = vmul.f32 %v713, %v732
    %v734 = vmul.f32 %v719, %v732
    %v735 = vmul.f32 %v725, %v732
    %v736 = vmul.f32 %v731, %v732
    %v737 = vsub.f32 %v678, %v733
    %v738 = vsub.f32 %v681, %v734
    %v739 = vsub.f32 %v686, %v735
    %v740 = vsub.f32 %v689, %v736
    %v741 = vmul.f32 %v737, %v737
    %v742 = vmul.f32 %v738, %v738
    %v743 = vmul.f32 %v739, %v739
    %v744 = vmul.f32 %v740, %v740
    %v745 = vsel %vm105, %v741, 0.0
    %746 = vadd.xlane.f32.xlu0 %v745
    %v747 = vpop.xlane.xlu0 %746
    %v748 = vsel %vm105, %v742, 0.0
    %749 = vadd.xlane.f32.xlu0 %v748
    %v750 = vpop.xlane.xlu0 %749
    %v751 = vsel %vm105, %v743, 0.0
    %752 = vadd.xlane.f32.xlu0 %v751
    %v753 = vpop.xlane.xlu0 %752
    %v754 = vsel %vm105, %v744, 0.0
    %755 = vadd.xlane.f32.xlu0 %v754
    %v756 = vpop.xlane.xlu0 %755
    %v757 = vmul.f32 %v747, %v130
    %v758 = vmul.f32 %v750, %v130
    %v759 = vmul.f32 %v753, %v130
    %v760 = vmul.f32 %v756, %v130
    %v761 = vrot.slane %v757, 4
    %v762 = vadd.f32 %v757, %v761
    %v763 = vrot.slane %v762, 2
    %v764 = vadd.f32 %v762, %v763
    %v765 = vrot.slane %v764, 1
    %v766 = vadd.f32 %v764, %v765
    %v767 = vrot.slane %v758, 4
    %v768 = vadd.f32 %v758, %v767
    %v769 = vrot.slane %v768, 2
    %v770 = vadd.f32 %v768, %v769
    %v771 = vrot.slane %v770, 1
    %v772 = vadd.f32 %v770, %v771
    %v773 = vrot.slane %v759, 4
    %v774 = vadd.f32 %v759, %v773
    %v775 = vrot.slane %v774, 2
    %v776 = vadd.f32 %v774, %v775
    %v777 = vrot.slane %v776, 1
    %v778 = vadd.f32 %v776, %v777
    %v779 = vrot.slane %v760, 4
    %v780 = vadd.f32 %v760, %v779
    %v781 = vrot.slane %v780, 2
    %v782 = vadd.f32 %v780, %v781
    %v783 = vrot.slane %v782, 1
    %v784 = vadd.f32 %v782, %v783
    %v785 = vmul.f32 %v766, %v732
    %v786 = vmul.f32 %v772, %v732
    %v787 = vmul.f32 %v778, %v732
    %v788 = vmul.f32 %v784, %v732
    %v789 = vadd.f32 %v785, 1e-05
    %v790 = vadd.f32 %v786, 1e-05
    %v791 = vadd.f32 %v787, 1e-05
    %v792 = vadd.f32 %v788, 1e-05
    %v793 = vrsqrt.pop %v789
    %v794 = vrsqrt.pop %v790
    %v795 = vrsqrt.pop %v791
    %v796 = vrsqrt.pop %v792
    %v797 = vmul.f32 %v737, %v793
    %v798 = vmul.f32 %v738, %v794
    %v799 = vmul.f32 %v739, %v795
    %v800 = vmul.f32 %v740, %v796
    %v801 = vld [vmem:[%s6] sm:$0xff]
    %v802 = vld [vmem:[%s6 + $0x8] sm:$0xff]
    %v803 = vld [vmem:[%s6 + $0x10] sm:$0xff]
    %v804 = vld [vmem:[%s6 + $0x18] sm:$0xff]
    %806 = vset.pattern.permute.xlu0 0
    %807 = vperm.xlu0 %806, %v801
    %v808 = vpop.permute.xlu0 %807
    %811 = vset.pattern.permute.xlu0 0
    %812 = vperm.xlu0 %811, %v802
    %v813 = vpop.permute.xlu0 %812
    %816 = vset.pattern.permute.xlu0 0
    %817 = vperm.xlu0 %816, %v803
    %v818 = vpop.permute.xlu0 %817
    %821 = vset.pattern.permute.xlu0 0
    %822 = vperm.xlu0 %821, %v804
    %v823 = vpop.permute.xlu0 %822
    %v825 = vmul.f32 %v797, %v808
    %v826 = vmul.f32 %v798, %v813
    %v827 = vmul.f32 %v799, %v818
    %v828 = vmul.f32 %v800, %v823
    %v829 = vld [vmem:[%s7] sm:$0xff]
    %v830 = vld [vmem:[%s7 + $0x8] sm:$0xff]
    %v831 = vld [vmem:[%s7 + $0x10] sm:$0xff]
    %v832 = vld [vmem:[%s7 + $0x18] sm:$0xff]
    %834 = vset.pattern.permute.xlu0 0
    %835 = vperm.xlu0 %834, %v829
    %v836 = vpop.permute.xlu0 %835
    %839 = vset.pattern.permute.xlu0 0
    %840 = vperm.xlu0 %839, %v830
    %v841 = vpop.permute.xlu0 %840
    %844 = vset.pattern.permute.xlu0 0
    %845 = vperm.xlu0 %844, %v831
    %v846 = vpop.permute.xlu0 %845
    %849 = vset.pattern.permute.xlu0 0
    %850 = vperm.xlu0 %849, %v832
    %v851 = vpop.permute.xlu0 %850
    %v853 = vadd.f32 %v825, %v836
    %v854 = vadd.f32 %v826, %v841
    %v855 = vadd.f32 %v827, %v846
    %v856 = vadd.f32 %v828, %v851
    %v857 = vmul.f32 %v322, %v357
    %v858 = vmul.f32 %v325, %v359
    %v859 = vmul.f32 %v330, %v361
    %v860 = vmul.f32 %v333, %v363
    %v861 = vmul.f32 %v322, %v365
    %v862 = vmul.f32 %v325, %v367
    %v863 = vmul.f32 %v330, %v369
    %v864 = vmul.f32 %v333, %v371
    %v865 = vmul.f32 %v322, %v373
    %v866 = vmul.f32 %v325, %v375
    %v867 = vmul.f32 %v330, %v377
    %v868 = vmul.f32 %v333, %v379
    %v869 = vmul.f32 %v322, %v381
    %v870 = vmul.f32 %v325, %v383
    %v871 = vmul.f32 %v330, %v385
    %v872 = vmul.f32 %v333, %v387
    %v873 = vpack.c.bf16 %v858, %v857
    %v874 = vpack.c.bf16 %v860, %v859
    %v875 = vpack.c.bf16 %v862, %v861
    %v876 = vpack.c.bf16 %v864, %v863
    %v877 = vpack.c.bf16 %v866, %v865
    %v878 = vpack.c.bf16 %v868, %v867
    %v879 = vpack.c.bf16 %v870, %v869
    %v880 = vpack.c.bf16 %v872, %v871
    %v881 = vmul.f32 %v322, %v429
    %v882 = vmul.f32 %v325, %v431
    %v883 = vmul.f32 %v330, %v433
    %v884 = vmul.f32 %v333, %v435
    %v885 = vmul.f32 %v322, %v437
    %v886 = vmul.f32 %v325, %v439
    %v887 = vmul.f32 %v330, %v441
    %v888 = vmul.f32 %v333, %v443
    %v889 = vmul.f32 %v322, %v445
    %v890 = vmul.f32 %v325, %v447
    %v891 = vmul.f32 %v330, %v449
    %v892 = vmul.f32 %v333, %v451
    %v893 = vmul.f32 %v322, %v453
    %v894 = vmul.f32 %v325, %v455
    %v895 = vmul.f32 %v330, %v457
    %v896 = vmul.f32 %v333, %v459
    %v897 = vpack.c.bf16 %v882, %v881
    %v898 = vpack.c.bf16 %v884, %v883
    %v899 = vpack.c.bf16 %v886, %v885
    %v900 = vpack.c.bf16 %v888, %v887
    %v901 = vpack.c.bf16 %v890, %v889
    %v902 = vpack.c.bf16 %v892, %v891
    %v903 = vpack.c.bf16 %v894, %v893
    %v904 = vpack.c.bf16 %v896, %v895
    %v905 = vpack.c.bf16 %v325, %v322
    %v906 = vpack.c.bf16 %v333, %v330
    %915 = vrot.lane.b32.xlu0 %v873, 96
    %v916 = vpop.permute.xlu0 %915
    %917 = vrot.lane.b32.xlu0 %v874, 96
    %v918 = vpop.permute.xlu0 %917
    %919 = vrot.lane.b32.xlu0 %v875, 96
    %v920 = vpop.permute.xlu0 %919
    %921 = vrot.lane.b32.xlu0 %v876, 96
    %v922 = vpop.permute.xlu0 %921
    %923 = vrot.lane.b32.xlu0 %v877, 96
    %v924 = vpop.permute.xlu0 %923
    %925 = vrot.lane.b32.xlu0 %v878, 96
    %v926 = vpop.permute.xlu0 %925
    %927 = vrot.lane.b32.xlu0 %v879, 96
    %v928 = vpop.permute.xlu0 %927
    %929 = vrot.lane.b32.xlu0 %v880, 96
    %v930 = vpop.permute.xlu0 %929
    %v932 = vsel %vm105, %v905, 0
    %v935 = vsel %vm105, %v906, 0
    %v938 = vsel %vm105, %v916, 0
    %v941 = vsel %vm105, %v918, 0
    %v944 = vsel %vm105, %v920, 0
    %v947 = vsel %vm105, %v922, 0
    %v950 = vsel %vm105, %v924, 0
    %v953 = vsel %vm105, %v926, 0
    %v956 = vsel %vm105, %v928, 0
    %v959 = vsel %vm105, %v930, 0
    %961 = vmatprep.subr.bf16.mxu0 0
    %962 = vmatpush1.bf16.xpose.msra.mxu0 %v959
    %963 = vmatprep.subr.bf16.mxu0 0
    %964 = vmatpush1.bf16.xpose.msra.mxu0 %v956
    %965 = vmatprep.subr.bf16.mxu0 0
    %966 = vmatpush1.bf16.xpose.msra.mxu0 %v953
    %967 = vmatprep.subr.bf16.mxu0 0
    %968 = vmatpush1.bf16.xpose.msra.mxu0 %v950
    %969 = vmatprep.subr.bf16.mxu0 0
    %970 = vmatpush1.bf16.xpose.msra.mxu0 %v947
    %971 = vmatprep.subr.bf16.mxu0 0
    %972 = vmatpush1.bf16.xpose.msra.mxu0 %v944
    %973 = vmatprep.subr.bf16.mxu0 0
    %974 = vmatpush1.bf16.xpose.msra.mxu0 %v941
    %975 = vmatprep.subr.bf16.mxu0 0
    %976 = vmatpush1.bf16.xpose.msra.mxu0 %v938
    %977 = vmatprep.subr.bf16.mxu0 0
    %978 = vmatpush2.bf16.xpose.msra.mxu0 0
    %979 = vmatprep.subr.bf16.mxu0 0
    %980 = vmatpush2.bf16.xpose.msra.mxu0 0
    %981 = vmatprep.subr.bf16.mxu0 0
    %982 = vmatpush2.bf16.xpose.msra.mxu0 0
    %983 = vmatprep.subr.bf16.mxu0 0
    %984 = vmatpush2.bf16.xpose.msra.mxu0 0
    %985 = vmatprep.subr.bf16.mxu0 0
    %986 = vmatpush2.bf16.xpose.msra.mxu0 0
    %987 = vmatprep.subr.bf16.mxu0 0
    %988 = vmatpush2.bf16.xpose.msra.mxu0 0
    %989 = vmatprep.subr.bf16.mxu0 0
    %990 = vmatpush2.bf16.xpose.msra.mxu0 0
    %991 = vmatprep.subr.bf16.mxu0 0
    %992 = vmatpush2.bf16.xpose.msra.mxu0 0
    %993 = vmatprep.mubr.bf16.mxu0 0
    %994 = vmatmul.mubr.bf16.gmra.mxu0 %v932
    %v995 = vpop.f32.mrf.mxu0
    %v996 = vadd.f32 0.0, %v995
    %v997 = vpop.f32.mrf.mxu0
    %v998 = vpop.f32.mrf.mxu0
    %v999 = vadd.f32 0.0, %v998
    %v1000 = vpop.f32.mrf.mxu0
    %1001 = vmatprep.mubr.bf16.mxu0 0
    %1002 = vmatmul.mubr.bf16.gmra.mxu0 %v935
    %v1003 = vpop.f32.mrf.mxu0
    %v1004 = vadd.f32 0.0, %v1003
    %v1005 = vpop.f32.mrf.mxu0
    %v1006 = vpop.f32.mrf.mxu0
    %v1007 = vadd.f32 0.0, %v1006
    %v1008 = vpop.f32.mrf.mxu0
    %1009 = vdwg.mxu0
    %v1010 = vmul.f32 %v996, %v336
    %v1011 = vmul.f32 %v999, %v337
    %v1012 = vmul.f32 %v1004, %v338
    %v1013 = vmul.f32 %v1007, %v339
    %v1014 = vpack.c.bf16 %v1011, %v1010
    %v1015 = vpack.c.bf16 %v1013, %v1012
    %1024 = vrot.lane.b32.xlu0 %v897, 64
    %v1025 = vpop.permute.xlu0 %1024
    %1026 = vrot.lane.b32.xlu0 %v898, 64
    %v1027 = vpop.permute.xlu0 %1026
    %1028 = vrot.lane.b32.xlu0 %v899, 64
    %v1029 = vpop.permute.xlu0 %1028
    %1030 = vrot.lane.b32.xlu0 %v900, 64
    %v1031 = vpop.permute.xlu0 %1030
    %1032 = vrot.lane.b32.xlu0 %v901, 64
    %v1033 = vpop.permute.xlu0 %1032
    %1034 = vrot.lane.b32.xlu0 %v902, 64
    %v1035 = vpop.permute.xlu0 %1034
    %1036 = vrot.lane.b32.xlu0 %v903, 64
    %v1037 = vpop.permute.xlu0 %1036
    %1038 = vrot.lane.b32.xlu0 %v904, 64
    %v1039 = vpop.permute.xlu0 %1038
    %1048 = vmatprep.subr.bf16.mxu0 0
    %1049 = vmatpush1.bf16.msra.mxu0 %v1039
    %1050 = vmatprep.subr.bf16.mxu0 0
    %1051 = vmatpush1.bf16.msra.mxu0 %v1037
    %1052 = vmatprep.subr.bf16.mxu0 0
    %1053 = vmatpush1.bf16.msra.mxu0 %v1035
    %1054 = vmatprep.subr.bf16.mxu0 0
    %1055 = vmatpush1.bf16.msra.mxu0 %v1033
    %1056 = vmatprep.subr.bf16.mxu0 0
    %1057 = vmatpush1.bf16.msra.mxu0 %v1031
    %1058 = vmatprep.subr.bf16.mxu0 0
    %1059 = vmatpush1.bf16.msra.mxu0 %v1029
    %1060 = vmatprep.subr.bf16.mxu0 0
    %1061 = vmatpush1.bf16.msra.mxu0 %v1027
    %1062 = vmatprep.subr.bf16.mxu0 0
    %1063 = vmatpush1.bf16.msra.mxu0 %v1025
    %1064 = vmatprep.subr.bf16.mxu0 0
    %1065 = vmatpush2.bf16.msra.mxu0 0
    %1066 = vmatprep.subr.bf16.mxu0 0
    %1067 = vmatpush2.bf16.msra.mxu0 0
    %1068 = vmatprep.subr.bf16.mxu0 0
    %1069 = vmatpush2.bf16.msra.mxu0 0
    %1070 = vmatprep.subr.bf16.mxu0 0
    %1071 = vmatpush2.bf16.msra.mxu0 0
    %1072 = vmatprep.subr.bf16.mxu0 0
    %1073 = vmatpush2.bf16.msra.mxu0 0
    %1074 = vmatprep.subr.bf16.mxu0 0
    %1075 = vmatpush2.bf16.msra.mxu0 0
    %1076 = vmatprep.subr.bf16.mxu0 0
    %1077 = vmatpush2.bf16.msra.mxu0 0
    %1078 = vmatprep.subr.bf16.mxu0 0
    %1079 = vmatpush2.bf16.msra.mxu0 0
    %1080 = vmatprep.mubr.bf16.mxu0 0
    %1081 = vmatmul.mubr.bf16.gmra.mxu0 %v1014
    %v1082 = vpop.f32.mrf.mxu0
    %v1083 = vadd.f32 0.0, %v1082
    %v1084 = vpop.f32.mrf.mxu0
    %v1085 = vpop.f32.mrf.mxu0
    %v1086 = vadd.f32 0.0, %v1085
    %v1087 = vpop.f32.mrf.mxu0
    %1088 = vmatprep.mubr.bf16.mxu0 0
    %1089 = vmatmul.mubr.bf16.gmra.mxu0 %v1015
    %v1090 = vpop.f32.mrf.mxu0
    %v1091 = vadd.f32 0.0, %v1090
    %v1092 = vpop.f32.mrf.mxu0
    %v1093 = vpop.f32.mrf.mxu0
    %v1094 = vadd.f32 0.0, %v1093
    %v1095 = vpop.f32.mrf.mxu0
    %1096 = vdwg.mxu0
    %v1097 = vsel %vm105, %v1083, 0.0
    %1098 = vadd.xlane.f32.xlu0 %v1097
    %v1099 = vpop.xlane.xlu0 %1098
    %v1100 = vsel %vm105, %v1086, 0.0
    %1101 = vadd.xlane.f32.xlu0 %v1100
    %v1102 = vpop.xlane.xlu0 %1101
    %v1103 = vsel %vm105, %v1091, 0.0
    %1104 = vadd.xlane.f32.xlu0 %v1103
    %v1105 = vpop.xlane.xlu0 %1104
    %v1106 = vsel %vm105, %v1094, 0.0
    %1107 = vadd.xlane.f32.xlu0 %v1106
    %v1108 = vpop.xlane.xlu0 %1107
    %v1109 = vmul.f32 %v1099, %v130
    %v1110 = vmul.f32 %v1102, %v130
    %v1111 = vmul.f32 %v1105, %v130
    %v1112 = vmul.f32 %v1108, %v130
    %v1113 = vrot.slane %v1109, 4
    %v1114 = vadd.f32 %v1109, %v1113
    %v1115 = vrot.slane %v1114, 2
    %v1116 = vadd.f32 %v1114, %v1115
    %v1117 = vrot.slane %v1116, 1
    %v1118 = vadd.f32 %v1116, %v1117
    %v1119 = vrot.slane %v1110, 4
    %v1120 = vadd.f32 %v1110, %v1119
    %v1121 = vrot.slane %v1120, 2
    %v1122 = vadd.f32 %v1120, %v1121
    %v1123 = vrot.slane %v1122, 1
    %v1124 = vadd.f32 %v1122, %v1123
    %v1125 = vrot.slane %v1111, 4
    %v1126 = vadd.f32 %v1111, %v1125
    %v1127 = vrot.slane %v1126, 2
    %v1128 = vadd.f32 %v1126, %v1127
    %v1129 = vrot.slane %v1128, 1
    %v1130 = vadd.f32 %v1128, %v1129
    %v1131 = vrot.slane %v1112, 4
    %v1132 = vadd.f32 %v1112, %v1131
    %v1133 = vrot.slane %v1132, 2
    %v1134 = vadd.f32 %v1132, %v1133
    %v1135 = vrot.slane %v1134, 1
    %v1136 = vadd.f32 %v1134, %v1135
    %v1137 = vmul.f32 %v1118, %v732
    %v1138 = vmul.f32 %v1124, %v732
    %v1139 = vmul.f32 %v1130, %v732
    %v1140 = vmul.f32 %v1136, %v732
    %v1141 = vsub.f32 %v1083, %v1137
    %v1142 = vsub.f32 %v1086, %v1138
    %v1143 = vsub.f32 %v1091, %v1139
    %v1144 = vsub.f32 %v1094, %v1140
    %v1145 = vmul.f32 %v1141, %v1141
    %v1146 = vmul.f32 %v1142, %v1142
    %v1147 = vmul.f32 %v1143, %v1143
    %v1148 = vmul.f32 %v1144, %v1144
    %v1149 = vsel %vm105, %v1145, 0.0
    %1150 = vadd.xlane.f32.xlu0 %v1149
    %v1151 = vpop.xlane.xlu0 %1150
    %v1152 = vsel %vm105, %v1146, 0.0
    %1153 = vadd.xlane.f32.xlu0 %v1152
    %v1154 = vpop.xlane.xlu0 %1153
    %v1155 = vsel %vm105, %v1147, 0.0
    %1156 = vadd.xlane.f32.xlu0 %v1155
    %v1157 = vpop.xlane.xlu0 %1156
    %v1158 = vsel %vm105, %v1148, 0.0
    %1159 = vadd.xlane.f32.xlu0 %v1158
    %v1160 = vpop.xlane.xlu0 %1159
    %v1161 = vmul.f32 %v1151, %v130
    %v1162 = vmul.f32 %v1154, %v130
    %v1163 = vmul.f32 %v1157, %v130
    %v1164 = vmul.f32 %v1160, %v130
    %v1165 = vrot.slane %v1161, 4
    %v1166 = vadd.f32 %v1161, %v1165
    %v1167 = vrot.slane %v1166, 2
    %v1168 = vadd.f32 %v1166, %v1167
    %v1169 = vrot.slane %v1168, 1
    %v1170 = vadd.f32 %v1168, %v1169
    %v1171 = vrot.slane %v1162, 4
    %v1172 = vadd.f32 %v1162, %v1171
    %v1173 = vrot.slane %v1172, 2
    %v1174 = vadd.f32 %v1172, %v1173
    %v1175 = vrot.slane %v1174, 1
    %v1176 = vadd.f32 %v1174, %v1175
    %v1177 = vrot.slane %v1163, 4
    %v1178 = vadd.f32 %v1163, %v1177
    %v1179 = vrot.slane %v1178, 2
    %v1180 = vadd.f32 %v1178, %v1179
    %v1181 = vrot.slane %v1180, 1
    %v1182 = vadd.f32 %v1180, %v1181
    %v1183 = vrot.slane %v1164, 4
    %v1184 = vadd.f32 %v1164, %v1183
    %v1185 = vrot.slane %v1184, 2
    %v1186 = vadd.f32 %v1184, %v1185
    %v1187 = vrot.slane %v1186, 1
    %v1188 = vadd.f32 %v1186, %v1187
    %v1189 = vmul.f32 %v1170, %v732
    %v1190 = vmul.f32 %v1176, %v732
    %v1191 = vmul.f32 %v1182, %v732
    %v1192 = vmul.f32 %v1188, %v732
    %v1193 = vadd.f32 %v1189, 1e-05
    %v1194 = vadd.f32 %v1190, 1e-05
    %v1195 = vadd.f32 %v1191, 1e-05
    %v1196 = vadd.f32 %v1192, 1e-05
    %v1197 = vrsqrt.pop %v1193
    %v1198 = vrsqrt.pop %v1194
    %v1199 = vrsqrt.pop %v1195
    %v1200 = vrsqrt.pop %v1196
    %v1201 = vmul.f32 %v1141, %v1197
    %v1202 = vmul.f32 %v1142, %v1198
    %v1203 = vmul.f32 %v1143, %v1199
    %v1204 = vmul.f32 %v1144, %v1200
    %v1205 = vmul.f32 %v1201, %v808
    %v1206 = vmul.f32 %v1202, %v813
    %v1207 = vmul.f32 %v1203, %v818
    %v1208 = vmul.f32 %v1204, %v823
    %v1209 = vadd.f32 %v1205, %v836
    %v1210 = vadd.f32 %v1206, %v841
    %v1211 = vadd.f32 %v1207, %v846
    %v1212 = vadd.f32 %v1208, %v851
    %v1213 = vadd.f32 %v95, %v853
    %v1214 = vadd.f32 %v96, %v854
    %v1215 = vadd.f32 %v97, %v855
    %v1216 = vadd.f32 %v98, %v856
    %v1217 = vadd.f32 %v99, %v1209
    %v1218 = vadd.f32 %v100, %v1210
    %v1219 = vadd.f32 %v101, %v1211
    %v1220 = vadd.f32 %v102, %v1212
    %v1221 = vsel %vm105, %v1213, 0.0
    %1222 = vadd.xlane.f32.xlu0 %v1221
    %v1223 = vpop.xlane.xlu0 %1222
    %v1224 = vsel %vm105, %v1214, 0.0
    %1225 = vadd.xlane.f32.xlu0 %v1224
    %v1226 = vpop.xlane.xlu0 %1225
    %v1227 = vsel %vm105, %v1215, 0.0
    %1228 = vadd.xlane.f32.xlu0 %v1227
    %v1229 = vpop.xlane.xlu0 %1228
    %v1230 = vsel %vm105, %v1216, 0.0
    %1231 = vadd.xlane.f32.xlu0 %v1230
    %v1232 = vpop.xlane.xlu0 %1231
    %v1233 = vsel %vm105, %v1217, 0.0
    %1234 = vadd.xlane.f32.xlu0 %v1233
    %v1235 = vpop.xlane.xlu0 %1234
    %v1236 = vsel %vm105, %v1218, 0.0
    %1237 = vadd.xlane.f32.xlu0 %v1236
    %v1238 = vpop.xlane.xlu0 %1237
    %v1239 = vsel %vm105, %v1219, 0.0
    %1240 = vadd.xlane.f32.xlu0 %v1239
    %v1241 = vpop.xlane.xlu0 %1240
    %v1242 = vsel %vm105, %v1220, 0.0
    %1243 = vadd.xlane.f32.xlu0 %v1242
    %v1244 = vpop.xlane.xlu0 %1243
    %v1245 = vmul.f32 %v1223, %v130
    %v1246 = vmul.f32 %v1226, %v130
    %v1247 = vmul.f32 %v1229, %v130
    %v1248 = vmul.f32 %v1232, %v130
    %v1249 = vmul.f32 %v1235, %v130
    %v1250 = vmul.f32 %v1238, %v130
    %v1251 = vmul.f32 %v1241, %v130
    %v1252 = vmul.f32 %v1244, %v130
    %v1253 = vsub.f32 %v1213, %v1245
    %v1254 = vsub.f32 %v1214, %v1246
    %v1255 = vsub.f32 %v1215, %v1247
    %v1256 = vsub.f32 %v1216, %v1248
    %v1257 = vsub.f32 %v1217, %v1249
    %v1258 = vsub.f32 %v1218, %v1250
    %v1259 = vsub.f32 %v1219, %v1251
    %v1260 = vsub.f32 %v1220, %v1252
    %v1261 = vmul.f32 %v1253, %v1253
    %v1262 = vmul.f32 %v1254, %v1254
    %v1263 = vmul.f32 %v1255, %v1255
    %v1264 = vmul.f32 %v1256, %v1256
    %v1265 = vmul.f32 %v1257, %v1257
    %v1266 = vmul.f32 %v1258, %v1258
    %v1267 = vmul.f32 %v1259, %v1259
    %v1268 = vmul.f32 %v1260, %v1260
    %v1269 = vsel %vm105, %v1261, 0.0
    %1270 = vadd.xlane.f32.xlu0 %v1269
    %v1271 = vpop.xlane.xlu0 %1270
    %v1272 = vsel %vm105, %v1262, 0.0
    %1273 = vadd.xlane.f32.xlu0 %v1272
    %v1274 = vpop.xlane.xlu0 %1273
    %v1275 = vsel %vm105, %v1263, 0.0
    %1276 = vadd.xlane.f32.xlu0 %v1275
    %v1277 = vpop.xlane.xlu0 %1276
    %v1278 = vsel %vm105, %v1264, 0.0
    %1279 = vadd.xlane.f32.xlu0 %v1278
    %v1280 = vpop.xlane.xlu0 %1279
    %v1281 = vsel %vm105, %v1265, 0.0
    %1282 = vadd.xlane.f32.xlu0 %v1281
    %v1283 = vpop.xlane.xlu0 %1282
    %v1284 = vsel %vm105, %v1266, 0.0
    %1285 = vadd.xlane.f32.xlu0 %v1284
    %v1286 = vpop.xlane.xlu0 %1285
    %v1287 = vsel %vm105, %v1267, 0.0
    %1288 = vadd.xlane.f32.xlu0 %v1287
    %v1289 = vpop.xlane.xlu0 %1288
    %v1290 = vsel %vm105, %v1268, 0.0
    %1291 = vadd.xlane.f32.xlu0 %v1290
    %v1292 = vpop.xlane.xlu0 %1291
    %v1293 = vmul.f32 %v1271, %v130
    %v1294 = vmul.f32 %v1274, %v130
    %v1295 = vmul.f32 %v1277, %v130
    %v1296 = vmul.f32 %v1280, %v130
    %v1297 = vmul.f32 %v1283, %v130
    %v1298 = vmul.f32 %v1286, %v130
    %v1299 = vmul.f32 %v1289, %v130
    %v1300 = vmul.f32 %v1292, %v130
    %v1301 = vadd.f32 %v1293, 1e-05
    %v1302 = vadd.f32 %v1294, 1e-05
    %v1303 = vadd.f32 %v1295, 1e-05
    %v1304 = vadd.f32 %v1296, 1e-05
    %v1305 = vadd.f32 %v1297, 1e-05
    %v1306 = vadd.f32 %v1298, 1e-05
    %v1307 = vadd.f32 %v1299, 1e-05
    %v1308 = vadd.f32 %v1300, 1e-05
    %v1309 = vrsqrt.pop %v1301
    %v1310 = vrsqrt.pop %v1302
    %v1311 = vrsqrt.pop %v1303
    %v1312 = vrsqrt.pop %v1304
    %v1313 = vrsqrt.pop %v1305
    %v1314 = vrsqrt.pop %v1306
    %v1315 = vrsqrt.pop %v1307
    %v1316 = vrsqrt.pop %v1308
    %v1317 = vmul.f32 %v1253, %v1309
    %v1318 = vmul.f32 %v1254, %v1310
    %v1319 = vmul.f32 %v1255, %v1311
    %v1320 = vmul.f32 %v1256, %v1312
    %v1321 = vmul.f32 %v1257, %v1313
    %v1322 = vmul.f32 %v1258, %v1314
    %v1323 = vmul.f32 %v1259, %v1315
    %v1324 = vmul.f32 %v1260, %v1316
    %v1325 = vmul.f32 %v1317, %v215
    %v1326 = vmul.f32 %v1318, %v215
    %v1327 = vmul.f32 %v1319, %v215
    %v1328 = vmul.f32 %v1320, %v215
    %v1329 = vmul.f32 %v1321, %v215
    %v1330 = vmul.f32 %v1322, %v215
    %v1331 = vmul.f32 %v1323, %v215
    %v1332 = vmul.f32 %v1324, %v215
    %v1333 = vadd.f32 %v1325, %v229
    %v1334 = vadd.f32 %v1326, %v229
    %v1335 = vadd.f32 %v1327, %v229
    %v1336 = vadd.f32 %v1328, %v229
    %v1337 = vadd.f32 %v1329, %v229
    %v1338 = vadd.f32 %v1330, %v229
    %v1339 = vadd.f32 %v1331, %v229
    %v1340 = vadd.f32 %v1332, %v229
    %v1341 = vpack.c.bf16 %v1334, %v1333
    %v1342 = vpack.c.bf16 %v1336, %v1335
    %v1343 = vpack.c.bf16 %v1338, %v1337
    %v1344 = vpack.c.bf16 %v1340, %v1339
    %v1345 = vld [vmem:[%s8] sm:$0xf]
    %v1346 = vld [vmem:[%s8 + $0x4] sm:$0xf]
    %v1347 = vld [vmem:[%s8 + $0x8] sm:$0xf]
    %v1348 = vld [vmem:[%s8 + $0xc] sm:$0xf]
    %v1349 = vld [vmem:[%s9] sm:$0x1]
    %v1351 = vlaneseq
    %v1352 = vshrl.u32 %v1351, 7
    %v1353 = vsub.s32 0, %v1352
    %v1354 = vrot.slane %v1349, %v1353
    %v1360 = vunpack.c.l.b16 %v1345
    %v1361 = vunpack.c.l.b16 %v1346
    %v1362 = vunpack.c.l.b16 %v1347
    %v1363 = vunpack.c.l.b16 %v1348
    %v1364 = vpack.c.b16 %v1361, %v1360
    %v1365 = vpack.c.b16 %v1363, %v1362
    %v1369 = vsel %vm105, %v1341, 0
    %v1372 = vsel %vm105, %v1342, 0
    %v1375 = vsel %vm105, %v1343, 0
    %v1378 = vsel %vm105, %v1344, 0
    %1380 = vmatprep.subr.bf16.mxu0 0
    %1381 = vmatpush1.bf16.msra.mxu0 0
    %1382 = vmatprep.subr.bf16.mxu0 0
    %1383 = vmatpush1.bf16.msra.mxu0 0
    %1384 = vmatprep.subr.bf16.mxu0 0
    %1385 = vmatpush1.bf16.msra.mxu0 0
    %1386 = vmatprep.subr.bf16.mxu0 0
    %1387 = vmatpush1.bf16.msra.mxu0 0
    %1388 = vmatprep.subr.bf16.mxu0 0
    %1389 = vmatpush1.bf16.msra.mxu0 0
    %1390 = vmatprep.subr.bf16.mxu0 0
    %1391 = vmatpush1.bf16.msra.mxu0 0
    %1392 = vmatprep.subr.bf16.mxu0 0
    %1393 = vmatpush1.bf16.msra.mxu0 %v1365
    %1394 = vmatprep.subr.bf16.mxu0 0
    %1395 = vmatpush1.bf16.msra.mxu0 %v1364
    %1396 = vmatprep.subr.bf16.mxu0 0
    %1397 = vmatpush2.bf16.msra.mxu0 0
    %1398 = vmatprep.subr.bf16.mxu0 0
    %1399 = vmatpush2.bf16.msra.mxu0 0
    %1400 = vmatprep.subr.bf16.mxu0 0
    %1401 = vmatpush2.bf16.msra.mxu0 0
    %1402 = vmatprep.subr.bf16.mxu0 0
    %1403 = vmatpush2.bf16.msra.mxu0 0
    %1404 = vmatprep.subr.bf16.mxu0 0
    %1405 = vmatpush2.bf16.msra.mxu0 0
    %1406 = vmatprep.subr.bf16.mxu0 0
    %1407 = vmatpush2.bf16.msra.mxu0 0
    %1408 = vmatprep.subr.bf16.mxu0 0
    %1409 = vmatpush2.bf16.msra.mxu0 0
    %1410 = vmatprep.subr.bf16.mxu0 0
    %1411 = vmatpush2.bf16.msra.mxu0 0
    %1412 = vmatprep.mubr.bf16.mxu0 0
    %1413 = vmatmul.mubr.bf16.gmra.mxu0 %v1369
    %v1414 = vpop.f32.mrf.mxu0
    %v1415 = vadd.f32 %v1354, %v1414
    %v1416 = vpop.f32.mrf.mxu0
    %v1417 = vpop.f32.mrf.mxu0
    %v1418 = vadd.f32 %v1354, %v1417
    %v1419 = vpop.f32.mrf.mxu0
    %1420 = vmatprep.mubr.bf16.mxu0 0
    %1421 = vmatmul.mubr.bf16.gmra.mxu0 %v1372
    %v1422 = vpop.f32.mrf.mxu0
    %v1423 = vadd.f32 %v1354, %v1422
    %v1424 = vpop.f32.mrf.mxu0
    %v1425 = vpop.f32.mrf.mxu0
    %v1426 = vadd.f32 %v1354, %v1425
    %v1427 = vpop.f32.mrf.mxu0
    %1428 = vmatprep.mubr.bf16.mxu0 0
    %1429 = vmatmul.mubr.bf16.gmra.mxu0 %v1375
    %v1430 = vpop.f32.mrf.mxu0
    %v1431 = vadd.f32 %v1354, %v1430
    %v1432 = vpop.f32.mrf.mxu0
    %v1433 = vpop.f32.mrf.mxu0
    %v1434 = vadd.f32 %v1354, %v1433
    %v1435 = vpop.f32.mrf.mxu0
    %1436 = vmatprep.mubr.bf16.mxu0 0
    %1437 = vmatmul.mubr.bf16.gmra.mxu0 %v1378
    %v1438 = vpop.f32.mrf.mxu0
    %v1439 = vadd.f32 %v1354, %v1438
    %v1440 = vpop.f32.mrf.mxu0
    %v1441 = vpop.f32.mrf.mxu0
    %v1442 = vadd.f32 %v1354, %v1441
    %v1443 = vpop.f32.mrf.mxu0
    %1444 = vdwg.mxu0
    %v1445 = vmul.f32 %v1415, %v1415
    %v1446 = vmul.f32 %v1418, %v1418
    %v1447 = vmul.f32 %v1423, %v1423
    %v1448 = vmul.f32 %v1426, %v1426
    %v1449 = vmul.f32 %v1431, %v1431
    %v1450 = vmul.f32 %v1434, %v1434
    %v1451 = vmul.f32 %v1439, %v1439
    %v1452 = vmul.f32 %v1442, %v1442
    %v1453 = vmul.f32 %v1415, %v1445
    %v1454 = vmul.f32 %v1418, %v1446
    %v1455 = vmul.f32 %v1423, %v1447
    %v1456 = vmul.f32 %v1426, %v1448
    %v1457 = vmul.f32 %v1431, %v1449
    %v1458 = vmul.f32 %v1434, %v1450
    %v1459 = vmul.f32 %v1439, %v1451
    %v1460 = vmul.f32 %v1442, %v1452
    %v1461 = vmul.f32 %v1453, 0.044715
    %v1462 = vmul.f32 %v1454, 0.044715
    %v1463 = vmul.f32 %v1455, 0.044715
    %v1464 = vmul.f32 %v1456, 0.044715
    %v1465 = vmul.f32 %v1457, 0.044715
    %v1466 = vmul.f32 %v1458, 0.044715
    %v1467 = vmul.f32 %v1459, 0.044715
    %v1468 = vmul.f32 %v1460, 0.044715
    %v1469 = vadd.f32 %v1415, %v1461
    %v1470 = vadd.f32 %v1418, %v1462
    %v1471 = vadd.f32 %v1423, %v1463
    %v1472 = vadd.f32 %v1426, %v1464
    %v1473 = vadd.f32 %v1431, %v1465
    %v1474 = vadd.f32 %v1434, %v1466
    %v1475 = vadd.f32 %v1439, %v1467
    %v1476 = vadd.f32 %v1442, %v1468
    %v1477 = vmul.f32 %v1469, 0.7978846
    %v1478 = vmul.f32 %v1470, 0.7978846
    %v1479 = vmul.f32 %v1471, 0.7978846
    %v1480 = vmul.f32 %v1472, 0.7978846
    %v1481 = vmul.f32 %v1473, 0.7978846
    %v1482 = vmul.f32 %v1474, 0.7978846
    %v1483 = vmul.f32 %v1475, 0.7978846
    %v1484 = vmul.f32 %v1476, 0.7978846
    %v1485 = vtanh.pop %v1477
    %v1486 = vtanh.pop %v1478
    %v1487 = vtanh.pop %v1479
    %v1488 = vtanh.pop %v1480
    %v1489 = vtanh.pop %v1481
    %v1490 = vtanh.pop %v1482
    %v1491 = vtanh.pop %v1483
    %v1492 = vtanh.pop %v1484
    %v1493 = vadd.f32 %v1485, 1.0
    %v1494 = vadd.f32 %v1486, 1.0
    %v1495 = vadd.f32 %v1487, 1.0
    %v1496 = vadd.f32 %v1488, 1.0
    %v1497 = vadd.f32 %v1489, 1.0
    %v1498 = vadd.f32 %v1490, 1.0
    %v1499 = vadd.f32 %v1491, 1.0
    %v1500 = vadd.f32 %v1492, 1.0
    %v1501 = vmul.f32 %v1493, 0.5
    %v1502 = vmul.f32 %v1494, 0.5
    %v1503 = vmul.f32 %v1495, 0.5
    %v1504 = vmul.f32 %v1496, 0.5
    %v1505 = vmul.f32 %v1497, 0.5
    %v1506 = vmul.f32 %v1498, 0.5
    %v1507 = vmul.f32 %v1499, 0.5
    %v1508 = vmul.f32 %v1500, 0.5
    %v1509 = vmul.f32 %v1415, %v1501
    %v1510 = vmul.f32 %v1418, %v1502
    %v1511 = vmul.f32 %v1423, %v1503
    %v1512 = vmul.f32 %v1426, %v1504
    %v1513 = vmul.f32 %v1431, %v1505
    %v1514 = vmul.f32 %v1434, %v1506
    %v1515 = vmul.f32 %v1439, %v1507
    %v1516 = vmul.f32 %v1442, %v1508
    %v1517 = vpack.c.bf16 %v1510, %v1509
    %v1518 = vpack.c.bf16 %v1512, %v1511
    %v1519 = vpack.c.bf16 %v1514, %v1513
    %v1520 = vpack.c.bf16 %v1516, %v1515
    %v1521 = vld [vmem:[%s10] sm:$0xf]
    %v1522 = vld [vmem:[%s10 + $0x4] sm:$0xf]
    %v1523 = vld [vmem:[%s10 + $0x8] sm:$0xf]
    %v1524 = vld [vmem:[%s10 + $0xc] sm:$0xf]
    %v1525 = vld [vmem:[%s10 + $0x10] sm:$0xf]
    %v1526 = vld [vmem:[%s10 + $0x14] sm:$0xf]
    %v1527 = vld [vmem:[%s10 + $0x18] sm:$0xf]
    %v1528 = vld [vmem:[%s10 + $0x1c] sm:$0xf]
    %v1537 = vunpack.c.l.b16 %v1521
    %v1538 = vunpack.c.l.b16 %v1522
    %v1539 = vunpack.c.l.b16 %v1523
    %v1540 = vunpack.c.l.b16 %v1524
    %v1541 = vunpack.c.l.b16 %v1525
    %v1542 = vunpack.c.l.b16 %v1526
    %v1543 = vunpack.c.l.b16 %v1527
    %v1544 = vunpack.c.l.b16 %v1528
    %v1545 = vpack.c.b16 %v1538, %v1537
    %v1546 = vpack.c.b16 %v1540, %v1539
    %v1547 = vpack.c.b16 %v1542, %v1541
    %v1548 = vpack.c.b16 %v1544, %v1543
    %vm1553 = vcmask 523264
    %v1555 = vsel %vm1553, %v1517, 0
    %v1558 = vsel %vm1553, %v1518, 0
    %v1561 = vsel %vm1553, %v1519, 0
    %v1564 = vsel %vm1553, %v1520, 0
    %1566 = vmatprep.subr.bf16.mxu0 0
    %1567 = vmatpush1.bf16.msra.mxu0 0
    %1568 = vmatprep.subr.bf16.mxu0 0
    %1569 = vmatpush1.bf16.msra.mxu0 0
    %1570 = vmatprep.subr.bf16.mxu0 0
    %1571 = vmatpush1.bf16.msra.mxu0 0
    %1572 = vmatprep.subr.bf16.mxu0 0
    %1573 = vmatpush1.bf16.msra.mxu0 0
    %1574 = vmatprep.subr.bf16.mxu0 0
    %1575 = vmatpush1.bf16.msra.mxu0 %v1548
    %1576 = vmatprep.subr.bf16.mxu0 0
    %1577 = vmatpush1.bf16.msra.mxu0 %v1547
    %1578 = vmatprep.subr.bf16.mxu0 0
    %1579 = vmatpush1.bf16.msra.mxu0 %v1546
    %1580 = vmatprep.subr.bf16.mxu0 0
    %1581 = vmatpush1.bf16.msra.mxu0 %v1545
    %1582 = vmatprep.subr.bf16.mxu0 0
    %1583 = vmatpush2.bf16.msra.mxu0 0
    %1584 = vmatprep.subr.bf16.mxu0 0
    %1585 = vmatpush2.bf16.msra.mxu0 0
    %1586 = vmatprep.subr.bf16.mxu0 0
    %1587 = vmatpush2.bf16.msra.mxu0 0
    %1588 = vmatprep.subr.bf16.mxu0 0
    %1589 = vmatpush2.bf16.msra.mxu0 0
    %1590 = vmatprep.subr.bf16.mxu0 0
    %1591 = vmatpush2.bf16.msra.mxu0 0
    %1592 = vmatprep.subr.bf16.mxu0 0
    %1593 = vmatpush2.bf16.msra.mxu0 0
    %1594 = vmatprep.subr.bf16.mxu0 0
    %1595 = vmatpush2.bf16.msra.mxu0 0
    %1596 = vmatprep.subr.bf16.mxu0 0
    %1597 = vmatpush2.bf16.msra.mxu0 0
    %1598 = vmatprep.mubr.bf16.mxu0 0
    %1599 = vmatmul.mubr.bf16.gmra.mxu0 %v1555
    %v1600 = vpop.f32.mrf.mxu0
    %v1601 = vadd.f32 0.0, %v1600
    %v1602 = vpop.f32.mrf.mxu0
    %v1603 = vpop.f32.mrf.mxu0
    %v1604 = vadd.f32 0.0, %v1603
    %v1605 = vpop.f32.mrf.mxu0
    %1606 = vmatprep.mubr.bf16.mxu0 0
    %1607 = vmatmul.mubr.bf16.gmra.mxu0 %v1558
    %v1608 = vpop.f32.mrf.mxu0
    %v1609 = vadd.f32 0.0, %v1608
    %v1610 = vpop.f32.mrf.mxu0
    %v1611 = vpop.f32.mrf.mxu0
    %v1612 = vadd.f32 0.0, %v1611
    %v1613 = vpop.f32.mrf.mxu0
    %1614 = vmatprep.mubr.bf16.mxu0 0
    %1615 = vmatmul.mubr.bf16.gmra.mxu0 %v1561
    %v1616 = vpop.f32.mrf.mxu0
    %v1617 = vadd.f32 0.0, %v1616
    %v1618 = vpop.f32.mrf.mxu0
    %v1619 = vpop.f32.mrf.mxu0
    %v1620 = vadd.f32 0.0, %v1619
    %v1621 = vpop.f32.mrf.mxu0
    %1622 = vmatprep.mubr.bf16.mxu0 0
    %1623 = vmatmul.mubr.bf16.gmra.mxu0 %v1564
    %v1624 = vpop.f32.mrf.mxu0
    %v1625 = vadd.f32 0.0, %v1624
    %v1626 = vpop.f32.mrf.mxu0
    %v1627 = vpop.f32.mrf.mxu0
    %v1628 = vadd.f32 0.0, %v1627
    %v1629 = vpop.f32.mrf.mxu0
    %1630 = vdwg.mxu0
    %v1631 = vadd.f32 %v1213, %v1601
    %v1632 = vadd.f32 %v1214, %v1604
    %v1633 = vadd.f32 %v1215, %v1609
    %v1634 = vadd.f32 %v1216, %v1612
    %v1635 = vadd.f32 %v1217, %v1617
    %v1636 = vadd.f32 %v1218, %v1620
    %v1637 = vadd.f32 %v1219, %v1625
    %v1638 = vadd.f32 %v1220, %v1628
    %v1639 = vld [vmem:[%s11] sm:$0x1]
    %v1641 = vlaneseq
    %v1642 = vshrl.u32 %v1641, 7
    %v1643 = vsub.s32 0, %v1642
    %v1644 = vrot.slane %v1639, %v1643
    %v1646 = vadd.f32 %v1631, %v1644
    %v1647 = vadd.f32 %v1632, %v1644
    %v1648 = vadd.f32 %v1633, %v1644
    %v1649 = vadd.f32 %v1634, %v1644
    %v1650 = vadd.f32 %v1635, %v1644
    %v1651 = vadd.f32 %v1636, %v1644
    %v1652 = vadd.f32 %v1637, %v1644
    %v1653 = vadd.f32 %v1638, %v1644
    %v1654 = vld [vmem:[%s12] sm:$0x1]
    %v1655 = vld [vmem:[%s13] sm:$0x1]
    %v1656 = vsel %vm105, %v1646, 0.0
    %1657 = vadd.xlane.f32.xlu0 %v1656
    %v1658 = vpop.xlane.xlu0 %1657
    %v1659 = vsel %vm105, %v1647, 0.0
    %1660 = vadd.xlane.f32.xlu0 %v1659
    %v1661 = vpop.xlane.xlu0 %1660
    %v1662 = vsel %vm105, %v1648, 0.0
    %1663 = vadd.xlane.f32.xlu0 %v1662
    %v1664 = vpop.xlane.xlu0 %1663
    %v1665 = vsel %vm105, %v1649, 0.0
    %1666 = vadd.xlane.f32.xlu0 %v1665
    %v1667 = vpop.xlane.xlu0 %1666
    %v1668 = vsel %vm105, %v1650, 0.0
    %1669 = vadd.xlane.f32.xlu0 %v1668
    %v1670 = vpop.xlane.xlu0 %1669
    %v1671 = vsel %vm105, %v1651, 0.0
    %1672 = vadd.xlane.f32.xlu0 %v1671
    %v1673 = vpop.xlane.xlu0 %1672
    %v1674 = vsel %vm105, %v1652, 0.0
    %1675 = vadd.xlane.f32.xlu0 %v1674
    %v1676 = vpop.xlane.xlu0 %1675
    %v1677 = vsel %vm105, %v1653, 0.0
    %1678 = vadd.xlane.f32.xlu0 %v1677
    %v1679 = vpop.xlane.xlu0 %1678
    %v1680 = vmul.f32 %v1658, %v130
    %v1681 = vmul.f32 %v1661, %v130
    %v1682 = vmul.f32 %v1664, %v130
    %v1683 = vmul.f32 %v1667, %v130
    %v1684 = vmul.f32 %v1670, %v130
    %v1685 = vmul.f32 %v1673, %v130
    %v1686 = vmul.f32 %v1676, %v130
    %v1687 = vmul.f32 %v1679, %v130
    %v1688 = vsub.f32 %v1646, %v1680
    %v1689 = vsub.f32 %v1647, %v1681
    %v1690 = vsub.f32 %v1648, %v1682
    %v1691 = vsub.f32 %v1649, %v1683
    %v1692 = vsub.f32 %v1650, %v1684
    %v1693 = vsub.f32 %v1651, %v1685
    %v1694 = vsub.f32 %v1652, %v1686
    %v1695 = vsub.f32 %v1653, %v1687
    %v1696 = vmul.f32 %v1688, %v1688
    %v1697 = vmul.f32 %v1689, %v1689
    %v1698 = vmul.f32 %v1690, %v1690
    %v1699 = vmul.f32 %v1691, %v1691
    %v1700 = vmul.f32 %v1692, %v1692
    %v1701 = vmul.f32 %v1693, %v1693
    %v1702 = vmul.f32 %v1694, %v1694
    %v1703 = vmul.f32 %v1695, %v1695
    %v1704 = vsel %vm105, %v1696, 0.0
    %1705 = vadd.xlane.f32.xlu0 %v1704
    %v1706 = vpop.xlane.xlu0 %1705
    %v1707 = vsel %vm105, %v1697, 0.0
    %1708 = vadd.xlane.f32.xlu0 %v1707
    %v1709 = vpop.xlane.xlu0 %1708
    %v1710 = vsel %vm105, %v1698, 0.0
    %1711 = vadd.xlane.f32.xlu0 %v1710
    %v1712 = vpop.xlane.xlu0 %1711
    %v1713 = vsel %vm105, %v1699, 0.0
    %1714 = vadd.xlane.f32.xlu0 %v1713
    %v1715 = vpop.xlane.xlu0 %1714
    %v1716 = vsel %vm105, %v1700, 0.0
    %1717 = vadd.xlane.f32.xlu0 %v1716
    %v1718 = vpop.xlane.xlu0 %1717
    %v1719 = vsel %vm105, %v1701, 0.0
    %1720 = vadd.xlane.f32.xlu0 %v1719
    %v1721 = vpop.xlane.xlu0 %1720
    %v1722 = vsel %vm105, %v1702, 0.0
    %1723 = vadd.xlane.f32.xlu0 %v1722
    %v1724 = vpop.xlane.xlu0 %1723
    %v1725 = vsel %vm105, %v1703, 0.0
    %1726 = vadd.xlane.f32.xlu0 %v1725
    %v1727 = vpop.xlane.xlu0 %1726
    %v1728 = vmul.f32 %v1706, %v130
    %v1729 = vmul.f32 %v1709, %v130
    %v1730 = vmul.f32 %v1712, %v130
    %v1731 = vmul.f32 %v1715, %v130
    %v1732 = vmul.f32 %v1718, %v130
    %v1733 = vmul.f32 %v1721, %v130
    %v1734 = vmul.f32 %v1724, %v130
    %v1735 = vmul.f32 %v1727, %v130
    %v1736 = vadd.f32 %v1728, 1e-05
    %v1737 = vadd.f32 %v1729, 1e-05
    %v1738 = vadd.f32 %v1730, 1e-05
    %v1739 = vadd.f32 %v1731, 1e-05
    %v1740 = vadd.f32 %v1732, 1e-05
    %v1741 = vadd.f32 %v1733, 1e-05
    %v1742 = vadd.f32 %v1734, 1e-05
    %v1743 = vadd.f32 %v1735, 1e-05
    %v1744 = vrsqrt.pop %v1736
    %v1745 = vrsqrt.pop %v1737
    %v1746 = vrsqrt.pop %v1738
    %v1747 = vrsqrt.pop %v1739
    %v1748 = vrsqrt.pop %v1740
    %v1749 = vrsqrt.pop %v1741
    %v1750 = vrsqrt.pop %v1742
    %v1751 = vrsqrt.pop %v1743
    %v1752 = vmul.f32 %v1688, %v1744
    %v1753 = vmul.f32 %v1689, %v1745
    %v1754 = vmul.f32 %v1690, %v1746
    %v1755 = vmul.f32 %v1691, %v1747
    %v1756 = vmul.f32 %v1692, %v1748
    %v1757 = vmul.f32 %v1693, %v1749
    %v1758 = vmul.f32 %v1694, %v1750
    %v1759 = vmul.f32 %v1695, %v1751
    %v1761 = vlaneseq
    %v1762 = vshrl.u32 %v1761, 7
    %v1763 = vsub.s32 0, %v1762
    %v1764 = vrot.slane %v1654, %v1763
    %v1766 = vmul.f32 %v1752, %v1764
    %v1767 = vmul.f32 %v1753, %v1764
    %v1768 = vmul.f32 %v1754, %v1764
    %v1769 = vmul.f32 %v1755, %v1764
    %v1770 = vmul.f32 %v1756, %v1764
    %v1771 = vmul.f32 %v1757, %v1764
    %v1772 = vmul.f32 %v1758, %v1764
    %v1773 = vmul.f32 %v1759, %v1764
    %v1775 = vlaneseq
    %v1776 = vshrl.u32 %v1775, 7
    %v1777 = vsub.s32 0, %v1776
    %v1778 = vrot.slane %v1655, %v1777
    %v1780 = vadd.f32 %v1766, %v1778
    %v1781 = vadd.f32 %v1767, %v1778
    %v1782 = vadd.f32 %v1768, %v1778
    %v1783 = vadd.f32 %v1769, %v1778
    %v1784 = vadd.f32 %v1770, %v1778
    %v1785 = vadd.f32 %v1771, %v1778
    %v1786 = vadd.f32 %v1772, %v1778
    %v1787 = vadd.f32 %v1773, %v1778
    %v1788 = vpack.c.bf16 %v1781, %v1780
    %v1789 = vpack.c.bf16 %v1783, %v1782
    %v1790 = vpack.c.bf16 %v1785, %v1784
    %v1791 = vpack.c.bf16 %v1787, %v1786
    %v1792 = vld [vmem:[%s14] sm:$0xf]
    %v1793 = vld [vmem:[%s14 + $0x4] sm:$0xf]
    %v1794 = vld [vmem:[%s14 + $0x8] sm:$0xf]
    %v1795 = vld [vmem:[%s14 + $0xc] sm:$0xf]
    %v1800 = vunpack.c.l.b16 %v1792
    %v1801 = vunpack.c.l.b16 %v1793
    %v1802 = vunpack.c.l.b16 %v1794
    %v1803 = vunpack.c.l.b16 %v1795
    %v1804 = vpack.c.b16 %v1801, %v1800
    %v1805 = vpack.c.b16 %v1803, %v1802
    %v1809 = vsel %vm105, %v1788, 0
    %v1812 = vsel %vm105, %v1789, 0
    %v1815 = vsel %vm105, %v1790, 0
    %v1818 = vsel %vm105, %v1791, 0
    %1820 = vmatprep.subr.bf16.mxu0 0
    %1821 = vmatpush1.bf16.msra.mxu0 0
    %1822 = vmatprep.subr.bf16.mxu0 0
    %1823 = vmatpush1.bf16.msra.mxu0 0
    %1824 = vmatprep.subr.bf16.mxu0 0
    %1825 = vmatpush1.bf16.msra.mxu0 0
    %1826 = vmatprep.subr.bf16.mxu0 0
    %1827 = vmatpush1.bf16.msra.mxu0 0
    %1828 = vmatprep.subr.bf16.mxu0 0
    %1829 = vmatpush1.bf16.msra.mxu0 0
    %1830 = vmatprep.subr.bf16.mxu0 0
    %1831 = vmatpush1.bf16.msra.mxu0 0
    %1832 = vmatprep.subr.bf16.mxu0 0
    %1833 = vmatpush1.bf16.msra.mxu0 %v1805
    %1834 = vmatprep.subr.bf16.mxu0 0
    %1835 = vmatpush1.bf16.msra.mxu0 %v1804
    %1836 = vmatprep.subr.bf16.mxu0 0
    %1837 = vmatpush2.bf16.msra.mxu0 0
    %1838 = vmatprep.subr.bf16.mxu0 0
    %1839 = vmatpush2.bf16.msra.mxu0 0
    %1840 = vmatprep.subr.bf16.mxu0 0
    %1841 = vmatpush2.bf16.msra.mxu0 0
    %1842 = vmatprep.subr.bf16.mxu0 0
    %1843 = vmatpush2.bf16.msra.mxu0 0
    %1844 = vmatprep.subr.bf16.mxu0 0
    %1845 = vmatpush2.bf16.msra.mxu0 0
    %1846 = vmatprep.subr.bf16.mxu0 0
    %1847 = vmatpush2.bf16.msra.mxu0 0
    %1848 = vmatprep.subr.bf16.mxu0 0
    %1849 = vmatpush2.bf16.msra.mxu0 0
    %1850 = vmatprep.subr.bf16.mxu0 0
    %1851 = vmatpush2.bf16.msra.mxu0 0
    %1852 = vmatprep.mubr.bf16.mxu0 0
    %1853 = vmatmul.mubr.bf16.gmra.mxu0 %v1809
    %v1854 = vpop.f32.mrf.mxu0
    %v1855 = vadd.f32 0.0, %v1854
    %v1856 = vpop.f32.mrf.mxu0
    %v1857 = vpop.f32.mrf.mxu0
    %v1858 = vadd.f32 0.0, %v1857
    %v1859 = vpop.f32.mrf.mxu0
    %1860 = vmatprep.mubr.bf16.mxu0 0
    %1861 = vmatmul.mubr.bf16.gmra.mxu0 %v1812
    %v1862 = vpop.f32.mrf.mxu0
    %v1863 = vadd.f32 0.0, %v1862
    %v1864 = vpop.f32.mrf.mxu0
    %v1865 = vpop.f32.mrf.mxu0
    %v1866 = vadd.f32 0.0, %v1865
    %v1867 = vpop.f32.mrf.mxu0
    %1868 = vmatprep.mubr.bf16.mxu0 0
    %1869 = vmatmul.mubr.bf16.gmra.mxu0 %v1815
    %v1870 = vpop.f32.mrf.mxu0
    %v1871 = vadd.f32 0.0, %v1870
    %v1872 = vpop.f32.mrf.mxu0
    %v1873 = vpop.f32.mrf.mxu0
    %v1874 = vadd.f32 0.0, %v1873
    %v1875 = vpop.f32.mrf.mxu0
    %1876 = vmatprep.mubr.bf16.mxu0 0
    %1877 = vmatmul.mubr.bf16.gmra.mxu0 %v1818
    %v1878 = vpop.f32.mrf.mxu0
    %v1879 = vadd.f32 0.0, %v1878
    %v1880 = vpop.f32.mrf.mxu0
    %v1881 = vpop.f32.mrf.mxu0
    %v1882 = vadd.f32 0.0, %v1881
    %v1883 = vpop.f32.mrf.mxu0
    %1884 = vdwg.mxu0
    %v1885 = vld [vmem:[%s15] sm:$0xff]
    %v1886 = vld [vmem:[%s15 + $0x8] sm:$0xff]
    %v1887 = vld [vmem:[%s15 + $0x10] sm:$0xff]
    %v1888 = vld [vmem:[%s15 + $0x18] sm:$0xff]
    %v1889 = vmul.f32 %v1855, %v357
    %v1890 = vmul.f32 %v1858, %v359
    %v1891 = vmul.f32 %v1863, %v361
    %v1892 = vmul.f32 %v1866, %v363
    %v1893 = vmul.f32 %v1855, %v365
    %v1894 = vmul.f32 %v1858, %v367
    %v1895 = vmul.f32 %v1863, %v369
    %v1896 = vmul.f32 %v1866, %v371
    %v1897 = vmul.f32 %v1855, %v373
    %v1898 = vmul.f32 %v1858, %v375
    %v1899 = vmul.f32 %v1863, %v377
    %v1900 = vmul.f32 %v1866, %v379
    %v1901 = vmul.f32 %v1855, %v381
    %v1902 = vmul.f32 %v1858, %v383
    %v1903 = vmul.f32 %v1863, %v385
    %v1904 = vmul.f32 %v1866, %v387
    %v1905 = vpack.c.bf16 %v1890, %v1889
    %v1906 = vpack.c.bf16 %v1892, %v1891
    %v1907 = vpack.c.bf16 %v1894, %v1893
    %v1908 = vpack.c.bf16 %v1896, %v1895
    %v1909 = vpack.c.bf16 %v1898, %v1897
    %v1910 = vpack.c.bf16 %v1900, %v1899
    %v1911 = vpack.c.bf16 %v1902, %v1901
    %v1912 = vpack.c.bf16 %v1904, %v1903
    %v1913 = vmul.f32 %v1855, %v429
    %v1914 = vmul.f32 %v1858, %v431
    %v1915 = vmul.f32 %v1863, %v433
    %v1916 = vmul.f32 %v1866, %v435
    %v1917 = vmul.f32 %v1855, %v437
    %v1918 = vmul.f32 %v1858, %v439
    %v1919 = vmul.f32 %v1863, %v441
    %v1920 = vmul.f32 %v1866, %v443
    %v1921 = vmul.f32 %v1855, %v445
    %v1922 = vmul.f32 %v1858, %v447
    %v1923 = vmul.f32 %v1863, %v449
    %v1924 = vmul.f32 %v1866, %v451
    %v1925 = vmul.f32 %v1855, %v453
    %v1926 = vmul.f32 %v1858, %v455
    %v1927 = vmul.f32 %v1863, %v457
    %v1928 = vmul.f32 %v1866, %v459
    %v1929 = vpack.c.bf16 %v1914, %v1913
    %v1930 = vpack.c.bf16 %v1916, %v1915
    %v1931 = vpack.c.bf16 %v1918, %v1917
    %v1932 = vpack.c.bf16 %v1920, %v1919
    %v1933 = vpack.c.bf16 %v1922, %v1921
    %v1934 = vpack.c.bf16 %v1924, %v1923
    %v1935 = vpack.c.bf16 %v1926, %v1925
    %v1936 = vpack.c.bf16 %v1928, %v1927
    %v1937 = vpack.c.bf16 %v1858, %v1855
    %v1938 = vpack.c.bf16 %v1866, %v1863
    %1947 = vrot.lane.b32.xlu0 %v1905, 96
    %v1948 = vpop.permute.xlu0 %1947
    %1949 = vrot.lane.b32.xlu0 %v1906, 96
    %v1950 = vpop.permute.xlu0 %1949
    %1951 = vrot.lane.b32.xlu0 %v1907, 96
    %v1952 = vpop.permute.xlu0 %1951
    %1953 = vrot.lane.b32.xlu0 %v1908, 96
    %v1954 = vpop.permute.xlu0 %1953
    %1955 = vrot.lane.b32.xlu0 %v1909, 96
    %v1956 = vpop.permute.xlu0 %1955
    %1957 = vrot.lane.b32.xlu0 %v1910, 96
    %v1958 = vpop.permute.xlu0 %1957
    %1959 = vrot.lane.b32.xlu0 %v1911, 96
    %v1960 = vpop.permute.xlu0 %1959
    %1961 = vrot.lane.b32.xlu0 %v1912, 96
    %v1962 = vpop.permute.xlu0 %1961
    %v1964 = vsel %vm105, %v1937, 0
    %v1967 = vsel %vm105, %v1938, 0
    %v1970 = vsel %vm105, %v1948, 0
    %v1973 = vsel %vm105, %v1950, 0
    %v1976 = vsel %vm105, %v1952, 0
    %v1979 = vsel %vm105, %v1954, 0
    %v1982 = vsel %vm105, %v1956, 0
    %v1985 = vsel %vm105, %v1958, 0
    %v1988 = vsel %vm105, %v1960, 0
    %v1991 = vsel %vm105, %v1962, 0
    %1993 = vmatprep.subr.bf16.mxu0 0
    %1994 = vmatpush1.bf16.xpose.msra.mxu0 %v1991
    %1995 = vmatprep.subr.bf16.mxu0 0
    %1996 = vmatpush1.bf16.xpose.msra.mxu0 %v1988
    %1997 = vmatprep.subr.bf16.mxu0 0
    %1998 = vmatpush1.bf16.xpose.msra.mxu0 %v1985
    %1999 = vmatprep.subr.bf16.mxu0 0
    %2000 = vmatpush1.bf16.xpose.msra.mxu0 %v1982
    %2001 = vmatprep.subr.bf16.mxu0 0
    %2002 = vmatpush1.bf16.xpose.msra.mxu0 %v1979
    %2003 = vmatprep.subr.bf16.mxu0 0
    %2004 = vmatpush1.bf16.xpose.msra.mxu0 %v1976
    %2005 = vmatprep.subr.bf16.mxu0 0
    %2006 = vmatpush1.bf16.xpose.msra.mxu0 %v1973
    %2007 = vmatprep.subr.bf16.mxu0 0
    %2008 = vmatpush1.bf16.xpose.msra.mxu0 %v1970
    %2009 = vmatprep.subr.bf16.mxu0 0
    %2010 = vmatpush2.bf16.xpose.msra.mxu0 0
    %2011 = vmatprep.subr.bf16.mxu0 0
    %2012 = vmatpush2.bf16.xpose.msra.mxu0 0
    %2013 = vmatprep.subr.bf16.mxu0 0
    %2014 = vmatpush2.bf16.xpose.msra.mxu0 0
    %2015 = vmatprep.subr.bf16.mxu0 0
    %2016 = vmatpush2.bf16.xpose.msra.mxu0 0
    %2017 = vmatprep.subr.bf16.mxu0 0
    %2018 = vmatpush2.bf16.xpose.msra.mxu0 0
    %2019 = vmatprep.subr.bf16.mxu0 0
    %2020 = vmatpush2.bf16.xpose.msra.mxu0 0
    %2021 = vmatprep.subr.bf16.mxu0 0
    %2022 = vmatpush2.bf16.xpose.msra.mxu0 0
    %2023 = vmatprep.subr.bf16.mxu0 0
    %2024 = vmatpush2.bf16.xpose.msra.mxu0 0
    %2025 = vmatprep.mubr.bf16.mxu0 0
    %2026 = vmatmul.mubr.bf16.gmra.mxu0 %v1964
    %v2027 = vpop.f32.mrf.mxu0
    %v2028 = vadd.f32 0.0, %v2027
    %v2029 = vpop.f32.mrf.mxu0
    %v2030 = vpop.f32.mrf.mxu0
    %v2031 = vadd.f32 0.0, %v2030
    %v2032 = vpop.f32.mrf.mxu0
    %2033 = vmatprep.mubr.bf16.mxu0 0
    %2034 = vmatmul.mubr.bf16.gmra.mxu0 %v1967
    %v2035 = vpop.f32.mrf.mxu0
    %v2036 = vadd.f32 0.0, %v2035
    %v2037 = vpop.f32.mrf.mxu0
    %v2038 = vpop.f32.mrf.mxu0
    %v2039 = vadd.f32 0.0, %v2038
    %v2040 = vpop.f32.mrf.mxu0
    %2041 = vdwg.mxu0
    %v2042 = vmul.f32 %v2028, %v1885
    %v2043 = vmul.f32 %v2031, %v1886
    %v2044 = vmul.f32 %v2036, %v1887
    %v2045 = vmul.f32 %v2039, %v1888
    %v2046 = vpack.c.bf16 %v2043, %v2042
    %v2047 = vpack.c.bf16 %v2045, %v2044
    %2056 = vrot.lane.b32.xlu0 %v1929, 64
    %v2057 = vpop.permute.xlu0 %2056
    %2058 = vrot.lane.b32.xlu0 %v1930, 64
    %v2059 = vpop.permute.xlu0 %2058
    %2060 = vrot.lane.b32.xlu0 %v1931, 64
    %v2061 = vpop.permute.xlu0 %2060
    %2062 = vrot.lane.b32.xlu0 %v1932, 64
    %v2063 = vpop.permute.xlu0 %2062
    %2064 = vrot.lane.b32.xlu0 %v1933, 64
    %v2065 = vpop.permute.xlu0 %2064
    %2066 = vrot.lane.b32.xlu0 %v1934, 64
    %v2067 = vpop.permute.xlu0 %2066
    %2068 = vrot.lane.b32.xlu0 %v1935, 64
    %v2069 = vpop.permute.xlu0 %2068
    %2070 = vrot.lane.b32.xlu0 %v1936, 64
    %v2071 = vpop.permute.xlu0 %2070
    %2080 = vmatprep.subr.bf16.mxu0 0
    %2081 = vmatpush1.bf16.msra.mxu0 %v2071
    %2082 = vmatprep.subr.bf16.mxu0 0
    %2083 = vmatpush1.bf16.msra.mxu0 %v2069
    %2084 = vmatprep.subr.bf16.mxu0 0
    %2085 = vmatpush1.bf16.msra.mxu0 %v2067
    %2086 = vmatprep.subr.bf16.mxu0 0
    %2087 = vmatpush1.bf16.msra.mxu0 %v2065
    %2088 = vmatprep.subr.bf16.mxu0 0
    %2089 = vmatpush1.bf16.msra.mxu0 %v2063
    %2090 = vmatprep.subr.bf16.mxu0 0
    %2091 = vmatpush1.bf16.msra.mxu0 %v2061
    %2092 = vmatprep.subr.bf16.mxu0 0
    %2093 = vmatpush1.bf16.msra.mxu0 %v2059
    %2094 = vmatprep.subr.bf16.mxu0 0
    %2095 = vmatpush1.bf16.msra.mxu0 %v2057
    %2096 = vmatprep.subr.bf16.mxu0 0
    %2097 = vmatpush2.bf16.msra.mxu0 0
    %2098 = vmatprep.subr.bf16.mxu0 0
    %2099 = vmatpush2.bf16.msra.mxu0 0
    %2100 = vmatprep.subr.bf16.mxu0 0
    %2101 = vmatpush2.bf16.msra.mxu0 0
    %2102 = vmatprep.subr.bf16.mxu0 0
    %2103 = vmatpush2.bf16.msra.mxu0 0
    %2104 = vmatprep.subr.bf16.mxu0 0
    %2105 = vmatpush2.bf16.msra.mxu0 0
    %2106 = vmatprep.subr.bf16.mxu0 0
    %2107 = vmatpush2.bf16.msra.mxu0 0
    %2108 = vmatprep.subr.bf16.mxu0 0
    %2109 = vmatpush2.bf16.msra.mxu0 0
    %2110 = vmatprep.subr.bf16.mxu0 0
    %2111 = vmatpush2.bf16.msra.mxu0 0
    %2112 = vmatprep.mubr.bf16.mxu0 0
    %2113 = vmatmul.mubr.bf16.gmra.mxu0 %v2046
    %v2114 = vpop.f32.mrf.mxu0
    %v2115 = vadd.f32 0.0, %v2114
    %v2116 = vpop.f32.mrf.mxu0
    %v2117 = vpop.f32.mrf.mxu0
    %v2118 = vadd.f32 0.0, %v2117
    %v2119 = vpop.f32.mrf.mxu0
    %2120 = vmatprep.mubr.bf16.mxu0 0
    %2121 = vmatmul.mubr.bf16.gmra.mxu0 %v2047
    %v2122 = vpop.f32.mrf.mxu0
    %v2123 = vadd.f32 0.0, %v2122
    %v2124 = vpop.f32.mrf.mxu0
    %v2125 = vpop.f32.mrf.mxu0
    %v2126 = vadd.f32 0.0, %v2125
    %v2127 = vpop.f32.mrf.mxu0
    %2128 = vdwg.mxu0
    %v2129 = vsel %vm105, %v2115, 0.0
    %2130 = vadd.xlane.f32.xlu0 %v2129
    %v2131 = vpop.xlane.xlu0 %2130
    %v2132 = vsel %vm105, %v2118, 0.0
    %2133 = vadd.xlane.f32.xlu0 %v2132
    %v2134 = vpop.xlane.xlu0 %2133
    %v2135 = vsel %vm105, %v2123, 0.0
    %2136 = vadd.xlane.f32.xlu0 %v2135
    %v2137 = vpop.xlane.xlu0 %2136
    %v2138 = vsel %vm105, %v2126, 0.0
    %2139 = vadd.xlane.f32.xlu0 %v2138
    %v2140 = vpop.xlane.xlu0 %2139
    %v2141 = vmul.f32 %v2131, %v130
    %v2142 = vmul.f32 %v2134, %v130
    %v2143 = vmul.f32 %v2137, %v130
    %v2144 = vmul.f32 %v2140, %v130
    %v2145 = vrot.slane %v2141, 4
    %v2146 = vadd.f32 %v2141, %v2145
    %v2147 = vrot.slane %v2146, 2
    %v2148 = vadd.f32 %v2146, %v2147
    %v2149 = vrot.slane %v2148, 1
    %v2150 = vadd.f32 %v2148, %v2149
    %v2151 = vrot.slane %v2142, 4
    %v2152 = vadd.f32 %v2142, %v2151
    %v2153 = vrot.slane %v2152, 2
    %v2154 = vadd.f32 %v2152, %v2153
    %v2155 = vrot.slane %v2154, 1
    %v2156 = vadd.f32 %v2154, %v2155
    %v2157 = vrot.slane %v2143, 4
    %v2158 = vadd.f32 %v2143, %v2157
    %v2159 = vrot.slane %v2158, 2
    %v2160 = vadd.f32 %v2158, %v2159
    %v2161 = vrot.slane %v2160, 1
    %v2162 = vadd.f32 %v2160, %v2161
    %v2163 = vrot.slane %v2144, 4
    %v2164 = vadd.f32 %v2144, %v2163
    %v2165 = vrot.slane %v2164, 2
    %v2166 = vadd.f32 %v2164, %v2165
    %v2167 = vrot.slane %v2166, 1
    %v2168 = vadd.f32 %v2166, %v2167
    %v2169 = vmul.f32 %v2150, %v732
    %v2170 = vmul.f32 %v2156, %v732
    %v2171 = vmul.f32 %v2162, %v732
    %v2172 = vmul.f32 %v2168, %v732
    %v2173 = vsub.f32 %v2115, %v2169
    %v2174 = vsub.f32 %v2118, %v2170
    %v2175 = vsub.f32 %v2123, %v2171
    %v2176 = vsub.f32 %v2126, %v2172
    %v2177 = vmul.f32 %v2173, %v2173
    %v2178 = vmul.f32 %v2174, %v2174
    %v2179 = vmul.f32 %v2175, %v2175
    %v2180 = vmul.f32 %v2176, %v2176
    %v2181 = vsel %vm105, %v2177, 0.0
    %2182 = vadd.xlane.f32.xlu0 %v2181
    %v2183 = vpop.xlane.xlu0 %2182
    %v2184 = vsel %vm105, %v2178, 0.0
    %2185 = vadd.xlane.f32.xlu0 %v2184
    %v2186 = vpop.xlane.xlu0 %2185
    %v2187 = vsel %vm105, %v2179, 0.0
    %2188 = vadd.xlane.f32.xlu0 %v2187
    %v2189 = vpop.xlane.xlu0 %2188
    %v2190 = vsel %vm105, %v2180, 0.0
    %2191 = vadd.xlane.f32.xlu0 %v2190
    %v2192 = vpop.xlane.xlu0 %2191
    %v2193 = vmul.f32 %v2183, %v130
    %v2194 = vmul.f32 %v2186, %v130
    %v2195 = vmul.f32 %v2189, %v130
    %v2196 = vmul.f32 %v2192, %v130
    %v2197 = vrot.slane %v2193, 4
    %v2198 = vadd.f32 %v2193, %v2197
    %v2199 = vrot.slane %v2198, 2
    %v2200 = vadd.f32 %v2198, %v2199
    %v2201 = vrot.slane %v2200, 1
    %v2202 = vadd.f32 %v2200, %v2201
    %v2203 = vrot.slane %v2194, 4
    %v2204 = vadd.f32 %v2194, %v2203
    %v2205 = vrot.slane %v2204, 2
    %v2206 = vadd.f32 %v2204, %v2205
    %v2207 = vrot.slane %v2206, 1
    %v2208 = vadd.f32 %v2206, %v2207
    %v2209 = vrot.slane %v2195, 4
    %v2210 = vadd.f32 %v2195, %v2209
    %v2211 = vrot.slane %v2210, 2
    %v2212 = vadd.f32 %v2210, %v2211
    %v2213 = vrot.slane %v2212, 1
    %v2214 = vadd.f32 %v2212, %v2213
    %v2215 = vrot.slane %v2196, 4
    %v2216 = vadd.f32 %v2196, %v2215
    %v2217 = vrot.slane %v2216, 2
    %v2218 = vadd.f32 %v2216, %v2217
    %v2219 = vrot.slane %v2218, 1
    %v2220 = vadd.f32 %v2218, %v2219
    %v2221 = vmul.f32 %v2202, %v732
    %v2222 = vmul.f32 %v2208, %v732
    %v2223 = vmul.f32 %v2214, %v732
    %v2224 = vmul.f32 %v2220, %v732
    %v2225 = vadd.f32 %v2221, 1e-05
    %v2226 = vadd.f32 %v2222, 1e-05
    %v2227 = vadd.f32 %v2223, 1e-05
    %v2228 = vadd.f32 %v2224, 1e-05
    %v2229 = vrsqrt.pop %v2225
    %v2230 = vrsqrt.pop %v2226
    %v2231 = vrsqrt.pop %v2227
    %v2232 = vrsqrt.pop %v2228
    %v2233 = vmul.f32 %v2173, %v2229
    %v2234 = vmul.f32 %v2174, %v2230
    %v2235 = vmul.f32 %v2175, %v2231
    %v2236 = vmul.f32 %v2176, %v2232
    %v2237 = vld [vmem:[%s16] sm:$0xff]
    %v2238 = vld [vmem:[%s16 + $0x8] sm:$0xff]
    %v2239 = vld [vmem:[%s16 + $0x10] sm:$0xff]
    %v2240 = vld [vmem:[%s16 + $0x18] sm:$0xff]
    %2242 = vset.pattern.permute.xlu0 0
    %2243 = vperm.xlu0 %2242, %v2237
    %v2244 = vpop.permute.xlu0 %2243
    %2247 = vset.pattern.permute.xlu0 0
    %2248 = vperm.xlu0 %2247, %v2238
    %v2249 = vpop.permute.xlu0 %2248
    %2252 = vset.pattern.permute.xlu0 0
    %2253 = vperm.xlu0 %2252, %v2239
    %v2254 = vpop.permute.xlu0 %2253
    %2257 = vset.pattern.permute.xlu0 0
    %2258 = vperm.xlu0 %2257, %v2240
    %v2259 = vpop.permute.xlu0 %2258
    %v2261 = vmul.f32 %v2233, %v2244
    %v2262 = vmul.f32 %v2234, %v2249
    %v2263 = vmul.f32 %v2235, %v2254
    %v2264 = vmul.f32 %v2236, %v2259
    %v2265 = vld [vmem:[%s17] sm:$0xff]
    %v2266 = vld [vmem:[%s17 + $0x8] sm:$0xff]
    %v2267 = vld [vmem:[%s17 + $0x10] sm:$0xff]
    %v2268 = vld [vmem:[%s17 + $0x18] sm:$0xff]
    %2270 = vset.pattern.permute.xlu0 0
    %2271 = vperm.xlu0 %2270, %v2265
    %v2272 = vpop.permute.xlu0 %2271
    %2275 = vset.pattern.permute.xlu0 0
    %2276 = vperm.xlu0 %2275, %v2266
    %v2277 = vpop.permute.xlu0 %2276
    %2280 = vset.pattern.permute.xlu0 0
    %2281 = vperm.xlu0 %2280, %v2267
    %v2282 = vpop.permute.xlu0 %2281
    %2285 = vset.pattern.permute.xlu0 0
    %2286 = vperm.xlu0 %2285, %v2268
    %v2287 = vpop.permute.xlu0 %2286
    %v2289 = vadd.f32 %v2261, %v2272
    %v2290 = vadd.f32 %v2262, %v2277
    %v2291 = vadd.f32 %v2263, %v2282
    %v2292 = vadd.f32 %v2264, %v2287
    %v2293 = vmul.f32 %v1871, %v357
    %v2294 = vmul.f32 %v1874, %v359
    %v2295 = vmul.f32 %v1879, %v361
    %v2296 = vmul.f32 %v1882, %v363
    %v2297 = vmul.f32 %v1871, %v365
    %v2298 = vmul.f32 %v1874, %v367
    %v2299 = vmul.f32 %v1879, %v369
    %v2300 = vmul.f32 %v1882, %v371
    %v2301 = vmul.f32 %v1871, %v373
    %v2302 = vmul.f32 %v1874, %v375
    %v2303 = vmul.f32 %v1879, %v377
    %v2304 = vmul.f32 %v1882, %v379
    %v2305 = vmul.f32 %v1871, %v381
    %v2306 = vmul.f32 %v1874, %v383
    %v2307 = vmul.f32 %v1879, %v385
    %v2308 = vmul.f32 %v1882, %v387
    %v2309 = vpack.c.bf16 %v2294, %v2293
    %v2310 = vpack.c.bf16 %v2296, %v2295
    %v2311 = vpack.c.bf16 %v2298, %v2297
    %v2312 = vpack.c.bf16 %v2300, %v2299
    %v2313 = vpack.c.bf16 %v2302, %v2301
    %v2314 = vpack.c.bf16 %v2304, %v2303
    %v2315 = vpack.c.bf16 %v2306, %v2305
    %v2316 = vpack.c.bf16 %v2308, %v2307
    %v2317 = vmul.f32 %v1871, %v429
    %v2318 = vmul.f32 %v1874, %v431
    %v2319 = vmul.f32 %v1879, %v433
    %v2320 = vmul.f32 %v1882, %v435
    %v2321 = vmul.f32 %v1871, %v437
    %v2322 = vmul.f32 %v1874, %v439
    %v2323 = vmul.f32 %v1879, %v441
    %v2324 = vmul.f32 %v1882, %v443
    %v2325 = vmul.f32 %v1871, %v445
    %v2326 = vmul.f32 %v1874, %v447
    %v2327 = vmul.f32 %v1879, %v449
    %v2328 = vmul.f32 %v1882, %v451
    %v2329 = vmul.f32 %v1871, %v453
    %v2330 = vmul.f32 %v1874, %v455
    %v2331 = vmul.f32 %v1879, %v457
    %v2332 = vmul.f32 %v1882, %v459
    %v2333 = vpack.c.bf16 %v2318, %v2317
    %v2334 = vpack.c.bf16 %v2320, %v2319
    %v2335 = vpack.c.bf16 %v2322, %v2321
    %v2336 = vpack.c.bf16 %v2324, %v2323
    %v2337 = vpack.c.bf16 %v2326, %v2325
    %v2338 = vpack.c.bf16 %v2328, %v2327
    %v2339 = vpack.c.bf16 %v2330, %v2329
    %v2340 = vpack.c.bf16 %v2332, %v2331
    %v2341 = vpack.c.bf16 %v1874, %v1871
    %v2342 = vpack.c.bf16 %v1882, %v1879
    %2351 = vrot.lane.b32.xlu0 %v2309, 96
    %v2352 = vpop.permute.xlu0 %2351
    %2353 = vrot.lane.b32.xlu0 %v2310, 96
    %v2354 = vpop.permute.xlu0 %2353
    %2355 = vrot.lane.b32.xlu0 %v2311, 96
    %v2356 = vpop.permute.xlu0 %2355
    %2357 = vrot.lane.b32.xlu0 %v2312, 96
    %v2358 = vpop.permute.xlu0 %2357
    %2359 = vrot.lane.b32.xlu0 %v2313, 96
    %v2360 = vpop.permute.xlu0 %2359
    %2361 = vrot.lane.b32.xlu0 %v2314, 96
    %v2362 = vpop.permute.xlu0 %2361
    %2363 = vrot.lane.b32.xlu0 %v2315, 96
    %v2364 = vpop.permute.xlu0 %2363
    %2365 = vrot.lane.b32.xlu0 %v2316, 96
    %v2366 = vpop.permute.xlu0 %2365
    %v2368 = vsel %vm105, %v2341, 0
    %v2371 = vsel %vm105, %v2342, 0
    %v2374 = vsel %vm105, %v2352, 0
    %v2377 = vsel %vm105, %v2354, 0
    %v2380 = vsel %vm105, %v2356, 0
    %v2383 = vsel %vm105, %v2358, 0
    %v2386 = vsel %vm105, %v2360, 0
    %v2389 = vsel %vm105, %v2362, 0
    %v2392 = vsel %vm105, %v2364, 0
    %v2395 = vsel %vm105, %v2366, 0
    %2397 = vmatprep.subr.bf16.mxu0 0
    %2398 = vmatpush1.bf16.xpose.msra.mxu0 %v2395
    %2399 = vmatprep.subr.bf16.mxu0 0
    %2400 = vmatpush1.bf16.xpose.msra.mxu0 %v2392
    %2401 = vmatprep.subr.bf16.mxu0 0
    %2402 = vmatpush1.bf16.xpose.msra.mxu0 %v2389
    %2403 = vmatprep.subr.bf16.mxu0 0
    %2404 = vmatpush1.bf16.xpose.msra.mxu0 %v2386
    %2405 = vmatprep.subr.bf16.mxu0 0
    %2406 = vmatpush1.bf16.xpose.msra.mxu0 %v2383
    %2407 = vmatprep.subr.bf16.mxu0 0
    %2408 = vmatpush1.bf16.xpose.msra.mxu0 %v2380
    %2409 = vmatprep.subr.bf16.mxu0 0
    %2410 = vmatpush1.bf16.xpose.msra.mxu0 %v2377
    %2411 = vmatprep.subr.bf16.mxu0 0
    %2412 = vmatpush1.bf16.xpose.msra.mxu0 %v2374
    %2413 = vmatprep.subr.bf16.mxu0 0
    %2414 = vmatpush2.bf16.xpose.msra.mxu0 0
    %2415 = vmatprep.subr.bf16.mxu0 0
    %2416 = vmatpush2.bf16.xpose.msra.mxu0 0
    %2417 = vmatprep.subr.bf16.mxu0 0
    %2418 = vmatpush2.bf16.xpose.msra.mxu0 0
    %2419 = vmatprep.subr.bf16.mxu0 0
    %2420 = vmatpush2.bf16.xpose.msra.mxu0 0
    %2421 = vmatprep.subr.bf16.mxu0 0
    %2422 = vmatpush2.bf16.xpose.msra.mxu0 0
    %2423 = vmatprep.subr.bf16.mxu0 0
    %2424 = vmatpush2.bf16.xpose.msra.mxu0 0
    %2425 = vmatprep.subr.bf16.mxu0 0
    %2426 = vmatpush2.bf16.xpose.msra.mxu0 0
    %2427 = vmatprep.subr.bf16.mxu0 0
    %2428 = vmatpush2.bf16.xpose.msra.mxu0 0
    %2429 = vmatprep.mubr.bf16.mxu0 0
    %2430 = vmatmul.mubr.bf16.gmra.mxu0 %v2368
    %v2431 = vpop.f32.mrf.mxu0
    %v2432 = vadd.f32 0.0, %v2431
    %v2433 = vpop.f32.mrf.mxu0
    %v2434 = vpop.f32.mrf.mxu0
    %v2435 = vadd.f32 0.0, %v2434
    %v2436 = vpop.f32.mrf.mxu0
    %2437 = vmatprep.mubr.bf16.mxu0 0
    %2438 = vmatmul.mubr.bf16.gmra.mxu0 %v2371
    %v2439 = vpop.f32.mrf.mxu0
    %v2440 = vadd.f32 0.0, %v2439
    %v2441 = vpop.f32.mrf.mxu0
    %v2442 = vpop.f32.mrf.mxu0
    %v2443 = vadd.f32 0.0, %v2442
    %v2444 = vpop.f32.mrf.mxu0
    %2445 = vdwg.mxu0
    %v2446 = vmul.f32 %v2432, %v1885
    %v2447 = vmul.f32 %v2435, %v1886
    %v2448 = vmul.f32 %v2440, %v1887
    %v2449 = vmul.f32 %v2443, %v1888
    %v2450 = vpack.c.bf16 %v2447, %v2446
    %v2451 = vpack.c.bf16 %v2449, %v2448
    %2460 = vrot.lane.b32.xlu0 %v2333, 64
    %v2461 = vpop.permute.xlu0 %2460
    %2462 = vrot.lane.b32.xlu0 %v2334, 64
    %v2463 = vpop.permute.xlu0 %2462
    %2464 = vrot.lane.b32.xlu0 %v2335, 64
    %v2465 = vpop.permute.xlu0 %2464
    %2466 = vrot.lane.b32.xlu0 %v2336, 64
    %v2467 = vpop.permute.xlu0 %2466
    %2468 = vrot.lane.b32.xlu0 %v2337, 64
    %v2469 = vpop.permute.xlu0 %2468
    %2470 = vrot.lane.b32.xlu0 %v2338, 64
    %v2471 = vpop.permute.xlu0 %2470
    %2472 = vrot.lane.b32.xlu0 %v2339, 64
    %v2473 = vpop.permute.xlu0 %2472
    %2474 = vrot.lane.b32.xlu0 %v2340, 64
    %v2475 = vpop.permute.xlu0 %2474
    %2484 = vmatprep.subr.bf16.mxu0 0
    %2485 = vmatpush1.bf16.msra.mxu0 %v2475
    %2486 = vmatprep.subr.bf16.mxu0 0
    %2487 = vmatpush1.bf16.msra.mxu0 %v2473
    %2488 = vmatprep.subr.bf16.mxu0 0
    %2489 = vmatpush1.bf16.msra.mxu0 %v2471
    %2490 = vmatprep.subr.bf16.mxu0 0
    %2491 = vmatpush1.bf16.msra.mxu0 %v2469
    %2492 = vmatprep.subr.bf16.mxu0 0
    %2493 = vmatpush1.bf16.msra.mxu0 %v2467
    %2494 = vmatprep.subr.bf16.mxu0 0
    %2495 = vmatpush1.bf16.msra.mxu0 %v2465
    %2496 = vmatprep.subr.bf16.mxu0 0
    %2497 = vmatpush1.bf16.msra.mxu0 %v2463
    %2498 = vmatprep.subr.bf16.mxu0 0
    %2499 = vmatpush1.bf16.msra.mxu0 %v2461
    %2500 = vmatprep.subr.bf16.mxu0 0
    %2501 = vmatpush2.bf16.msra.mxu0 0
    %2502 = vmatprep.subr.bf16.mxu0 0
    %2503 = vmatpush2.bf16.msra.mxu0 0
    %2504 = vmatprep.subr.bf16.mxu0 0
    %2505 = vmatpush2.bf16.msra.mxu0 0
    %2506 = vmatprep.subr.bf16.mxu0 0
    %2507 = vmatpush2.bf16.msra.mxu0 0
    %2508 = vmatprep.subr.bf16.mxu0 0
    %2509 = vmatpush2.bf16.msra.mxu0 0
    %2510 = vmatprep.subr.bf16.mxu0 0
    %2511 = vmatpush2.bf16.msra.mxu0 0
    %2512 = vmatprep.subr.bf16.mxu0 0
    %2513 = vmatpush2.bf16.msra.mxu0 0
    %2514 = vmatprep.subr.bf16.mxu0 0
    %2515 = vmatpush2.bf16.msra.mxu0 0
    %2516 = vmatprep.mubr.bf16.mxu0 0
    %2517 = vmatmul.mubr.bf16.gmra.mxu0 %v2450
    %v2518 = vpop.f32.mrf.mxu0
    %v2519 = vadd.f32 0.0, %v2518
    %v2520 = vpop.f32.mrf.mxu0
    %v2521 = vpop.f32.mrf.mxu0
    %v2522 = vadd.f32 0.0, %v2521
    %v2523 = vpop.f32.mrf.mxu0
    %2524 = vmatprep.mubr.bf16.mxu0 0
    %2525 = vmatmul.mubr.bf16.gmra.mxu0 %v2451
    %v2526 = vpop.f32.mrf.mxu0
    %v2527 = vadd.f32 0.0, %v2526
    %v2528 = vpop.f32.mrf.mxu0
    %v2529 = vpop.f32.mrf.mxu0
    %v2530 = vadd.f32 0.0, %v2529
    %v2531 = vpop.f32.mrf.mxu0
    %2532 = vdwg.mxu0
    %v2533 = vsel %vm105, %v2519, 0.0
    %2534 = vadd.xlane.f32.xlu0 %v2533
    %v2535 = vpop.xlane.xlu0 %2534
    %v2536 = vsel %vm105, %v2522, 0.0
    %2537 = vadd.xlane.f32.xlu0 %v2536
    %v2538 = vpop.xlane.xlu0 %2537
    %v2539 = vsel %vm105, %v2527, 0.0
    %2540 = vadd.xlane.f32.xlu0 %v2539
    %v2541 = vpop.xlane.xlu0 %2540
    %v2542 = vsel %vm105, %v2530, 0.0
    %2543 = vadd.xlane.f32.xlu0 %v2542
    %v2544 = vpop.xlane.xlu0 %2543
    %v2545 = vmul.f32 %v2535, %v130
    %v2546 = vmul.f32 %v2538, %v130
    %v2547 = vmul.f32 %v2541, %v130
    %v2548 = vmul.f32 %v2544, %v130
    %v2549 = vrot.slane %v2545, 4
    %v2550 = vadd.f32 %v2545, %v2549
    %v2551 = vrot.slane %v2550, 2
    %v2552 = vadd.f32 %v2550, %v2551
    %v2553 = vrot.slane %v2552, 1
    %v2554 = vadd.f32 %v2552, %v2553
    %v2555 = vrot.slane %v2546, 4
    %v2556 = vadd.f32 %v2546, %v2555
    %v2557 = vrot.slane %v2556, 2
    %v2558 = vadd.f32 %v2556, %v2557
    %v2559 = vrot.slane %v2558, 1
    %v2560 = vadd.f32 %v2558, %v2559
    %v2561 = vrot.slane %v2547, 4
    %v2562 = vadd.f32 %v2547, %v2561
    %v2563 = vrot.slane %v2562, 2
    %v2564 = vadd.f32 %v2562, %v2563
    %v2565 = vrot.slane %v2564, 1
    %v2566 = vadd.f32 %v2564, %v2565
    %v2567 = vrot.slane %v2548, 4
    %v2568 = vadd.f32 %v2548, %v2567
    %v2569 = vrot.slane %v2568, 2
    %v2570 = vadd.f32 %v2568, %v2569
    %v2571 = vrot.slane %v2570, 1
    %v2572 = vadd.f32 %v2570, %v2571
    %v2573 = vmul.f32 %v2554, %v732
    %v2574 = vmul.f32 %v2560, %v732
    %v2575 = vmul.f32 %v2566, %v732
    %v2576 = vmul.f32 %v2572, %v732
    %v2577 = vsub.f32 %v2519, %v2573
    %v2578 = vsub.f32 %v2522, %v2574
    %v2579 = vsub.f32 %v2527, %v2575
    %v2580 = vsub.f32 %v2530, %v2576
    %v2581 = vmul.f32 %v2577, %v2577
    %v2582 = vmul.f32 %v2578, %v2578
    %v2583 = vmul.f32 %v2579, %v2579
    %v2584 = vmul.f32 %v2580, %v2580
    %v2585 = vsel %vm105, %v2581, 0.0
    %2586 = vadd.xlane.f32.xlu0 %v2585
    %v2587 = vpop.xlane.xlu0 %2586
    %v2588 = vsel %vm105, %v2582, 0.0
    %2589 = vadd.xlane.f32.xlu0 %v2588
    %v2590 = vpop.xlane.xlu0 %2589
    %v2591 = vsel %vm105, %v2583, 0.0
    %2592 = vadd.xlane.f32.xlu0 %v2591
    %v2593 = vpop.xlane.xlu0 %2592
    %v2594 = vsel %vm105, %v2584, 0.0
    %2595 = vadd.xlane.f32.xlu0 %v2594
    %v2596 = vpop.xlane.xlu0 %2595
    %v2597 = vmul.f32 %v2587, %v130
    %v2598 = vmul.f32 %v2590, %v130
    %v2599 = vmul.f32 %v2593, %v130
    %v2600 = vmul.f32 %v2596, %v130
    %v2601 = vrot.slane %v2597, 4
    %v2602 = vadd.f32 %v2597, %v2601
    %v2603 = vrot.slane %v2602, 2
    %v2604 = vadd.f32 %v2602, %v2603
    %v2605 = vrot.slane %v2604, 1
    %v2606 = vadd.f32 %v2604, %v2605
    %v2607 = vrot.slane %v2598, 4
    %v2608 = vadd.f32 %v2598, %v2607
    %v2609 = vrot.slane %v2608, 2
    %v2610 = vadd.f32 %v2608, %v2609
    %v2611 = vrot.slane %v2610, 1
    %v2612 = vadd.f32 %v2610, %v2611
    %v2613 = vrot.slane %v2599, 4
    %v2614 = vadd.f32 %v2599, %v2613
    %v2615 = vrot.slane %v2614, 2
    %v2616 = vadd.f32 %v2614, %v2615
    %v2617 = vrot.slane %v2616, 1
    %v2618 = vadd.f32 %v2616, %v2617
    %v2619 = vrot.slane %v2600, 4
    %v2620 = vadd.f32 %v2600, %v2619
    %v2621 = vrot.slane %v2620, 2
    %v2622 = vadd.f32 %v2620, %v2621
    %v2623 = vrot.slane %v2622, 1
    %v2624 = vadd.f32 %v2622, %v2623
    %v2625 = vmul.f32 %v2606, %v732
    %v2626 = vmul.f32 %v2612, %v732
    %v2627 = vmul.f32 %v2618, %v732
    %v2628 = vmul.f32 %v2624, %v732
    %v2629 = vadd.f32 %v2625, 1e-05
    %v2630 = vadd.f32 %v2626, 1e-05
    %v2631 = vadd.f32 %v2627, 1e-05
    %v2632 = vadd.f32 %v2628, 1e-05
    %v2633 = vrsqrt.pop %v2629
    %v2634 = vrsqrt.pop %v2630
    %v2635 = vrsqrt.pop %v2631
    %v2636 = vrsqrt.pop %v2632
    %v2637 = vmul.f32 %v2577, %v2633
    %v2638 = vmul.f32 %v2578, %v2634
    %v2639 = vmul.f32 %v2579, %v2635
    %v2640 = vmul.f32 %v2580, %v2636
    %v2641 = vmul.f32 %v2637, %v2244
    %v2642 = vmul.f32 %v2638, %v2249
    %v2643 = vmul.f32 %v2639, %v2254
    %v2644 = vmul.f32 %v2640, %v2259
    %v2645 = vadd.f32 %v2641, %v2272
    %v2646 = vadd.f32 %v2642, %v2277
    %v2647 = vadd.f32 %v2643, %v2282
    %v2648 = vadd.f32 %v2644, %v2287
    %v2649 = vadd.f32 %v1646, %v2289
    %v2650 = vadd.f32 %v1647, %v2290
    %v2651 = vadd.f32 %v1648, %v2291
    %v2652 = vadd.f32 %v1649, %v2292
    %v2653 = vadd.f32 %v1650, %v2645
    %v2654 = vadd.f32 %v1651, %v2646
    %v2655 = vadd.f32 %v1652, %v2647
    %v2656 = vadd.f32 %v1653, %v2648
    %v2657 = vsel %vm105, %v2649, 0.0
    %2658 = vadd.xlane.f32.xlu0 %v2657
    %v2659 = vpop.xlane.xlu0 %2658
    %v2660 = vsel %vm105, %v2650, 0.0
    %2661 = vadd.xlane.f32.xlu0 %v2660
    %v2662 = vpop.xlane.xlu0 %2661
    %v2663 = vsel %vm105, %v2651, 0.0
    %2664 = vadd.xlane.f32.xlu0 %v2663
    %v2665 = vpop.xlane.xlu0 %2664
    %v2666 = vsel %vm105, %v2652, 0.0
    %2667 = vadd.xlane.f32.xlu0 %v2666
    %v2668 = vpop.xlane.xlu0 %2667
    %v2669 = vsel %vm105, %v2653, 0.0
    %2670 = vadd.xlane.f32.xlu0 %v2669
    %v2671 = vpop.xlane.xlu0 %2670
    %v2672 = vsel %vm105, %v2654, 0.0
    %2673 = vadd.xlane.f32.xlu0 %v2672
    %v2674 = vpop.xlane.xlu0 %2673
    %v2675 = vsel %vm105, %v2655, 0.0
    %2676 = vadd.xlane.f32.xlu0 %v2675
    %v2677 = vpop.xlane.xlu0 %2676
    %v2678 = vsel %vm105, %v2656, 0.0
    %2679 = vadd.xlane.f32.xlu0 %v2678
    %v2680 = vpop.xlane.xlu0 %2679
    %v2681 = vmul.f32 %v2659, %v130
    %v2682 = vmul.f32 %v2662, %v130
    %v2683 = vmul.f32 %v2665, %v130
    %v2684 = vmul.f32 %v2668, %v130
    %v2685 = vmul.f32 %v2671, %v130
    %v2686 = vmul.f32 %v2674, %v130
    %v2687 = vmul.f32 %v2677, %v130
    %v2688 = vmul.f32 %v2680, %v130
    %v2689 = vsub.f32 %v2649, %v2681
    %v2690 = vsub.f32 %v2650, %v2682
    %v2691 = vsub.f32 %v2651, %v2683
    %v2692 = vsub.f32 %v2652, %v2684
    %v2693 = vsub.f32 %v2653, %v2685
    %v2694 = vsub.f32 %v2654, %v2686
    %v2695 = vsub.f32 %v2655, %v2687
    %v2696 = vsub.f32 %v2656, %v2688
    %v2697 = vmul.f32 %v2689, %v2689
    %v2698 = vmul.f32 %v2690, %v2690
    %v2699 = vmul.f32 %v2691, %v2691
    %v2700 = vmul.f32 %v2692, %v2692
    %v2701 = vmul.f32 %v2693, %v2693
    %v2702 = vmul.f32 %v2694, %v2694
    %v2703 = vmul.f32 %v2695, %v2695
    %v2704 = vmul.f32 %v2696, %v2696
    %v2705 = vsel %vm105, %v2697, 0.0
    %2706 = vadd.xlane.f32.xlu0 %v2705
    %v2707 = vpop.xlane.xlu0 %2706
    %v2708 = vsel %vm105, %v2698, 0.0
    %2709 = vadd.xlane.f32.xlu0 %v2708
    %v2710 = vpop.xlane.xlu0 %2709
    %v2711 = vsel %vm105, %v2699, 0.0
    %2712 = vadd.xlane.f32.xlu0 %v2711
    %v2713 = vpop.xlane.xlu0 %2712
    %v2714 = vsel %vm105, %v2700, 0.0
    %2715 = vadd.xlane.f32.xlu0 %v2714
    %v2716 = vpop.xlane.xlu0 %2715
    %v2717 = vsel %vm105, %v2701, 0.0
    %2718 = vadd.xlane.f32.xlu0 %v2717
    %v2719 = vpop.xlane.xlu0 %2718
    %v2720 = vsel %vm105, %v2702, 0.0
    %2721 = vadd.xlane.f32.xlu0 %v2720
    %v2722 = vpop.xlane.xlu0 %2721
    %v2723 = vsel %vm105, %v2703, 0.0
    %2724 = vadd.xlane.f32.xlu0 %v2723
    %v2725 = vpop.xlane.xlu0 %2724
    %v2726 = vsel %vm105, %v2704, 0.0
    %2727 = vadd.xlane.f32.xlu0 %v2726
    %v2728 = vpop.xlane.xlu0 %2727
    %v2729 = vmul.f32 %v2707, %v130
    %v2730 = vmul.f32 %v2710, %v130
    %v2731 = vmul.f32 %v2713, %v130
    %v2732 = vmul.f32 %v2716, %v130
    %v2733 = vmul.f32 %v2719, %v130
    %v2734 = vmul.f32 %v2722, %v130
    %v2735 = vmul.f32 %v2725, %v130
    %v2736 = vmul.f32 %v2728, %v130
    %v2737 = vadd.f32 %v2729, 1e-05
    %v2738 = vadd.f32 %v2730, 1e-05
    %v2739 = vadd.f32 %v2731, 1e-05
    %v2740 = vadd.f32 %v2732, 1e-05
    %v2741 = vadd.f32 %v2733, 1e-05
    %v2742 = vadd.f32 %v2734, 1e-05
    %v2743 = vadd.f32 %v2735, 1e-05
    %v2744 = vadd.f32 %v2736, 1e-05
    %v2745 = vrsqrt.pop %v2737
    %v2746 = vrsqrt.pop %v2738
    %v2747 = vrsqrt.pop %v2739
    %v2748 = vrsqrt.pop %v2740
    %v2749 = vrsqrt.pop %v2741
    %v2750 = vrsqrt.pop %v2742
    %v2751 = vrsqrt.pop %v2743
    %v2752 = vrsqrt.pop %v2744
    %v2753 = vmul.f32 %v2689, %v2745
    %v2754 = vmul.f32 %v2690, %v2746
    %v2755 = vmul.f32 %v2691, %v2747
    %v2756 = vmul.f32 %v2692, %v2748
    %v2757 = vmul.f32 %v2693, %v2749
    %v2758 = vmul.f32 %v2694, %v2750
    %v2759 = vmul.f32 %v2695, %v2751
    %v2760 = vmul.f32 %v2696, %v2752
    %v2761 = vmul.f32 %v2753, %v1764
    %v2762 = vmul.f32 %v2754, %v1764
    %v2763 = vmul.f32 %v2755, %v1764
    %v2764 = vmul.f32 %v2756, %v1764
    %v2765 = vmul.f32 %v2757, %v1764
    %v2766 = vmul.f32 %v2758, %v1764
    %v2767 = vmul.f32 %v2759, %v1764
    %v2768 = vmul.f32 %v2760, %v1764
    %v2769 = vadd.f32 %v2761, %v1778
    %v2770 = vadd.f32 %v2762, %v1778
    %v2771 = vadd.f32 %v2763, %v1778
    %v2772 = vadd.f32 %v2764, %v1778
    %v2773 = vadd.f32 %v2765, %v1778
    %v2774 = vadd.f32 %v2766, %v1778
    %v2775 = vadd.f32 %v2767, %v1778
    %v2776 = vadd.f32 %v2768, %v1778
    %v2777 = vpack.c.bf16 %v2770, %v2769
    %v2778 = vpack.c.bf16 %v2772, %v2771
    %v2779 = vpack.c.bf16 %v2774, %v2773
    %v2780 = vpack.c.bf16 %v2776, %v2775
    %v2781 = vld [vmem:[%s18] sm:$0xf]
    %v2782 = vld [vmem:[%s18 + $0x4] sm:$0xf]
    %v2783 = vld [vmem:[%s18 + $0x8] sm:$0xf]
    %v2784 = vld [vmem:[%s18 + $0xc] sm:$0xf]
    %v2785 = vld [vmem:[%s19] sm:$0x1]
    %v2787 = vlaneseq
    %v2788 = vshrl.u32 %v2787, 7
    %v2789 = vsub.s32 0, %v2788
    %v2790 = vrot.slane %v2785, %v2789
    %v2796 = vunpack.c.l.b16 %v2781
    %v2797 = vunpack.c.l.b16 %v2782
    %v2798 = vunpack.c.l.b16 %v2783
    %v2799 = vunpack.c.l.b16 %v2784
    %v2800 = vpack.c.b16 %v2797, %v2796
    %v2801 = vpack.c.b16 %v2799, %v2798
    %v2805 = vsel %vm105, %v2777, 0
    %v2808 = vsel %vm105, %v2778, 0
    %v2811 = vsel %vm105, %v2779, 0
    %v2814 = vsel %vm105, %v2780, 0
    %2816 = vmatprep.subr.bf16.mxu0 0
    %2817 = vmatpush1.bf16.msra.mxu0 0
    %2818 = vmatprep.subr.bf16.mxu0 0
    %2819 = vmatpush1.bf16.msra.mxu0 0
    %2820 = vmatprep.subr.bf16.mxu0 0
    %2821 = vmatpush1.bf16.msra.mxu0 0
    %2822 = vmatprep.subr.bf16.mxu0 0
    %2823 = vmatpush1.bf16.msra.mxu0 0
    %2824 = vmatprep.subr.bf16.mxu0 0
    %2825 = vmatpush1.bf16.msra.mxu0 0
    %2826 = vmatprep.subr.bf16.mxu0 0
    %2827 = vmatpush1.bf16.msra.mxu0 0
    %2828 = vmatprep.subr.bf16.mxu0 0
    %2829 = vmatpush1.bf16.msra.mxu0 %v2801
    %2830 = vmatprep.subr.bf16.mxu0 0
    %2831 = vmatpush1.bf16.msra.mxu0 %v2800
    %2832 = vmatprep.subr.bf16.mxu0 0
    %2833 = vmatpush2.bf16.msra.mxu0 0
    %2834 = vmatprep.subr.bf16.mxu0 0
    %2835 = vmatpush2.bf16.msra.mxu0 0
    %2836 = vmatprep.subr.bf16.mxu0 0
    %2837 = vmatpush2.bf16.msra.mxu0 0
    %2838 = vmatprep.subr.bf16.mxu0 0
    %2839 = vmatpush2.bf16.msra.mxu0 0
    %2840 = vmatprep.subr.bf16.mxu0 0
    %2841 = vmatpush2.bf16.msra.mxu0 0
    %2842 = vmatprep.subr.bf16.mxu0 0
    %2843 = vmatpush2.bf16.msra.mxu0 0
    %2844 = vmatprep.subr.bf16.mxu0 0
    %2845 = vmatpush2.bf16.msra.mxu0 0
    %2846 = vmatprep.subr.bf16.mxu0 0
    %2847 = vmatpush2.bf16.msra.mxu0 0
    %2848 = vmatprep.mubr.bf16.mxu0 0
    %2849 = vmatmul.mubr.bf16.gmra.mxu0 %v2805
    %v2850 = vpop.f32.mrf.mxu0
    %v2851 = vadd.f32 %v2790, %v2850
    %v2852 = vpop.f32.mrf.mxu0
    %v2853 = vpop.f32.mrf.mxu0
    %v2854 = vadd.f32 %v2790, %v2853
    %v2855 = vpop.f32.mrf.mxu0
    %2856 = vmatprep.mubr.bf16.mxu0 0
    %2857 = vmatmul.mubr.bf16.gmra.mxu0 %v2808
    %v2858 = vpop.f32.mrf.mxu0
    %v2859 = vadd.f32 %v2790, %v2858
    %v2860 = vpop.f32.mrf.mxu0
    %v2861 = vpop.f32.mrf.mxu0
    %v2862 = vadd.f32 %v2790, %v2861
    %v2863 = vpop.f32.mrf.mxu0
    %2864 = vmatprep.mubr.bf16.mxu0 0
    %2865 = vmatmul.mubr.bf16.gmra.mxu0 %v2811
    %v2866 = vpop.f32.mrf.mxu0
    %v2867 = vadd.f32 %v2790, %v2866
    %v2868 = vpop.f32.mrf.mxu0
    %v2869 = vpop.f32.mrf.mxu0
    %v2870 = vadd.f32 %v2790, %v2869
    %v2871 = vpop.f32.mrf.mxu0
    %2872 = vmatprep.mubr.bf16.mxu0 0
    %2873 = vmatmul.mubr.bf16.gmra.mxu0 %v2814
    %v2874 = vpop.f32.mrf.mxu0
    %v2875 = vadd.f32 %v2790, %v2874
    %v2876 = vpop.f32.mrf.mxu0
    %v2877 = vpop.f32.mrf.mxu0
    %v2878 = vadd.f32 %v2790, %v2877
    %v2879 = vpop.f32.mrf.mxu0
    %2880 = vdwg.mxu0
    %v2881 = vmul.f32 %v2851, %v2851
    %v2882 = vmul.f32 %v2854, %v2854
    %v2883 = vmul.f32 %v2859, %v2859
    %v2884 = vmul.f32 %v2862, %v2862
    %v2885 = vmul.f32 %v2867, %v2867
    %v2886 = vmul.f32 %v2870, %v2870
    %v2887 = vmul.f32 %v2875, %v2875
    %v2888 = vmul.f32 %v2878, %v2878
    %v2889 = vmul.f32 %v2851, %v2881
    %v2890 = vmul.f32 %v2854, %v2882
    %v2891 = vmul.f32 %v2859, %v2883
    %v2892 = vmul.f32 %v2862, %v2884
    %v2893 = vmul.f32 %v2867, %v2885
    %v2894 = vmul.f32 %v2870, %v2886
    %v2895 = vmul.f32 %v2875, %v2887
    %v2896 = vmul.f32 %v2878, %v2888
    %v2897 = vmul.f32 %v2889, 0.044715
    %v2898 = vmul.f32 %v2890, 0.044715
    %v2899 = vmul.f32 %v2891, 0.044715
    %v2900 = vmul.f32 %v2892, 0.044715
    %v2901 = vmul.f32 %v2893, 0.044715
    %v2902 = vmul.f32 %v2894, 0.044715
    %v2903 = vmul.f32 %v2895, 0.044715
    %v2904 = vmul.f32 %v2896, 0.044715
    %v2905 = vadd.f32 %v2851, %v2897
    %v2906 = vadd.f32 %v2854, %v2898
    %v2907 = vadd.f32 %v2859, %v2899
    %v2908 = vadd.f32 %v2862, %v2900
    %v2909 = vadd.f32 %v2867, %v2901
    %v2910 = vadd.f32 %v2870, %v2902
    %v2911 = vadd.f32 %v2875, %v2903
    %v2912 = vadd.f32 %v2878, %v2904
    %v2913 = vmul.f32 %v2905, 0.7978846
    %v2914 = vmul.f32 %v2906, 0.7978846
    %v2915 = vmul.f32 %v2907, 0.7978846
    %v2916 = vmul.f32 %v2908, 0.7978846
    %v2917 = vmul.f32 %v2909, 0.7978846
    %v2918 = vmul.f32 %v2910, 0.7978846
    %v2919 = vmul.f32 %v2911, 0.7978846
    %v2920 = vmul.f32 %v2912, 0.7978846
    %v2921 = vtanh.pop %v2913
    %v2922 = vtanh.pop %v2914
    %v2923 = vtanh.pop %v2915
    %v2924 = vtanh.pop %v2916
    %v2925 = vtanh.pop %v2917
    %v2926 = vtanh.pop %v2918
    %v2927 = vtanh.pop %v2919
    %v2928 = vtanh.pop %v2920
    %v2929 = vadd.f32 %v2921, 1.0
    %v2930 = vadd.f32 %v2922, 1.0
    %v2931 = vadd.f32 %v2923, 1.0
    %v2932 = vadd.f32 %v2924, 1.0
    %v2933 = vadd.f32 %v2925, 1.0
    %v2934 = vadd.f32 %v2926, 1.0
    %v2935 = vadd.f32 %v2927, 1.0
    %v2936 = vadd.f32 %v2928, 1.0
    %v2937 = vmul.f32 %v2929, 0.5
    %v2938 = vmul.f32 %v2930, 0.5
    %v2939 = vmul.f32 %v2931, 0.5
    %v2940 = vmul.f32 %v2932, 0.5
    %v2941 = vmul.f32 %v2933, 0.5
    %v2942 = vmul.f32 %v2934, 0.5
    %v2943 = vmul.f32 %v2935, 0.5
    %v2944 = vmul.f32 %v2936, 0.5
    %v2945 = vmul.f32 %v2851, %v2937
    %v2946 = vmul.f32 %v2854, %v2938
    %v2947 = vmul.f32 %v2859, %v2939
    %v2948 = vmul.f32 %v2862, %v2940
    %v2949 = vmul.f32 %v2867, %v2941
    %v2950 = vmul.f32 %v2870, %v2942
    %v2951 = vmul.f32 %v2875, %v2943
    %v2952 = vmul.f32 %v2878, %v2944
    %v2953 = vpack.c.bf16 %v2946, %v2945
    %v2954 = vpack.c.bf16 %v2948, %v2947
    %v2955 = vpack.c.bf16 %v2950, %v2949
    %v2956 = vpack.c.bf16 %v2952, %v2951
    %v2957 = vld [vmem:[%s20] sm:$0xf]
    %v2958 = vld [vmem:[%s20 + $0x4] sm:$0xf]
    %v2959 = vld [vmem:[%s20 + $0x8] sm:$0xf]
    %v2960 = vld [vmem:[%s20 + $0xc] sm:$0xf]
    %v2961 = vld [vmem:[%s20 + $0x10] sm:$0xf]
    %v2962 = vld [vmem:[%s20 + $0x14] sm:$0xf]
    %v2963 = vld [vmem:[%s20 + $0x18] sm:$0xf]
    %v2964 = vld [vmem:[%s20 + $0x1c] sm:$0xf]
    %v2973 = vunpack.c.l.b16 %v2957
    %v2974 = vunpack.c.l.b16 %v2958
    %v2975 = vunpack.c.l.b16 %v2959
    %v2976 = vunpack.c.l.b16 %v2960
    %v2977 = vunpack.c.l.b16 %v2961
    %v2978 = vunpack.c.l.b16 %v2962
    %v2979 = vunpack.c.l.b16 %v2963
    %v2980 = vunpack.c.l.b16 %v2964
    %v2981 = vpack.c.b16 %v2974, %v2973
    %v2982 = vpack.c.b16 %v2976, %v2975
    %v2983 = vpack.c.b16 %v2978, %v2977
    %v2984 = vpack.c.b16 %v2980, %v2979
    %v2990 = vsel %vm1553, %v2953, 0
    %v2993 = vsel %vm1553, %v2954, 0
    %v2996 = vsel %vm1553, %v2955, 0
    %v2999 = vsel %vm1553, %v2956, 0
    %3001 = vmatprep.subr.bf16.mxu0 0
    %3002 = vmatpush1.bf16.msra.mxu0 0
    %3003 = vmatprep.subr.bf16.mxu0 0
    %3004 = vmatpush1.bf16.msra.mxu0 0
    %3005 = vmatprep.subr.bf16.mxu0 0
    %3006 = vmatpush1.bf16.msra.mxu0 0
    %3007 = vmatprep.subr.bf16.mxu0 0
    %3008 = vmatpush1.bf16.msra.mxu0 0
    %3009 = vmatprep.subr.bf16.mxu0 0
    %3010 = vmatpush1.bf16.msra.mxu0 %v2984
    %3011 = vmatprep.subr.bf16.mxu0 0
    %3012 = vmatpush1.bf16.msra.mxu0 %v2983
    %3013 = vmatprep.subr.bf16.mxu0 0
    %3014 = vmatpush1.bf16.msra.mxu0 %v2982
    %3015 = vmatprep.subr.bf16.mxu0 0
    %3016 = vmatpush1.bf16.msra.mxu0 %v2981
    %3017 = vmatprep.subr.bf16.mxu0 0
    %3018 = vmatpush2.bf16.msra.mxu0 0
    %3019 = vmatprep.subr.bf16.mxu0 0
    %3020 = vmatpush2.bf16.msra.mxu0 0
    %3021 = vmatprep.subr.bf16.mxu0 0
    %3022 = vmatpush2.bf16.msra.mxu0 0
    %3023 = vmatprep.subr.bf16.mxu0 0
    %3024 = vmatpush2.bf16.msra.mxu0 0
    %3025 = vmatprep.subr.bf16.mxu0 0
    %3026 = vmatpush2.bf16.msra.mxu0 0
    %3027 = vmatprep.subr.bf16.mxu0 0
    %3028 = vmatpush2.bf16.msra.mxu0 0
    %3029 = vmatprep.subr.bf16.mxu0 0
    %3030 = vmatpush2.bf16.msra.mxu0 0
    %3031 = vmatprep.subr.bf16.mxu0 0
    %3032 = vmatpush2.bf16.msra.mxu0 0
    %3033 = vmatprep.mubr.bf16.mxu0 0
    %3034 = vmatmul.mubr.bf16.gmra.mxu0 %v2990
    %v3035 = vpop.f32.mrf.mxu0
    %v3036 = vadd.f32 0.0, %v3035
    %v3037 = vpop.f32.mrf.mxu0
    %v3038 = vpop.f32.mrf.mxu0
    %v3039 = vadd.f32 0.0, %v3038
    %v3040 = vpop.f32.mrf.mxu0
    %3041 = vmatprep.mubr.bf16.mxu0 0
    %3042 = vmatmul.mubr.bf16.gmra.mxu0 %v2993
    %v3043 = vpop.f32.mrf.mxu0
    %v3044 = vadd.f32 0.0, %v3043
    %v3045 = vpop.f32.mrf.mxu0
    %v3046 = vpop.f32.mrf.mxu0
    %v3047 = vadd.f32 0.0, %v3046
    %v3048 = vpop.f32.mrf.mxu0
    %3049 = vmatprep.mubr.bf16.mxu0 0
    %3050 = vmatmul.mubr.bf16.gmra.mxu0 %v2996
    %v3051 = vpop.f32.mrf.mxu0
    %v3052 = vadd.f32 0.0, %v3051
    %v3053 = vpop.f32.mrf.mxu0
    %v3054 = vpop.f32.mrf.mxu0
    %v3055 = vadd.f32 0.0, %v3054
    %v3056 = vpop.f32.mrf.mxu0
    %3057 = vmatprep.mubr.bf16.mxu0 0
    %3058 = vmatmul.mubr.bf16.gmra.mxu0 %v2999
    %v3059 = vpop.f32.mrf.mxu0
    %v3060 = vadd.f32 0.0, %v3059
    %v3061 = vpop.f32.mrf.mxu0
    %v3062 = vpop.f32.mrf.mxu0
    %v3063 = vadd.f32 0.0, %v3062
    %v3064 = vpop.f32.mrf.mxu0
    %3065 = vdwg.mxu0
    %v3066 = vadd.f32 %v2649, %v3036
    %v3067 = vadd.f32 %v2650, %v3039
    %v3068 = vadd.f32 %v2651, %v3044
    %v3069 = vadd.f32 %v2652, %v3047
    %v3070 = vadd.f32 %v2653, %v3052
    %v3071 = vadd.f32 %v2654, %v3055
    %v3072 = vadd.f32 %v2655, %v3060
    %v3073 = vadd.f32 %v2656, %v3063
    %v3074 = vld [vmem:[%s21] sm:$0x1]
    %v3076 = vlaneseq
    %v3077 = vshrl.u32 %v3076, 7
    %v3078 = vsub.s32 0, %v3077
    %v3079 = vrot.slane %v3074, %v3078
    %v3081 = vadd.f32 %v3066, %v3079
    %v3082 = vadd.f32 %v3067, %v3079
    %v3083 = vadd.f32 %v3068, %v3079
    %v3084 = vadd.f32 %v3069, %v3079
    %v3085 = vadd.f32 %v3070, %v3079
    %v3086 = vadd.f32 %v3071, %v3079
    %v3087 = vadd.f32 %v3072, %v3079
    %v3088 = vadd.f32 %v3073, %v3079
    %v3089 = vpack.c.bf16 %v3082, %v3081
    %v3090 = vpack.c.bf16 %v3084, %v3083
    %v3091 = vpack.c.bf16 %v3086, %v3085
    %v3092 = vpack.c.bf16 %v3088, %v3087
    %v3093 = vld [vmem:[%s22] sm:$0xf]
    %v3094 = vld [vmem:[%s22 + $0x4] sm:$0xf]
    %v3095 = vld [vmem:[%s22 + $0x8] sm:$0xf]
    %v3096 = vld [vmem:[%s22 + $0xc] sm:$0xf]
    %v3097 = vld [vmem:[%s23] sm:$0x1]
    %v3099 = vlaneseq
    %v3100 = vshrl.u32 %v3099, 7
    %v3101 = vsub.s32 0, %v3100
    %v3102 = vrot.slane %v3097, %v3101
    %v3108 = vunpack.c.l.b16 %v3093
    %v3109 = vunpack.c.l.b16 %v3094
    %v3110 = vunpack.c.l.b16 %v3095
    %v3111 = vunpack.c.l.b16 %v3096
    %v3112 = vpack.c.b16 %v3109, %v3108
    %v3113 = vpack.c.b16 %v3111, %v3110
    %v3117 = vsel %vm105, %v3089, 0
    %v3120 = vsel %vm105, %v3090, 0
    %v3123 = vsel %vm105, %v3091, 0
    %v3126 = vsel %vm105, %v3092, 0
    %3128 = vmatprep.subr.bf16.mxu0 0
    %3129 = vmatpush1.bf16.msra.mxu0 0
    %3130 = vmatprep.subr.bf16.mxu0 0
    %3131 = vmatpush1.bf16.msra.mxu0 0
    %3132 = vmatprep.subr.bf16.mxu0 0
    %3133 = vmatpush1.bf16.msra.mxu0 0
    %3134 = vmatprep.subr.bf16.mxu0 0
    %3135 = vmatpush1.bf16.msra.mxu0 0
    %3136 = vmatprep.subr.bf16.mxu0 0
    %3137 = vmatpush1.bf16.msra.mxu0 0
    %3138 = vmatprep.subr.bf16.mxu0 0
    %3139 = vmatpush1.bf16.msra.mxu0 0
    %3140 = vmatprep.subr.bf16.mxu0 0
    %3141 = vmatpush1.bf16.msra.mxu0 %v3113
    %3142 = vmatprep.subr.bf16.mxu0 0
    %3143 = vmatpush1.bf16.msra.mxu0 %v3112
    %3144 = vmatprep.subr.bf16.mxu0 0
    %3145 = vmatpush2.bf16.msra.mxu0 0
    %3146 = vmatprep.subr.bf16.mxu0 0
    %3147 = vmatpush2.bf16.msra.mxu0 0
    %3148 = vmatprep.subr.bf16.mxu0 0
    %3149 = vmatpush2.bf16.msra.mxu0 0
    %3150 = vmatprep.subr.bf16.mxu0 0
    %3151 = vmatpush2.bf16.msra.mxu0 0
    %3152 = vmatprep.subr.bf16.mxu0 0
    %3153 = vmatpush2.bf16.msra.mxu0 0
    %3154 = vmatprep.subr.bf16.mxu0 0
    %3155 = vmatpush2.bf16.msra.mxu0 0
    %3156 = vmatprep.subr.bf16.mxu0 0
    %3157 = vmatpush2.bf16.msra.mxu0 0
    %3158 = vmatprep.subr.bf16.mxu0 0
    %3159 = vmatpush2.bf16.msra.mxu0 0
    %3160 = vmatprep.mubr.bf16.mxu0 0
    %3161 = vmatmul.mubr.bf16.gmra.mxu0 %v3117
    %v3162 = vpop.f32.mrf.mxu0
    %v3163 = vadd.f32 %v3102, %v3162
    %v3164 = vpop.f32.mrf.mxu0
    %v3165 = vpop.f32.mrf.mxu0
    %v3166 = vadd.f32 %v3102, %v3165
    %v3167 = vpop.f32.mrf.mxu0
    %3168 = vmatprep.mubr.bf16.mxu0 0
    %3169 = vmatmul.mubr.bf16.gmra.mxu0 %v3120
    %v3170 = vpop.f32.mrf.mxu0
    %v3171 = vadd.f32 %v3102, %v3170
    %v3172 = vpop.f32.mrf.mxu0
    %v3173 = vpop.f32.mrf.mxu0
    %v3174 = vadd.f32 %v3102, %v3173
    %v3175 = vpop.f32.mrf.mxu0
    %3176 = vmatprep.mubr.bf16.mxu0 0
    %3177 = vmatmul.mubr.bf16.gmra.mxu0 %v3123
    %v3178 = vpop.f32.mrf.mxu0
    %v3179 = vadd.f32 %v3102, %v3178
    %v3180 = vpop.f32.mrf.mxu0
    %v3181 = vpop.f32.mrf.mxu0
    %v3182 = vadd.f32 %v3102, %v3181
    %v3183 = vpop.f32.mrf.mxu0
    %3184 = vmatprep.mubr.bf16.mxu0 0
    %3185 = vmatmul.mubr.bf16.gmra.mxu0 %v3126
    %v3186 = vpop.f32.mrf.mxu0
    %v3187 = vadd.f32 %v3102, %v3186
    %v3188 = vpop.f32.mrf.mxu0
    %v3189 = vpop.f32.mrf.mxu0
    %v3190 = vadd.f32 %v3102, %v3189
    %v3191 = vpop.f32.mrf.mxu0
    %3192 = vdwg.mxu0
    %3193 = vst [vmem:[#allocation2] sm:$0xff] %v3163
    %3194 = vst [vmem:[#allocation2 + $0x8] sm:$0xff] %v3166
    %3195 = vst [vmem:[#allocation2 + $0x10] sm:$0xff] %v3171
    %3196 = vst [vmem:[#allocation2 + $0x18] sm:$0xff] %v3174
    %3197 = vst [vmem:[#allocation2 + $0x20] sm:$0xff] %v3179
    %3198 = vst [vmem:[#allocation2 + $0x28] sm:$0xff] %v3182
    %3199 = vst [vmem:[#allocation2 + $0x30] sm:$0xff] %v3187
    %3200 = vst [vmem:[#allocation2 + $0x38] sm:$0xff] %v3190
    // Predicated region
    $region98: #{retnet_forward.1} parent=1 // pred_check
      _
    $region99: #{retnet_forward.1} parent=1 // pred_check_branch
      %3202 = sbr.rel (0) target = $region101
    $region100: #{retnet_forward.1} parent=1 // pred_region
      %s3204 = ssub.s32 1024, 1024
      %3205 = vsyncadd [#allocation3], %s3204
      %s3206 = sshll.u32 [#allocation2], 4
      %s3207 = int_to_ptr.vmem [resolvable:$true] %s3206
      %3212 = dma.vmem_to_hbm [thread:$0]  %s3207, 1024, %s24, [#allocation3], 128, 128, 8
    $region101: #{retnet_forward.1} parent=1 // pred_fallthru
      _
    // Predicated region
    $region102: #{retnet_forward.1} parent=1 // pred_check
      _
    $region103: #{retnet_forward.1} parent=1 // pred_check_branch
      %3214 = sbr.rel (0) target = $region105
    $region104: #{retnet_forward.1} parent=1 // pred_region
      %3215 = dma.done [#allocation3], 1024
    $region105: #{retnet_forward.1} parent=1 // pred_fallthru
      _
    %3216 = vsyncpa [#allocation3], 1

</llo_original>
